<compile_context>
chip_gen: v7x
topology: tpu7x:2x2x1
jax: 0.10.0
libtpu: 0.0.40
codegen_flags: <defaults>
</compile_context>

<pallas_src>
import functools

import jax
import jax.numpy as jnp
from jax import lax
from jax.experimental import pallas as pl
from jax.experimental.pallas import tpu as pltpu


# ----------------------------------------------------------------------------
# BN folding helper (inference-mode affine)
# ----------------------------------------------------------------------------
def _fold_bn(gamma, beta, mean, var, eps=1e-5):
    scale = gamma / jnp.sqrt(var + eps)
    bias = beta - mean * scale
    return scale, bias


# ----------------------------------------------------------------------------
# Fused Pallas kernel: one grid step = one (batch, T-tile) block.
#   x_cur : (tT, H, W, Cin)   current T rows (also residual source)
#   x_prev: (1, H, W, Cin)    T row just below the tile (clamped at boundary)
#   x_next: (1, H, W, Cin)    T row just above the tile (clamped at boundary)
#   mid   : VMEM scratch (tT+2, H+2, W+2, Cmid) = pw output with zero halo
# ----------------------------------------------------------------------------
def _irf3d_fused_kernel(x_cur_ref, x_prev_ref, x_next_ref,
                        pw_w_ref, pw_s_ref, pw_b_ref,
                        dw_w_ref, dw_s_ref, dw_b_ref,
                        pwl_w_ref, pwl_s_ref, pwl_b_ref,
                        out_ref, mid_ref,
                        *, tT, H, W, Cin, Cmid, Cout):
    ti = pl.program_id(1)
    nT = pl.num_programs(1)

    # Zero the halo'd scratch: this *is* the depthwise conv's zero padding
    # (T at sequence ends, H/W everywhere).  No jnp.pad HBM pass.
    mid_ref[...] = jnp.zeros_like(mid_ref)

    # ---- stage 1: pointwise expansion (1x1x1) + BN + ReLU into VMEM scratch --
    # Channels are tiny -> VPU broadcast-FMA instead of a nearly-empty MXU pass.
    # TODO(synk): for realistic channel counts use jnp.dot on (rows, C) slabs.
    def pw_row(x_row):                       # (H, W, Cin) -> (H, W, Cmid)
        acc = jnp.zeros((H, W, Cmid), jnp.float32)
        for c in range(Cin):
            acc = acc + x_row[:, :, c:c + 1] * pw_w_ref[c, :]
        return jnp.maximum(acc * pw_s_ref[...] + pw_b_ref[...], 0.0)

    # Interior rows: static unroll (tT small) -> all-static scratch stores.
    for t in range(tT):
        mid_ref[t + 1, 1:H + 1, 1:W + 1, :] = pw_row(x_cur_ref[t])

    # T-halo rows from the neighbouring tiles (pw recomputed, one row each).
    # At the sequence boundaries they stay zero == conv zero padding.
    @pl.when(ti > 0)
    def _():
        mid_ref[0, 1:H + 1, 1:W + 1, :] = pw_row(x_prev_ref[0])

    @pl.when(ti < nT - 1)
    def _():
        mid_ref[tT + 1, 1:H + 1, 1:W + 1, :] = pw_row(x_next_ref[0])

    # ---- stage 2+3: depthwise 3x3x3 + BN + ReLU, then pwl 1x1x1 + BN +
    #      residual, one output T row at a time (bounded vreg live set) -------
    def out_body(t, carry):
        acc = jnp.zeros((H, W, Cmid), jnp.float32)
        for kt in range(3):                  # 27 taps fully unrolled
            for kh in range(3):
                for kw in range(3):
                    tap = mid_ref[t + kt, kh:kh + H, kw:kw + W, :]
                    acc = acc + tap * dw_w_ref[kt * 9 + kh * 3 + kw, :]
        y = jnp.maximum(acc * dw_s_ref[...] + dw_b_ref[...], 0.0)

        # pwl projection as broadcast-FMAs (Cmid small; use MXU when large).
        z = jnp.zeros((H, W, Cout), jnp.float32)
        for k in range(Cmid):
            z = z + y[:, :, k:k + 1] * pwl_w_ref[k, :]
        z = z * pwl_s_ref[...] + pwl_b_ref[...]

        # default residual connection (in_channels == out_channels, stride 1)
        z = z + x_cur_ref[t]
        out_ref[t] = z
        return carry

    lax.fori_loop(0, tT, out_body, 0)


# ----------------------------------------------------------------------------
# Wrapper
# ----------------------------------------------------------------------------
def _largest_divisor_leq(n, cap):
    best = 1
    for d in range(1, min(n, cap) + 1):
        if n % d == 0:
            best = d
    return best


def irf3d_block_forward(x_ncdhw, params, t_tile=4):
    """IRF3dBlock forward; x_ncdhw is (N, Cin, T, H, W) like the PyTorch module."""
    # NCDHW -> NDHWC (channels on TPU lanes inside the kernel).
    x = jnp.transpose(x_ncdhw, (0, 2, 3, 4, 1)).astype(jnp.float32)
    N, T, H, W, Cin = x.shape
    Cmid = params["pw_w"].shape[1]
    Cout = params["pwl_w"].shape[1]
    assert Cout == Cin, "default res_conn requires in_channels == out_channels"

    pw_s, pw_b = _fold_bn(params["pw_gamma"], params["pw_beta"],
                          params["pw_mean"], params["pw_var"])
    dw_s, dw_b = _fold_bn(params["dw_gamma"], params["dw_beta"],
                          params["dw_mean"], params["dw_var"])
    pwl_s, pwl_b = _fold_bn(params["pwl_gamma"], params["pwl_beta"],
                            params["pwl_mean"], params["pwl_var"])

    # Largest divisor of T <= t_tile: keeps blocks well inside VMEM on every
    # TPU generation and needs no tail masking (worst case tT == 1).
    tT = _largest_divisor_leq(T, t_tile)
    nT = T // tT

    kernel = functools.partial(_irf3d_fused_kernel, tT=tT, H=H, W=W,
                               Cin=Cin, Cmid=Cmid, Cout=Cout)

    x_cur_spec = pl.BlockSpec((None, tT, H, W, Cin),
                              lambda n, t: (n, t, 0, 0, 0))
    # 1-row T halos, clamped at the sequence ends (values unused there: the
    # kernel keeps zero padding via pl.when).
    x_prev_spec = pl.BlockSpec(
        (None, 1, H, W, Cin),
        lambda n, t: (n, jnp.maximum(t * tT - 1, 0), 0, 0, 0))
    x_next_spec = pl.BlockSpec(
        (None, 1, H, W, Cin),
        lambda n, t: (n, jnp.minimum((t + 1) * tT, T - 1), 0, 0, 0))

    def _rep(shape):
        return pl.BlockSpec(shape, lambda n, t: (0,) * len(shape))

    out = pl.pallas_call(
        kernel,
        out_shape=jax.ShapeDtypeStruct((N, T, H, W, Cout), jnp.float32),
        grid=(N, nT),
        in_specs=[
            x_cur_spec, x_prev_spec, x_next_spec,
            _rep((Cin, Cmid)), _rep((1, Cmid)), _rep((1, Cmid)),
            _rep((27, Cmid)), _rep((1, Cmid)), _rep((1, Cmid)),
            _rep((Cmid, Cout)), _rep((1, Cout)), _rep((1, Cout)),
        ],
        out_specs=pl.BlockSpec((None, tT, H, W, Cout),
                               lambda n, t: (n, t, 0, 0, 0)),
        scratch_shapes=[pltpu.VMEM((tT + 2, H + 2, W + 2, Cmid), jnp.float32)],
        compiler_params=pltpu.CompilerParams(
            dimension_semantics=("parallel", "parallel"),
            vmem_limit_bytes=48 * 1024 * 1024),
    )(x, x, x,
      params["pw_w"], pw_s.reshape(1, -1), pw_b.reshape(1, -1),
      params["dw_w"], dw_s.reshape(1, -1), dw_b.reshape(1, -1),
      params["pwl_w"], pwl_s.reshape(1, -1), pwl_b.reshape(1, -1))

    # NDHWC -> NCDHW
    return jnp.transpose(out, (0, 4, 1, 2, 3))


# ----------------------------------------------------------------------------
# Pure-JAX reference for correctness check (exact f32)
# ----------------------------------------------------------------------------
def irf3d_block_reference(x_ncdhw, params):
    x = jnp.transpose(x_ncdhw, (0, 2, 3, 4, 1)).astype(jnp.float32)
    Cmid = params["pw_w"].shape[1]
    hp = lax.Precision.HIGHEST

    pw_s, pw_b = _fold_bn(params["pw_gamma"], params["pw_beta"],
                          params["pw_mean"], params["pw_var"])
    dw_s, dw_b = _fold_bn(params["dw_gamma"], params["dw_beta"],
                          params["dw_mean"], params["dw_var"])
    pwl_s, pwl_b = _fold_bn(params["pwl_gamma"], params["pwl_beta"],
                            params["pwl_mean"], params["pwl_var"])

    y = jnp.einsum("ndhwc,ck->ndhwk", x, params["pw_w"], precision=hp)
    y = jnp.maximum(y * pw_s + pw_b, 0.0)

    w_dw = params["dw_w"].reshape(3, 3, 3, Cmid)[:, :, :, None, :]  # DHWIO, I=1
    y = lax.conv_general_dilated(
        y, w_dw, window_strides=(1, 1, 1),
        padding=((1, 1), (1, 1), (1, 1)),
        dimension_numbers=("NDHWC", "DHWIO", "NDHWC"),
        feature_group_count=Cmid, precision=hp)
    y = jnp.maximum(y * dw_s + dw_b, 0.0)

    z = jnp.einsum("ndhwc,ck->ndhwk", y, params["pwl_w"], precision=hp)
    z = z * pwl_s + pwl_b + x
    return jnp.transpose(z, (0, 4, 1, 2, 3))


# ----------------------------------------------------------------------------
# Deterministic parameter initialization (shapes from the module's __init__)
# ----------------------------------------------------------------------------
def init_params(key, Cin, Cmid, Cout):
    ks = jax.random.split(key, 15)
    p = {}
    # pw: Conv3d(Cin, Cmid, k=1, bias=False) stored as (Cin, Cmid) matmul weight
    p["pw_w"] = 0.3 * jax.random.normal(ks[0], (Cin, Cmid), jnp.float32)
    p["pw_gamma"] = 1.0 + 0.1 * jax.random.normal(ks[1], (Cmid,), jnp.float32)
    p["pw_beta"] = 0.1 * jax.random.normal(ks[2], (Cmid,), jnp.float32)
    p["pw_mean"] = 0.1 * jax.random.normal(ks[3], (Cmid,), jnp.float32)
    p["pw_var"] = 1.0 + 0.1 * jnp.abs(jax.random.normal(ks[4], (Cmid,), jnp.float32))
    # dw: depthwise Conv3d(Cmid, Cmid, k=(3,3,3), groups=Cmid, bias=False)
    #     stored as (27, Cmid) -> tap index kt*9+kh*3+kw per channel
    p["dw_w"] = 0.2 * jax.random.normal(ks[5], (27, Cmid), jnp.float32)
    p["dw_gamma"] = 1.0 + 0.1 * jax.random.normal(ks[6], (Cmid,), jnp.float32)
    p["dw_beta"] = 0.1 * jax.random.normal(ks[7], (Cmid,), jnp.float32)
    p["dw_mean"] = 0.1 * jax.random.normal(ks[8], (Cmid,), jnp.float32)
    p["dw_var"] = 1.0 + 0.1 * jnp.abs(jax.random.normal(ks[9], (Cmid,), jnp.float32))
    # pwl: Conv3d(Cmid, Cout, k=1, bias=False) stored as (Cmid, Cout)
    p["pwl_w"] = 0.3 * jax.random.normal(ks[10], (Cmid, Cout), jnp.float32)
    p["pwl_gamma"] = 1.0 + 0.1 * jax.random.normal(ks[11], (Cout,), jnp.float32)
    p["pwl_beta"] = 0.1 * jax.random.normal(ks[12], (Cout,), jnp.float32)
    p["pwl_mean"] = 0.1 * jax.random.normal(ks[13], (Cout,), jnp.float32)
    p["pwl_var"] = 1.0 + 0.1 * jnp.abs(jax.random.normal(ks[14], (Cout,), jnp.float32))
    return p


def get_divisible_by(num, divisor):
    new_val = max(divisor, int(num + divisor / 2) // divisor * divisor)
    if new_val < 0.9 * num:
        new_val += divisor
    return new_val


if __name__ == "__main__":
    key = jax.random.PRNGKey(0)
    k_x, k_p = jax.random.split(key)

    # Small shapes consistent with the module: NCDHW input, in==out so the
    # default residual connection is active.  T=6 with t_tile=2 exercises the
    # first / interior / last T-tile halo paths of the fused kernel.
    N, Cin, T, H, W = 2, 4, 6, 8, 8
    Cout = 4
    expansion, width_divisor = 6, 8
    Cmid = get_divisible_by(Cin * expansion, width_divisor)  # 24

    x = jax.random.normal(k_x, (N, Cin, T, H, W), jnp.float32)
    params = init_params(k_p, Cin, Cmid, Cout)

    fwd = jax.jit(functools.partial(irf3d_block_forward, t_tile=2))
    out = jax.block_until_ready(fwd(x, params))
    assert out.shape == (N, Cout, T, H, W)

    ref = irf3d_block_reference(x, params)
    max_err = float(jnp.max(jnp.abs(out - ref)))
    assert jnp.allclose(out, ref, atol=1e-3, rtol=1e-3), f"max_err={max_err}"

    print("KERNEL_OK")
</pallas_src>

<mosaic_0001>
module attributes {stable_mosaic.version = 11 : i64} {
  func.func @_irf3d_fused_kernel(%arg0: i32, %arg1: i32, %arg2: memref<1x2x8x8x4xf32, #tpu.memory_space<vmem>>, %arg3: memref<1x1x8x8x4xf32, #tpu.memory_space<vmem>>, %arg4: memref<1x1x8x8x4xf32, #tpu.memory_space<vmem>>, %arg5: memref<4x24xf32, #tpu.memory_space<vmem>>, %arg6: memref<1x24xf32, #tpu.memory_space<vmem>>, %arg7: memref<1x24xf32, #tpu.memory_space<vmem>>, %arg8: memref<27x24xf32, #tpu.memory_space<vmem>>, %arg9: memref<1x24xf32, #tpu.memory_space<vmem>>, %arg10: memref<1x24xf32, #tpu.memory_space<vmem>>, %arg11: memref<24x4xf32, #tpu.memory_space<vmem>>, %arg12: memref<1x4xf32, #tpu.memory_space<vmem>>, %arg13: memref<1x4xf32, #tpu.memory_space<vmem>>, %arg14: memref<1x2x8x8x4xf32, #tpu.memory_space<vmem>>, %arg15: memref<4x10x10x24xf32, #tpu.memory_space<vmem>>) attributes {dimension_semantics = [#tpu.dimension_semantics<parallel>, #tpu.dimension_semantics<parallel>], iteration_bounds = array<i64: 2, 3>, scalar_prefetch = 0 : i64, scratch_operands = 1 : i64, tpu.core_type = #tpu.core_type<tc>, window_params = [{transform_indices = @transform_0, window_bounds = array<i64: 1, 2, 8, 8, 4>}, {transform_indices = @transform_1, window_bounds = array<i64: 1, 1, 8, 8, 4>}, {transform_indices = @transform_2, window_bounds = array<i64: 1, 1, 8, 8, 4>}, {pipeline_mode = #tpu.pipeline_mode<synchronous>, transform_indices = @transform_3, window_bounds = array<i64: 4, 24>}, {pipeline_mode = #tpu.pipeline_mode<synchronous>, transform_indices = @transform_4, window_bounds = array<i64: 1, 24>}, {pipeline_mode = #tpu.pipeline_mode<synchronous>, transform_indices = @transform_5, window_bounds = array<i64: 1, 24>}, {pipeline_mode = #tpu.pipeline_mode<synchronous>, transform_indices = @transform_6, window_bounds = array<i64: 27, 24>}, {pipeline_mode = #tpu.pipeline_mode<synchronous>, transform_indices = @transform_7, window_bounds = array<i64: 1, 24>}, {pipeline_mode = #tpu.pipeline_mode<synchronous>, transform_indices = @transform_8, window_bounds = array<i64: 1, 24>}, {pipeline_mode = #tpu.pipeline_mode<synchronous>, transform_indices = @transform_9, window_bounds = array<i64: 24, 4>}, {pipeline_mode = #tpu.pipeline_mode<synchronous>, transform_indices = @transform_10, window_bounds = array<i64: 1, 4>}, {pipeline_mode = #tpu.pipeline_mode<synchronous>, transform_indices = @transform_11, window_bounds = array<i64: 1, 4>}, {transform_indices = @transform_12, window_bounds = array<i64: 1, 2, 8, 8, 4>}]} {
    %cst = arith.constant 0.000000e+00 : f32
    %0 = vector.broadcast %cst : f32 to vector<4x10x10x24xf32>
    %c0 = arith.constant 0 : index
    %c0_0 = arith.constant 0 : index
    %c0_1 = arith.constant 0 : index
    %c0_2 = arith.constant 0 : index
    %1 = vector.load %arg15[%c0, %c0_0, %c0_1, %c0_2] : memref<4x10x10x24xf32, #tpu.memory_space<vmem>>, vector<4x10x10x24xf32>
    tpu.vector_store %arg15[%c0, %c0_0, %c0_1, %c0_2], %0 {strides = array<i32>} : memref<4x10x10x24xf32, #tpu.memory_space<vmem>>, vector<4x10x10x24xf32>,
    %c0_3 = arith.constant 0 : index
    %c0_4 = arith.constant 0 : index
    %c0_5 = arith.constant 0 : index
    %c0_6 = arith.constant 0 : index
    %c0_7 = arith.constant 0 : index
    %2 = vector.load %arg2[%c0_3, %c0_4, %c0_5, %c0_6, %c0_7] : memref<1x2x8x8x4xf32, #tpu.memory_space<vmem>>, vector<1x1x8x8x4xf32>
    %3 = vector.shape_cast %2 : vector<1x1x8x8x4xf32> to vector<8x8x4xf32>
    %cst_8 = arith.constant 0.000000e+00 : f32
    %4 = vector.broadcast %cst_8 : f32 to vector<8x8x24xf32>
    %5 = vector.extract_strided_slice %3 {offsets = [0, 0, 0], sizes = [8, 8, 1], strides = [1, 1, 1]} : vector<8x8x4xf32> to vector<8x8x1xf32>
    %c0_9 = arith.constant 0 : index
    %c0_10 = arith.constant 0 : index
    %6 = vector.load %arg5[%c0_9, %c0_10] : memref<4x24xf32, #tpu.memory_space<vmem>>, vector<1x24xf32>
    %7 = vector.shape_cast %6 : vector<1x24xf32> to vector<24xf32>
    %8 = vector.shape_cast %7 : vector<24xf32> to vector<1x1x24xf32>
    %9 = vector.broadcast %5 : vector<8x8x1xf32> to vector<8x8x24xf32>
    %10 = vector.broadcast %8 : vector<1x1x24xf32> to vector<8x8x24xf32>
    %11 = arith.mulf %9, %10 : vector<8x8x24xf32>
    %12 = arith.addf %4, %11 : vector<8x8x24xf32>
    %13 = vector.extract_strided_slice %3 {offsets = [0, 0, 1], sizes = [8, 8, 1], strides = [1, 1, 1]} : vector<8x8x4xf32> to vector<8x8x1xf32>
    %c1 = arith.constant 1 : index
    %c0_11 = arith.constant 0 : index
    %14 = vector.load %arg5[%c1, %c0_11] : memref<4x24xf32, #tpu.memory_space<vmem>>, vector<1x24xf32>
    %15 = vector.shape_cast %14 : vector<1x24xf32> to vector<24xf32>
    %16 = vector.shape_cast %15 : vector<24xf32> to vector<1x1x24xf32>
    %17 = vector.broadcast %13 : vector<8x8x1xf32> to vector<8x8x24xf32>
    %18 = vector.broadcast %16 : vector<1x1x24xf32> to vector<8x8x24xf32>
    %19 = arith.mulf %17, %18 : vector<8x8x24xf32>
    %20 = arith.addf %12, %19 : vector<8x8x24xf32>
    %21 = vector.extract_strided_slice %3 {offsets = [0, 0, 2], sizes = [8, 8, 1], strides = [1, 1, 1]} : vector<8x8x4xf32> to vector<8x8x1xf32>
    %c2 = arith.constant 2 : index
    %c0_12 = arith.constant 0 : index
    %22 = vector.load %arg5[%c2, %c0_12] : memref<4x24xf32, #tpu.memory_space<vmem>>, vector<1x24xf32>
    %23 = vector.shape_cast %22 : vector<1x24xf32> to vector<24xf32>
    %24 = vector.shape_cast %23 : vector<24xf32> to vector<1x1x24xf32>
    %25 = vector.broadcast %21 : vector<8x8x1xf32> to vector<8x8x24xf32>
    %26 = vector.broadcast %24 : vector<1x1x24xf32> to vector<8x8x24xf32>
    %27 = arith.mulf %25, %26 : vector<8x8x24xf32>
    %28 = arith.addf %20, %27 : vector<8x8x24xf32>
    %29 = vector.extract_strided_slice %3 {offsets = [0, 0, 3], sizes = [8, 8, 1], strides = [1, 1, 1]} : vector<8x8x4xf32> to vector<8x8x1xf32>
    %c3 = arith.constant 3 : index
    %c0_13 = arith.constant 0 : index
    %30 = vector.load %arg5[%c3, %c0_13] : memref<4x24xf32, #tpu.memory_space<vmem>>, vector<1x24xf32>
    %31 = vector.shape_cast %30 : vector<1x24xf32> to vector<24xf32>
    %32 = vector.shape_cast %31 : vector<24xf32> to vector<1x1x24xf32>
    %33 = vector.broadcast %29 : vector<8x8x1xf32> to vector<8x8x24xf32>
    %34 = vector.broadcast %32 : vector<1x1x24xf32> to vector<8x8x24xf32>
    %35 = arith.mulf %33, %34 : vector<8x8x24xf32>
    %36 = arith.addf %28, %35 : vector<8x8x24xf32>
    %c0_14 = arith.constant 0 : index
    %c0_15 = arith.constant 0 : index
    %37 = vector.load %arg6[%c0_14, %c0_15] : memref<1x24xf32, #tpu.memory_space<vmem>>, vector<1x24xf32>
    %38 = vector.shape_cast %37 : vector<1x24xf32> to vector<1x1x24xf32>
    %39 = vector.broadcast %38 : vector<1x1x24xf32> to vector<8x8x24xf32>
    %40 = arith.mulf %36, %39 : vector<8x8x24xf32>
    %c0_16 = arith.constant 0 : index
    %c0_17 = arith.constant 0 : index
    %41 = vector.load %arg7[%c0_16, %c0_17] : memref<1x24xf32, #tpu.memory_space<vmem>>, vector<1x24xf32>
    %42 = vector.shape_cast %41 : vector<1x24xf32> to vector<1x1x24xf32>
    %43 = vector.broadcast %42 : vector<1x1x24xf32> to vector<8x8x24xf32>
    %44 = arith.addf %40, %43 : vector<8x8x24xf32>
    %cst_18 = arith.constant 0.000000e+00 : f32
    %45 = vector.broadcast %cst_18 : f32 to vector<8x8x24xf32>
    %46 = arith.maximumf %44, %45 : vector<8x8x24xf32>
    %c1_19 = arith.constant 1 : index
    %c1_20 = arith.constant 1 : index
    %c1_21 = arith.constant 1 : index
    %c0_22 = arith.constant 0 : index
    %47 = vector.load %arg15[%c1_19, %c1_20, %c1_21, %c0_22] : memref<4x10x10x24xf32, #tpu.memory_space<vmem>>, vector<1x8x8x24xf32>
    %48 = vector.shape_cast %47 : vector<1x8x8x24xf32> to vector<8x8x24xf32>
    %49 = vector.shape_cast %46 : vector<8x8x24xf32> to vector<1x8x8x24xf32>
    tpu.vector_store %arg15[%c1_19, %c1_20, %c1_21, %c0_22], %49 {strides = array<i32>} : memref<4x10x10x24xf32, #tpu.memory_space<vmem>>, vector<1x8x8x24xf32>,
    %c0_23 = arith.constant 0 : index
    %c1_24 = arith.constant 1 : index
    %c0_25 = arith.constant 0 : index
    %c0_26 = arith.constant 0 : index
    %c0_27 = arith.constant 0 : index
    %50 = vector.load %arg2[%c0_23, %c1_24, %c0_25, %c0_26, %c0_27] : memref<1x2x8x8x4xf32, #tpu.memory_space<vmem>>, vector<1x1x8x8x4xf32>
    %51 = vector.shape_cast %50 : vector<1x1x8x8x4xf32> to vector<8x8x4xf32>
    %cst_28 = arith.constant 0.000000e+00 : f32
    %52 = vector.broadcast %cst_28 : f32 to vector<8x8x24xf32>
    %53 = vector.extract_strided_slice %51 {offsets = [0, 0, 0], sizes = [8, 8, 1], strides = [1, 1, 1]} : vector<8x8x4xf32> to vector<8x8x1xf32>
    %c0_29 = arith.constant 0 : index
    %c0_30 = arith.constant 0 : index
    %54 = vector.load %arg5[%c0_29, %c0_30] : memref<4x24xf32, #tpu.memory_space<vmem>>, vector<1x24xf32>
    %55 = vector.shape_cast %54 : vector<1x24xf32> to vector<24xf32>
    %56 = vector.shape_cast %55 : vector<24xf32> to vector<1x1x24xf32>
    %57 = vector.broadcast %53 : vector<8x8x1xf32> to vector<8x8x24xf32>
    %58 = vector.broadcast %56 : vector<1x1x24xf32> to vector<8x8x24xf32>
    %59 = arith.mulf %57, %58 : vector<8x8x24xf32>
    %60 = arith.addf %52, %59 : vector<8x8x24xf32>
    %61 = vector.extract_strided_slice %51 {offsets = [0, 0, 1], sizes = [8, 8, 1], strides = [1, 1, 1]} : vector<8x8x4xf32> to vector<8x8x1xf32>
    %c1_31 = arith.constant 1 : index
    %c0_32 = arith.constant 0 : index
    %62 = vector.load %arg5[%c1_31, %c0_32] : memref<4x24xf32, #tpu.memory_space<vmem>>, vector<1x24xf32>
    %63 = vector.shape_cast %62 : vector<1x24xf32> to vector<24xf32>
    %64 = vector.shape_cast %63 : vector<24xf32> to vector<1x1x24xf32>
    %65 = vector.broadcast %61 : vector<8x8x1xf32> to vector<8x8x24xf32>
    %66 = vector.broadcast %64 : vector<1x1x24xf32> to vector<8x8x24xf32>
    %67 = arith.mulf %65, %66 : vector<8x8x24xf32>
    %68 = arith.addf %60, %67 : vector<8x8x24xf32>
    %69 = vector.extract_strided_slice %51 {offsets = [0, 0, 2], sizes = [8, 8, 1], strides = [1, 1, 1]} : vector<8x8x4xf32> to vector<8x8x1xf32>
    %c2_33 = arith.constant 2 : index
    %c0_34 = arith.constant 0 : index
    %70 = vector.load %arg5[%c2_33, %c0_34] : memref<4x24xf32, #tpu.memory_space<vmem>>, vector<1x24xf32>
    %71 = vector.shape_cast %70 : vector<1x24xf32> to vector<24xf32>
    %72 = vector.shape_cast %71 : vector<24xf32> to vector<1x1x24xf32>
    %73 = vector.broadcast %69 : vector<8x8x1xf32> to vector<8x8x24xf32>
    %74 = vector.broadcast %72 : vector<1x1x24xf32> to vector<8x8x24xf32>
    %75 = arith.mulf %73, %74 : vector<8x8x24xf32>
    %76 = arith.addf %68, %75 : vector<8x8x24xf32>
    %77 = vector.extract_strided_slice %51 {offsets = [0, 0, 3], sizes = [8, 8, 1], strides = [1, 1, 1]} : vector<8x8x4xf32> to vector<8x8x1xf32>
    %c3_35 = arith.constant 3 : index
    %c0_36 = arith.constant 0 : index
    %78 = vector.load %arg5[%c3_35, %c0_36] : memref<4x24xf32, #tpu.memory_space<vmem>>, vector<1x24xf32>
    %79 = vector.shape_cast %78 : vector<1x24xf32> to vector<24xf32>
    %80 = vector.shape_cast %79 : vector<24xf32> to vector<1x1x24xf32>
    %81 = vector.broadcast %77 : vector<8x8x1xf32> to vector<8x8x24xf32>
    %82 = vector.broadcast %80 : vector<1x1x24xf32> to vector<8x8x24xf32>
    %83 = arith.mulf %81, %82 : vector<8x8x24xf32>
    %84 = arith.addf %76, %83 : vector<8x8x24xf32>
    %c0_37 = arith.constant 0 : index
    %c0_38 = arith.constant 0 : index
    %85 = vector.load %arg6[%c0_37, %c0_38] : memref<1x24xf32, #tpu.memory_space<vmem>>, vector<1x24xf32>
    %86 = vector.shape_cast %85 : vector<1x24xf32> to vector<1x1x24xf32>
    %87 = vector.broadcast %86 : vector<1x1x24xf32> to vector<8x8x24xf32>
    %88 = arith.mulf %84, %87 : vector<8x8x24xf32>
    %c0_39 = arith.constant 0 : index
    %c0_40 = arith.constant 0 : index
    %89 = vector.load %arg7[%c0_39, %c0_40] : memref<1x24xf32, #tpu.memory_space<vmem>>, vector<1x24xf32>
    %90 = vector.shape_cast %89 : vector<1x24xf32> to vector<1x1x24xf32>
    %91 = vector.broadcast %90 : vector<1x1x24xf32> to vector<8x8x24xf32>
    %92 = arith.addf %88, %91 : vector<8x8x24xf32>
    %cst_41 = arith.constant 0.000000e+00 : f32
    %93 = vector.broadcast %cst_41 : f32 to vector<8x8x24xf32>
    %94 = arith.maximumf %92, %93 : vector<8x8x24xf32>
    %c2_42 = arith.constant 2 : index
    %c1_43 = arith.constant 1 : index
    %c1_44 = arith.constant 1 : index
    %c0_45 = arith.constant 0 : index
    %95 = vector.load %arg15[%c2_42, %c1_43, %c1_44, %c0_45] : memref<4x10x10x24xf32, #tpu.memory_space<vmem>>, vector<1x8x8x24xf32>
    %96 = vector.shape_cast %95 : vector<1x8x8x24xf32> to vector<8x8x24xf32>
    %97 = vector.shape_cast %94 : vector<8x8x24xf32> to vector<1x8x8x24xf32>
    tpu.vector_store %arg15[%c2_42, %c1_43, %c1_44, %c0_45], %97 {strides = array<i32>} : memref<4x10x10x24xf32, #tpu.memory_space<vmem>>, vector<1x8x8x24xf32>,
    %c0_i32 = arith.constant 0 : i32
    %98 = arith.cmpi sgt, %arg1, %c0_i32 : i32
    %99 = arith.extui %98 : i1 to i32
    %c0_i32_46 = arith.constant 0 : i32
    %100 = arith.cmpi ne, %99, %c0_i32_46 : i32
    scf.if %100 {
      %c0_51 = arith.constant 0 : index
      %c0_52 = arith.constant 0 : index
      %c0_53 = arith.constant 0 : index
      %c0_54 = arith.constant 0 : index
      %c0_55 = arith.constant 0 : index
      %105 = vector.load %arg3[%c0_51, %c0_52, %c0_53, %c0_54, %c0_55] : memref<1x1x8x8x4xf32, #tpu.memory_space<vmem>>, vector<1x1x8x8x4xf32>
      %106 = vector.shape_cast %105 : vector<1x1x8x8x4xf32> to vector<8x8x4xf32>
      %cst_56 = arith.constant 0.000000e+00 : f32
      %107 = vector.broadcast %cst_56 : f32 to vector<8x8x24xf32>
      %108 = vector.extract_strided_slice %106 {offsets = [0, 0, 0], sizes = [8, 8, 1], strides = [1, 1, 1]} : vector<8x8x4xf32> to vector<8x8x1xf32>
      %c0_57 = arith.constant 0 : index
      %c0_58 = arith.constant 0 : index
      %109 = vector.load %arg5[%c0_57, %c0_58] : memref<4x24xf32, #tpu.memory_space<vmem>>, vector<1x24xf32>
      %110 = vector.shape_cast %109 : vector<1x24xf32> to vector<24xf32>
      %111 = vector.shape_cast %110 : vector<24xf32> to vector<1x1x24xf32>
      %112 = vector.broadcast %108 : vector<8x8x1xf32> to vector<8x8x24xf32>
      %113 = vector.broadcast %111 : vector<1x1x24xf32> to vector<8x8x24xf32>
      %114 = arith.mulf %112, %113 : vector<8x8x24xf32>
      %115 = arith.addf %107, %114 : vector<8x8x24xf32>
      %116 = vector.extract_strided_slice %106 {offsets = [0, 0, 1], sizes = [8, 8, 1], strides = [1, 1, 1]} : vector<8x8x4xf32> to vector<8x8x1xf32>
      %c1_59 = arith.constant 1 : index
      %c0_60 = arith.constant 0 : index
      %117 = vector.load %arg5[%c1_59, %c0_60] : memref<4x24xf32, #tpu.memory_space<vmem>>, vector<1x24xf32>
      %118 = vector.shape_cast %117 : vector<1x24xf32> to vector<24xf32>
      %119 = vector.shape_cast %118 : vector<24xf32> to vector<1x1x24xf32>
      %120 = vector.broadcast %116 : vector<8x8x1xf32> to vector<8x8x24xf32>
      %121 = vector.broadcast %119 : vector<1x1x24xf32> to vector<8x8x24xf32>
      %122 = arith.mulf %120, %121 : vector<8x8x24xf32>
      %123 = arith.addf %115, %122 : vector<8x8x24xf32>
      %124 = vector.extract_strided_slice %106 {offsets = [0, 0, 2], sizes = [8, 8, 1], strides = [1, 1, 1]} : vector<8x8x4xf32> to vector<8x8x1xf32>
      %c2_61 = arith.constant 2 : index
      %c0_62 = arith.constant 0 : index
      %125 = vector.load %arg5[%c2_61, %c0_62] : memref<4x24xf32, #tpu.memory_space<vmem>>, vector<1x24xf32>
      %126 = vector.shape_cast %125 : vector<1x24xf32> to vector<24xf32>
      %127 = vector.shape_cast %126 : vector<24xf32> to vector<1x1x24xf32>
      %128 = vector.broadcast %124 : vector<8x8x1xf32> to vector<8x8x24xf32>
      %129 = vector.broadcast %127 : vector<1x1x24xf32> to vector<8x8x24xf32>
      %130 = arith.mulf %128, %129 : vector<8x8x24xf32>
      %131 = arith.addf %123, %130 : vector<8x8x24xf32>
      %132 = vector.extract_strided_slice %106 {offsets = [0, 0, 3], sizes = [8, 8, 1], strides = [1, 1, 1]} : vector<8x8x4xf32> to vector<8x8x1xf32>
      %c3_63 = arith.constant 3 : index
      %c0_64 = arith.constant 0 : index
      %133 = vector.load %arg5[%c3_63, %c0_64] : memref<4x24xf32, #tpu.memory_space<vmem>>, vector<1x24xf32>
      %134 = vector.shape_cast %133 : vector<1x24xf32> to vector<24xf32>
      %135 = vector.shape_cast %134 : vector<24xf32> to vector<1x1x24xf32>
      %136 = vector.broadcast %132 : vector<8x8x1xf32> to vector<8x8x24xf32>
      %137 = vector.broadcast %135 : vector<1x1x24xf32> to vector<8x8x24xf32>
      %138 = arith.mulf %136, %137 : vector<8x8x24xf32>
      %139 = arith.addf %131, %138 : vector<8x8x24xf32>
      %c0_65 = arith.constant 0 : index
      %c0_66 = arith.constant 0 : index
      %140 = vector.load %arg6[%c0_65, %c0_66] : memref<1x24xf32, #tpu.memory_space<vmem>>, vector<1x24xf32>
      %141 = vector.shape_cast %140 : vector<1x24xf32> to vector<1x1x24xf32>
      %142 = vector.broadcast %141 : vector<1x1x24xf32> to vector<8x8x24xf32>
      %143 = arith.mulf %139, %142 : vector<8x8x24xf32>
      %c0_67 = arith.constant 0 : index
      %c0_68 = arith.constant 0 : index
      %144 = vector.load %arg7[%c0_67, %c0_68] : memref<1x24xf32, #tpu.memory_space<vmem>>, vector<1x24xf32>
      %145 = vector.shape_cast %144 : vector<1x24xf32> to vector<1x1x24xf32>
      %146 = vector.broadcast %145 : vector<1x1x24xf32> to vector<8x8x24xf32>
      %147 = arith.addf %143, %146 : vector<8x8x24xf32>
      %cst_69 = arith.constant 0.000000e+00 : f32
      %148 = vector.broadcast %cst_69 : f32 to vector<8x8x24xf32>
      %149 = arith.maximumf %147, %148 : vector<8x8x24xf32>
      %c0_70 = arith.constant 0 : index
      %c1_71 = arith.constant 1 : index
      %c1_72 = arith.constant 1 : index
      %c0_73 = arith.constant 0 : index
      %150 = vector.load %arg15[%c0_70, %c1_71, %c1_72, %c0_73] : memref<4x10x10x24xf32, #tpu.memory_space<vmem>>, vector<1x8x8x24xf32>
      %151 = vector.shape_cast %150 : vector<1x8x8x24xf32> to vector<8x8x24xf32>
      %152 = vector.shape_cast %149 : vector<8x8x24xf32> to vector<1x8x8x24xf32>
      tpu.vector_store %arg15[%c0_70, %c1_71, %c1_72, %c0_73], %152 {strides = array<i32>} : memref<4x10x10x24xf32, #tpu.memory_space<vmem>>, vector<1x8x8x24xf32>,
    } else {
    }
    %c2_i32 = arith.constant 2 : i32
    %101 = arith.cmpi slt, %arg1, %c2_i32 : i32
    %102 = arith.extui %101 : i1 to i32
    %c0_i32_47 = arith.constant 0 : i32
    %103 = arith.cmpi ne, %102, %c0_i32_47 : i32
    scf.if %103 {
      %c0_51 = arith.constant 0 : index
      %c0_52 = arith.constant 0 : index
      %c0_53 = arith.constant 0 : index
      %c0_54 = arith.constant 0 : index
      %c0_55 = arith.constant 0 : index
      %105 = vector.load %arg4[%c0_51, %c0_52, %c0_53, %c0_54, %c0_55] : memref<1x1x8x8x4xf32, #tpu.memory_space<vmem>>, vector<1x1x8x8x4xf32>
      %106 = vector.shape_cast %105 : vector<1x1x8x8x4xf32> to vector<8x8x4xf32>
      %cst_56 = arith.constant 0.000000e+00 : f32
      %107 = vector.broadcast %cst_56 : f32 to vector<8x8x24xf32>
      %108 = vector.extract_strided_slice %106 {offsets = [0, 0, 0], sizes = [8, 8, 1], strides = [1, 1, 1]} : vector<8x8x4xf32> to vector<8x8x1xf32>
      %c0_57 = arith.constant 0 : index
      %c0_58 = arith.constant 0 : index
      %109 = vector.load %arg5[%c0_57, %c0_58] : memref<4x24xf32, #tpu.memory_space<vmem>>, vector<1x24xf32>
      %110 = vector.shape_cast %109 : vector<1x24xf32> to vector<24xf32>
      %111 = vector.shape_cast %110 : vector<24xf32> to vector<1x1x24xf32>
      %112 = vector.broadcast %108 : vector<8x8x1xf32> to vector<8x8x24xf32>
      %113 = vector.broadcast %111 : vector<1x1x24xf32> to vector<8x8x24xf32>
      %114 = arith.mulf %112, %113 : vector<8x8x24xf32>
      %115 = arith.addf %107, %114 : vector<8x8x24xf32>
      %116 = vector.extract_strided_slice %106 {offsets = [0, 0, 1], sizes = [8, 8, 1], strides = [1, 1, 1]} : vector<8x8x4xf32> to vector<8x8x1xf32>
      %c1_59 = arith.constant 1 : index
      %c0_60 = arith.constant 0 : index
      %117 = vector.load %arg5[%c1_59, %c0_60] : memref<4x24xf32, #tpu.memory_space<vmem>>, vector<1x24xf32>
      %118 = vector.shape_cast %117 : vector<1x24xf32> to vector<24xf32>
      %119 = vector.shape_cast %118 : vector<24xf32> to vector<1x1x24xf32>
      %120 = vector.broadcast %116 : vector<8x8x1xf32> to vector<8x8x24xf32>
      %121 = vector.broadcast %119 : vector<1x1x24xf32> to vector<8x8x24xf32>
      %122 = arith.mulf %120, %121 : vector<8x8x24xf32>
      %123 = arith.addf %115, %122 : vector<8x8x24xf32>
      %124 = vector.extract_strided_slice %106 {offsets = [0, 0, 2], sizes = [8, 8, 1], strides = [1, 1, 1]} : vector<8x8x4xf32> to vector<8x8x1xf32>
      %c2_61 = arith.constant 2 : index
      %c0_62 = arith.constant 0 : index
      %125 = vector.load %arg5[%c2_61, %c0_62] : memref<4x24xf32, #tpu.memory_space<vmem>>, vector<1x24xf32>
      %126 = vector.shape_cast %125 : vector<1x24xf32> to vector<24xf32>
      %127 = vector.shape_cast %126 : vector<24xf32> to vector<1x1x24xf32>
      %128 = vector.broadcast %124 : vector<8x8x1xf32> to vector<8x8x24xf32>
      %129 = vector.broadcast %127 : vector<1x1x24xf32> to vector<8x8x24xf32>
      %130 = arith.mulf %128, %129 : vector<8x8x24xf32>
      %131 = arith.addf %123, %130 : vector<8x8x24xf32>
      %132 = vector.extract_strided_slice %106 {offsets = [0, 0, 3], sizes = [8, 8, 1], strides = [1, 1, 1]} : vector<8x8x4xf32> to vector<8x8x1xf32>
      %c3_63 = arith.constant 3 : index
      %c0_64 = arith.constant 0 : index
      %133 = vector.load %arg5[%c3_63, %c0_64] : memref<4x24xf32, #tpu.memory_space<vmem>>, vector<1x24xf32>
      %134 = vector.shape_cast %133 : vector<1x24xf32> to vector<24xf32>
      %135 = vector.shape_cast %134 : vector<24xf32> to vector<1x1x24xf32>
      %136 = vector.broadcast %132 : vector<8x8x1xf32> to vector<8x8x24xf32>
      %137 = vector.broadcast %135 : vector<1x1x24xf32> to vector<8x8x24xf32>
      %138 = arith.mulf %136, %137 : vector<8x8x24xf32>
      %139 = arith.addf %131, %138 : vector<8x8x24xf32>
      %c0_65 = arith.constant 0 : index
      %c0_66 = arith.constant 0 : index
      %140 = vector.load %arg6[%c0_65, %c0_66] : memref<1x24xf32, #tpu.memory_space<vmem>>, vector<1x24xf32>
      %141 = vector.shape_cast %140 : vector<1x24xf32> to vector<1x1x24xf32>
      %142 = vector.broadcast %141 : vector<1x1x24xf32> to vector<8x8x24xf32>
      %143 = arith.mulf %139, %142 : vector<8x8x24xf32>
      %c0_67 = arith.constant 0 : index
      %c0_68 = arith.constant 0 : index
      %144 = vector.load %arg7[%c0_67, %c0_68] : memref<1x24xf32, #tpu.memory_space<vmem>>, vector<1x24xf32>
      %145 = vector.shape_cast %144 : vector<1x24xf32> to vector<1x1x24xf32>
      %146 = vector.broadcast %145 : vector<1x1x24xf32> to vector<8x8x24xf32>
      %147 = arith.addf %143, %146 : vector<8x8x24xf32>
      %cst_69 = arith.constant 0.000000e+00 : f32
      %148 = vector.broadcast %cst_69 : f32 to vector<8x8x24xf32>
      %149 = arith.maximumf %147, %148 : vector<8x8x24xf32>
      %c3_70 = arith.constant 3 : index
      %c1_71 = arith.constant 1 : index
      %c1_72 = arith.constant 1 : index
      %c0_73 = arith.constant 0 : index
      %150 = vector.load %arg15[%c3_70, %c1_71, %c1_72, %c0_73] : memref<4x10x10x24xf32, #tpu.memory_space<vmem>>, vector<1x8x8x24xf32>
      %151 = vector.shape_cast %150 : vector<1x8x8x24xf32> to vector<8x8x24xf32>
      %152 = vector.shape_cast %149 : vector<8x8x24xf32> to vector<1x8x8x24xf32>
      tpu.vector_store %arg15[%c3_70, %c1_71, %c1_72, %c0_73], %152 {strides = array<i32>} : memref<4x10x10x24xf32, #tpu.memory_space<vmem>>, vector<1x8x8x24xf32>,
    } else {
    }
    %c0_i32_48 = arith.constant 0 : i32
    %c2_i32_49 = arith.constant 2 : i32
    %104 = arith.addi %c0_i32_48, %c2_i32_49 : i32
    %c1_i32 = arith.constant 1 : i32
    scf.for %arg16 = %c0_i32_48 to %104 step %c1_i32  : i32 {
      %cst_51 = arith.constant 0.000000e+00 : f32
      %105 = vector.broadcast %cst_51 : f32 to vector<8x8x24xf32>
      %c0_i32_52 = arith.constant 0 : i32
      %106 = arith.addi %arg16, %c0_i32_52 : i32
      %107 = arith.index_cast %106 : i32 to index
      %c0_53 = arith.constant 0 : index
      %c0_54 = arith.constant 0 : index
      %c0_55 = arith.constant 0 : index
      %108 = vector.load %arg15[%107, %c0_53, %c0_54, %c0_55] : memref<4x10x10x24xf32, #tpu.memory_space<vmem>>, vector<1x8x8x24xf32>
      %109 = vector.shape_cast %108 : vector<1x8x8x24xf32> to vector<8x8x24xf32>
      %c0_56 = arith.constant 0 : index
      %c0_57 = arith.constant 0 : index
      %110 = vector.load %arg8[%c0_56, %c0_57] : memref<27x24xf32, #tpu.memory_space<vmem>>, vector<1x24xf32>
      %111 = vector.shape_cast %110 : vector<1x24xf32> to vector<24xf32>
      %112 = vector.shape_cast %111 : vector<24xf32> to vector<1x1x24xf32>
      %113 = vector.broadcast %112 : vector<1x1x24xf32> to vector<8x8x24xf32>
      %114 = arith.mulf %109, %113 : vector<8x8x24xf32>
      %115 = arith.addf %105, %114 : vector<8x8x24xf32>
      %c0_i32_58 = arith.constant 0 : i32
      %116 = arith.addi %arg16, %c0_i32_58 : i32
      %117 = arith.index_cast %116 : i32 to index
      %c0_59 = arith.constant 0 : index
      %c1_60 = arith.constant 1 : index
      %c0_61 = arith.constant 0 : index
      %118 = vector.load %arg15[%117, %c0_59, %c1_60, %c0_61] : memref<4x10x10x24xf32, #tpu.memory_space<vmem>>, vector<1x8x8x24xf32>
      %119 = vector.shape_cast %118 : vector<1x8x8x24xf32> to vector<8x8x24xf32>
      %c1_62 = arith.constant 1 : index
      %c0_63 = arith.constant 0 : index
      %120 = vector.load %arg8[%c1_62, %c0_63] : memref<27x24xf32, #tpu.memory_space<vmem>>, vector<1x24xf32>
      %121 = vector.shape_cast %120 : vector<1x24xf32> to vector<24xf32>
      %122 = vector.shape_cast %121 : vector<24xf32> to vector<1x1x24xf32>
      %123 = vector.broadcast %122 : vector<1x1x24xf32> to vector<8x8x24xf32>
      %124 = arith.mulf %119, %123 : vector<8x8x24xf32>
      %125 = arith.addf %115, %124 : vector<8x8x24xf32>
      %c0_i32_64 = arith.constant 0 : i32
      %126 = arith.addi %arg16, %c0_i32_64 : i32
      %127 = arith.index_cast %126 : i32 to index
      %c0_65 = arith.constant 0 : index
      %c2_66 = arith.constant 2 : index
      %c0_67 = arith.constant 0 : index
      %128 = vector.load %arg15[%127, %c0_65, %c2_66, %c0_67] : memref<4x10x10x24xf32, #tpu.memory_space<vmem>>, vector<1x8x8x24xf32>
      %129 = vector.shape_cast %128 : vector<1x8x8x24xf32> to vector<8x8x24xf32>
      %c2_68 = arith.constant 2 : index
      %c0_69 = arith.constant 0 : index
      %130 = vector.load %arg8[%c2_68, %c0_69] : memref<27x24xf32, #tpu.memory_space<vmem>>, vector<1x24xf32>
      %131 = vector.shape_cast %130 : vector<1x24xf32> to vector<24xf32>
      %132 = vector.shape_cast %131 : vector<24xf32> to vector<1x1x24xf32>
      %133 = vector.broadcast %132 : vector<1x1x24xf32> to vector<8x8x24xf32>
      %134 = arith.mulf %129, %133 : vector<8x8x24xf32>
      %135 = arith.addf %125, %134 : vector<8x8x24xf32>
      %c0_i32_70 = arith.constant 0 : i32
      %136 = arith.addi %arg16, %c0_i32_70 : i32
      %137 = arith.index_cast %136 : i32 to index
      %c1_71 = arith.constant 1 : index
      %c0_72 = arith.constant 0 : index
      %c0_73 = arith.constant 0 : index
      %138 = vector.load %arg15[%137, %c1_71, %c0_72, %c0_73] : memref<4x10x10x24xf32, #tpu.memory_space<vmem>>, vector<1x8x8x24xf32>
      %139 = vector.shape_cast %138 : vector<1x8x8x24xf32> to vector<8x8x24xf32>
      %c3_74 = arith.constant 3 : index
      %c0_75 = arith.constant 0 : index
      %140 = vector.load %arg8[%c3_74, %c0_75] : memref<27x24xf32, #tpu.memory_space<vmem>>, vector<1x24xf32>
      %141 = vector.shape_cast %140 : vector<1x24xf32> to vector<24xf32>
      %142 = vector.shape_cast %141 : vector<24xf32> to vector<1x1x24xf32>
      %143 = vector.broadcast %142 : vector<1x1x24xf32> to vector<8x8x24xf32>
      %144 = arith.mulf %139, %143 : vector<8x8x24xf32>
      %145 = arith.addf %135, %144 : vector<8x8x24xf32>
      %c0_i32_76 = arith.constant 0 : i32
      %146 = arith.addi %arg16, %c0_i32_76 : i32
      %147 = arith.index_cast %146 : i32 to index
      %c1_77 = arith.constant 1 : index
      %c1_78 = arith.constant 1 : index
      %c0_79 = arith.constant 0 : index
      %148 = vector.load %arg15[%147, %c1_77, %c1_78, %c0_79] : memref<4x10x10x24xf32, #tpu.memory_space<vmem>>, vector<1x8x8x24xf32>
      %149 = vector.shape_cast %148 : vector<1x8x8x24xf32> to vector<8x8x24xf32>
      %c4 = arith.constant 4 : index
      %c0_80 = arith.constant 0 : index
      %150 = vector.load %arg8[%c4, %c0_80] : memref<27x24xf32, #tpu.memory_space<vmem>>, vector<1x24xf32>
      %151 = vector.shape_cast %150 : vector<1x24xf32> to vector<24xf32>
      %152 = vector.shape_cast %151 : vector<24xf32> to vector<1x1x24xf32>
      %153 = vector.broadcast %152 : vector<1x1x24xf32> to vector<8x8x24xf32>
      %154 = arith.mulf %149, %153 : vector<8x8x24xf32>
      %155 = arith.addf %145, %154 : vector<8x8x24xf32>
      %c0_i32_81 = arith.constant 0 : i32
      %156 = arith.addi %arg16, %c0_i32_81 : i32
      %157 = arith.index_cast %156 : i32 to index
      %c1_82 = arith.constant 1 : index
      %c2_83 = arith.constant 2 : index
      %c0_84 = arith.constant 0 : index
      %158 = vector.load %arg15[%157, %c1_82, %c2_83, %c0_84] : memref<4x10x10x24xf32, #tpu.memory_space<vmem>>, vector<1x8x8x24xf32>
      %159 = vector.shape_cast %158 : vector<1x8x8x24xf32> to vector<8x8x24xf32>
      %c5 = arith.constant 5 : index
      %c0_85 = arith.constant 0 : index
      %160 = vector.load %arg8[%c5, %c0_85] : memref<27x24xf32, #tpu.memory_space<vmem>>, vector<1x24xf32>
      %161 = vector.shape_cast %160 : vector<1x24xf32> to vector<24xf32>
      %162 = vector.shape_cast %161 : vector<24xf32> to vector<1x1x24xf32>
      %163 = vector.broadcast %162 : vector<1x1x24xf32> to vector<8x8x24xf32>
      %164 = arith.mulf %159, %163 : vector<8x8x24xf32>
      %165 = arith.addf %155, %164 : vector<8x8x24xf32>
      %c0_i32_86 = arith.constant 0 : i32
      %166 = arith.addi %arg16, %c0_i32_86 : i32
      %167 = arith.index_cast %166 : i32 to index
      %c2_87 = arith.constant 2 : index
      %c0_88 = arith.constant 0 : index
      %c0_89 = arith.constant 0 : index
      %168 = vector.load %arg15[%167, %c2_87, %c0_88, %c0_89] : memref<4x10x10x24xf32, #tpu.memory_space<vmem>>, vector<1x8x8x24xf32>
      %169 = vector.shape_cast %168 : vector<1x8x8x24xf32> to vector<8x8x24xf32>
      %c6 = arith.constant 6 : index
      %c0_90 = arith.constant 0 : index
      %170 = vector.load %arg8[%c6, %c0_90] : memref<27x24xf32, #tpu.memory_space<vmem>>, vector<1x24xf32>
      %171 = vector.shape_cast %170 : vector<1x24xf32> to vector<24xf32>
      %172 = vector.shape_cast %171 : vector<24xf32> to vector<1x1x24xf32>
      %173 = vector.broadcast %172 : vector<1x1x24xf32> to vector<8x8x24xf32>
      %174 = arith.mulf %169, %173 : vector<8x8x24xf32>
      %175 = arith.addf %165, %174 : vector<8x8x24xf32>
      %c0_i32_91 = arith.constant 0 : i32
      %176 = arith.addi %arg16, %c0_i32_91 : i32
      %177 = arith.index_cast %176 : i32 to index
      %c2_92 = arith.constant 2 : index
      %c1_93 = arith.constant 1 : index
      %c0_94 = arith.constant 0 : index
      %178 = vector.load %arg15[%177, %c2_92, %c1_93, %c0_94] : memref<4x10x10x24xf32, #tpu.memory_space<vmem>>, vector<1x8x8x24xf32>
      %179 = vector.shape_cast %178 : vector<1x8x8x24xf32> to vector<8x8x24xf32>
      %c7 = arith.constant 7 : index
      %c0_95 = arith.constant 0 : index
      %180 = vector.load %arg8[%c7, %c0_95] : memref<27x24xf32, #tpu.memory_space<vmem>>, vector<1x24xf32>
      %181 = vector.shape_cast %180 : vector<1x24xf32> to vector<24xf32>
      %182 = vector.shape_cast %181 : vector<24xf32> to vector<1x1x24xf32>
      %183 = vector.broadcast %182 : vector<1x1x24xf32> to vector<8x8x24xf32>
      %184 = arith.mulf %179, %183 : vector<8x8x24xf32>
      %185 = arith.addf %175, %184 : vector<8x8x24xf32>
      %c0_i32_96 = arith.constant 0 : i32
      %186 = arith.addi %arg16, %c0_i32_96 : i32
      %187 = arith.index_cast %186 : i32 to index
      %c2_97 = arith.constant 2 : index
      %c2_98 = arith.constant 2 : index
      %c0_99 = arith.constant 0 : index
      %188 = vector.load %arg15[%187, %c2_97, %c2_98, %c0_99] : memref<4x10x10x24xf32, #tpu.memory_space<vmem>>, vector<1x8x8x24xf32>
      %189 = vector.shape_cast %188 : vector<1x8x8x24xf32> to vector<8x8x24xf32>
      %c8 = arith.constant 8 : index
      %c0_100 = arith.constant 0 : index
      %190 = vector.load %arg8[%c8, %c0_100] : memref<27x24xf32, #tpu.memory_space<vmem>>, vector<1x24xf32>
      %191 = vector.shape_cast %190 : vector<1x24xf32> to vector<24xf32>
      %192 = vector.shape_cast %191 : vector<24xf32> to vector<1x1x24xf32>
      %193 = vector.broadcast %192 : vector<1x1x24xf32> to vector<8x8x24xf32>
      %194 = arith.mulf %189, %193 : vector<8x8x24xf32>
      %195 = arith.addf %185, %194 : vector<8x8x24xf32>
      %c1_i32_101 = arith.constant 1 : i32
      %196 = arith.addi %arg16, %c1_i32_101 : i32
      %197 = arith.index_cast %196 : i32 to index
      %c0_102 = arith.constant 0 : index
      %c0_103 = arith.constant 0 : index
      %c0_104 = arith.constant 0 : index
      %198 = vector.load %arg15[%197, %c0_102, %c0_103, %c0_104] : memref<4x10x10x24xf32, #tpu.memory_space<vmem>>, vector<1x8x8x24xf32>
      %199 = vector.shape_cast %198 : vector<1x8x8x24xf32> to vector<8x8x24xf32>
      %c9 = arith.constant 9 : index
      %c0_105 = arith.constant 0 : index
      %200 = vector.load %arg8[%c9, %c0_105] : memref<27x24xf32, #tpu.memory_space<vmem>>, vector<1x24xf32>
      %201 = vector.shape_cast %200 : vector<1x24xf32> to vector<24xf32>
      %202 = vector.shape_cast %201 : vector<24xf32> to vector<1x1x24xf32>
      %203 = vector.broadcast %202 : vector<1x1x24xf32> to vector<8x8x24xf32>
      %204 = arith.mulf %199, %203 : vector<8x8x24xf32>
      %205 = arith.addf %195, %204 : vector<8x8x24xf32>
      %c1_i32_106 = arith.constant 1 : i32
      %206 = arith.addi %arg16, %c1_i32_106 : i32
      %207 = arith.index_cast %206 : i32 to index
      %c0_107 = arith.constant 0 : index
      %c1_108 = arith.constant 1 : index
      %c0_109 = arith.constant 0 : index
      %208 = vector.load %arg15[%207, %c0_107, %c1_108, %c0_109] : memref<4x10x10x24xf32, #tpu.memory_space<vmem>>, vector<1x8x8x24xf32>
      %209 = vector.shape_cast %208 : vector<1x8x8x24xf32> to vector<8x8x24xf32>
      %c10 = arith.constant 10 : index
      %c0_110 = arith.constant 0 : index
      %210 = vector.load %arg8[%c10, %c0_110] : memref<27x24xf32, #tpu.memory_space<vmem>>, vector<1x24xf32>
      %211 = vector.shape_cast %210 : vector<1x24xf32> to vector<24xf32>
      %212 = vector.shape_cast %211 : vector<24xf32> to vector<1x1x24xf32>
      %213 = vector.broadcast %212 : vector<1x1x24xf32> to vector<8x8x24xf32>
      %214 = arith.mulf %209, %213 : vector<8x8x24xf32>
      %215 = arith.addf %205, %214 : vector<8x8x24xf32>
      %c1_i32_111 = arith.constant 1 : i32
      %216 = arith.addi %arg16, %c1_i32_111 : i32
      %217 = arith.index_cast %216 : i32 to index
      %c0_112 = arith.constant 0 : index
      %c2_113 = arith.constant 2 : index
      %c0_114 = arith.constant 0 : index
      %218 = vector.load %arg15[%217, %c0_112, %c2_113, %c0_114] : memref<4x10x10x24xf32, #tpu.memory_space<vmem>>, vector<1x8x8x24xf32>
      %219 = vector.shape_cast %218 : vector<1x8x8x24xf32> to vector<8x8x24xf32>
      %c11 = arith.constant 11 : index
      %c0_115 = arith.constant 0 : index
      %220 = vector.load %arg8[%c11, %c0_115] : memref<27x24xf32, #tpu.memory_space<vmem>>, vector<1x24xf32>
      %221 = vector.shape_cast %220 : vector<1x24xf32> to vector<24xf32>
      %222 = vector.shape_cast %221 : vector<24xf32> to vector<1x1x24xf32>
      %223 = vector.broadcast %222 : vector<1x1x24xf32> to vector<8x8x24xf32>
      %224 = arith.mulf %219, %223 : vector<8x8x24xf32>
      %225 = arith.addf %215, %224 : vector<8x8x24xf32>
      %c1_i32_116 = arith.constant 1 : i32
      %226 = arith.addi %arg16, %c1_i32_116 : i32
      %227 = arith.index_cast %226 : i32 to index
      %c1_117 = arith.constant 1 : index
      %c0_118 = arith.constant 0 : index
      %c0_119 = arith.constant 0 : index
      %228 = vector.load %arg15[%227, %c1_117, %c0_118, %c0_119] : memref<4x10x10x24xf32, #tpu.memory_space<vmem>>, vector<1x8x8x24xf32>
      %229 = vector.shape_cast %228 : vector<1x8x8x24xf32> to vector<8x8x24xf32>
      %c12 = arith.constant 12 : index
      %c0_120 = arith.constant 0 : index
      %230 = vector.load %arg8[%c12, %c0_120] : memref<27x24xf32, #tpu.memory_space<vmem>>, vector<1x24xf32>
      %231 = vector.shape_cast %230 : vector<1x24xf32> to vector<24xf32>
      %232 = vector.shape_cast %231 : vector<24xf32> to vector<1x1x24xf32>
      %233 = vector.broadcast %232 : vector<1x1x24xf32> to vector<8x8x24xf32>
      %234 = arith.mulf %229, %233 : vector<8x8x24xf32>
      %235 = arith.addf %225, %234 : vector<8x8x24xf32>
      %c1_i32_121 = arith.constant 1 : i32
      %236 = arith.addi %arg16, %c1_i32_121 : i32
      %237 = arith.index_cast %236 : i32 to index
      %c1_122 = arith.constant 1 : index
      %c1_123 = arith.constant 1 : index
      %c0_124 = arith.constant 0 : index
      %238 = vector.load %arg15[%237, %c1_122, %c1_123, %c0_124] : memref<4x10x10x24xf32, #tpu.memory_space<vmem>>, vector<1x8x8x24xf32>
      %239 = vector.shape_cast %238 : vector<1x8x8x24xf32> to vector<8x8x24xf32>
      %c13 = arith.constant 13 : index
      %c0_125 = arith.constant 0 : index
      %240 = vector.load %arg8[%c13, %c0_125] : memref<27x24xf32, #tpu.memory_space<vmem>>, vector<1x24xf32>
      %241 = vector.shape_cast %240 : vector<1x24xf32> to vector<24xf32>
      %242 = vector.shape_cast %241 : vector<24xf32> to vector<1x1x24xf32>
      %243 = vector.broadcast %242 : vector<1x1x24xf32> to vector<8x8x24xf32>
      %244 = arith.mulf %239, %243 : vector<8x8x24xf32>
      %245 = arith.addf %235, %244 : vector<8x8x24xf32>
      %c1_i32_126 = arith.constant 1 : i32
      %246 = arith.addi %arg16, %c1_i32_126 : i32
      %247 = arith.index_cast %246 : i32 to index
      %c1_127 = arith.constant 1 : index
      %c2_128 = arith.constant 2 : index
      %c0_129 = arith.constant 0 : index
      %248 = vector.load %arg15[%247, %c1_127, %c2_128, %c0_129] : memref<4x10x10x24xf32, #tpu.memory_space<vmem>>, vector<1x8x8x24xf32>
      %249 = vector.shape_cast %248 : vector<1x8x8x24xf32> to vector<8x8x24xf32>
      %c14 = arith.constant 14 : index
      %c0_130 = arith.constant 0 : index
      %250 = vector.load %arg8[%c14, %c0_130] : memref<27x24xf32, #tpu.memory_space<vmem>>, vector<1x24xf32>
      %251 = vector.shape_cast %250 : vector<1x24xf32> to vector<24xf32>
      %252 = vector.shape_cast %251 : vector<24xf32> to vector<1x1x24xf32>
      %253 = vector.broadcast %252 : vector<1x1x24xf32> to vector<8x8x24xf32>
      %254 = arith.mulf %249, %253 : vector<8x8x24xf32>
      %255 = arith.addf %245, %254 : vector<8x8x24xf32>
      %c1_i32_131 = arith.constant 1 : i32
      %256 = arith.addi %arg16, %c1_i32_131 : i32
      %257 = arith.index_cast %256 : i32 to index
      %c2_132 = arith.constant 2 : index
      %c0_133 = arith.constant 0 : index
      %c0_134 = arith.constant 0 : index
      %258 = vector.load %arg15[%257, %c2_132, %c0_133, %c0_134] : memref<4x10x10x24xf32, #tpu.memory_space<vmem>>, vector<1x8x8x24xf32>
      %259 = vector.shape_cast %258 : vector<1x8x8x24xf32> to vector<8x8x24xf32>
      %c15 = arith.constant 15 : index
      %c0_135 = arith.constant 0 : index
      %260 = vector.load %arg8[%c15, %c0_135] : memref<27x24xf32, #tpu.memory_space<vmem>>, vector<1x24xf32>
      %261 = vector.shape_cast %260 : vector<1x24xf32> to vector<24xf32>
      %262 = vector.shape_cast %261 : vector<24xf32> to vector<1x1x24xf32>
      %263 = vector.broadcast %262 : vector<1x1x24xf32> to vector<8x8x24xf32>
      %264 = arith.mulf %259, %263 : vector<8x8x24xf32>
      %265 = arith.addf %255, %264 : vector<8x8x24xf32>
      %c1_i32_136 = arith.constant 1 : i32
      %266 = arith.addi %arg16, %c1_i32_136 : i32
      %267 = arith.index_cast %266 : i32 to index
      %c2_137 = arith.constant 2 : index
      %c1_138 = arith.constant 1 : index
      %c0_139 = arith.constant 0 : index
      %268 = vector.load %arg15[%267, %c2_137, %c1_138, %c0_139] : memref<4x10x10x24xf32, #tpu.memory_space<vmem>>, vector<1x8x8x24xf32>
      %269 = vector.shape_cast %268 : vector<1x8x8x24xf32> to vector<8x8x24xf32>
      %c16 = arith.constant 16 : index
      %c0_140 = arith.constant 0 : index
      %270 = vector.load %arg8[%c16, %c0_140] : memref<27x24xf32, #tpu.memory_space<vmem>>, vector<1x24xf32>
      %271 = vector.shape_cast %270 : vector<1x24xf32> to vector<24xf32>
      %272 = vector.shape_cast %271 : vector<24xf32> to vector<1x1x24xf32>
      %273 = vector.broadcast %272 : vector<1x1x24xf32> to vector<8x8x24xf32>
      %274 = arith.mulf %269, %273 : vector<8x8x24xf32>
      %275 = arith.addf %265, %274 : vector<8x8x24xf32>
      %c1_i32_141 = arith.constant 1 : i32
      %276 = arith.addi %arg16, %c1_i32_141 : i32
      %277 = arith.index_cast %276 : i32 to index
      %c2_142 = arith.constant 2 : index
      %c2_143 = arith.constant 2 : index
      %c0_144 = arith.constant 0 : index
      %278 = vector.load %arg15[%277, %c2_142, %c2_143, %c0_144] : memref<4x10x10x24xf32, #tpu.memory_space<vmem>>, vector<1x8x8x24xf32>
      %279 = vector.shape_cast %278 : vector<1x8x8x24xf32> to vector<8x8x24xf32>
      %c17 = arith.constant 17 : index
      %c0_145 = arith.constant 0 : index
      %280 = vector.load %arg8[%c17, %c0_145] : memref<27x24xf32, #tpu.memory_space<vmem>>, vector<1x24xf32>
      %281 = vector.shape_cast %280 : vector<1x24xf32> to vector<24xf32>
      %282 = vector.shape_cast %281 : vector<24xf32> to vector<1x1x24xf32>
      %283 = vector.broadcast %282 : vector<1x1x24xf32> to vector<8x8x24xf32>
      %284 = arith.mulf %279, %283 : vector<8x8x24xf32>
      %285 = arith.addf %275, %284 : vector<8x8x24xf32>
      %c2_i32_146 = arith.constant 2 : i32
      %286 = arith.addi %arg16, %c2_i32_146 : i32
      %287 = arith.index_cast %286 : i32 to index
      %c0_147 = arith.constant 0 : index
      %c0_148 = arith.constant 0 : index
      %c0_149 = arith.constant 0 : index
      %288 = vector.load %arg15[%287, %c0_147, %c0_148, %c0_149] : memref<4x10x10x24xf32, #tpu.memory_space<vmem>>, vector<1x8x8x24xf32>
      %289 = vector.shape_cast %288 : vector<1x8x8x24xf32> to vector<8x8x24xf32>
      %c18 = arith.constant 18 : index
      %c0_150 = arith.constant 0 : index
      %290 = vector.load %arg8[%c18, %c0_150] : memref<27x24xf32, #tpu.memory_space<vmem>>, vector<1x24xf32>
      %291 = vector.shape_cast %290 : vector<1x24xf32> to vector<24xf32>
      %292 = vector.shape_cast %291 : vector<24xf32> to vector<1x1x24xf32>
      %293 = vector.broadcast %292 : vector<1x1x24xf32> to vector<8x8x24xf32>
      %294 = arith.mulf %289, %293 : vector<8x8x24xf32>
      %295 = arith.addf %285, %294 : vector<8x8x24xf32>
      %c2_i32_151 = arith.constant 2 : i32
      %296 = arith.addi %arg16, %c2_i32_151 : i32
      %297 = arith.index_cast %296 : i32 to index
      %c0_152 = arith.constant 0 : index
      %c1_153 = arith.constant 1 : index
      %c0_154 = arith.constant 0 : index
      %298 = vector.load %arg15[%297, %c0_152, %c1_153, %c0_154] : memref<4x10x10x24xf32, #tpu.memory_space<vmem>>, vector<1x8x8x24xf32>
      %299 = vector.shape_cast %298 : vector<1x8x8x24xf32> to vector<8x8x24xf32>
      %c19 = arith.constant 19 : index
      %c0_155 = arith.constant 0 : index
      %300 = vector.load %arg8[%c19, %c0_155] : memref<27x24xf32, #tpu.memory_space<vmem>>, vector<1x24xf32>
      %301 = vector.shape_cast %300 : vector<1x24xf32> to vector<24xf32>
      %302 = vector.shape_cast %301 : vector<24xf32> to vector<1x1x24xf32>
      %303 = vector.broadcast %302 : vector<1x1x24xf32> to vector<8x8x24xf32>
      %304 = arith.mulf %299, %303 : vector<8x8x24xf32>
      %305 = arith.addf %295, %304 : vector<8x8x24xf32>
      %c2_i32_156 = arith.constant 2 : i32
      %306 = arith.addi %arg16, %c2_i32_156 : i32
      %307 = arith.index_cast %306 : i32 to index
      %c0_157 = arith.constant 0 : index
      %c2_158 = arith.constant 2 : index
      %c0_159 = arith.constant 0 : index
      %308 = vector.load %arg15[%307, %c0_157, %c2_158, %c0_159] : memref<4x10x10x24xf32, #tpu.memory_space<vmem>>, vector<1x8x8x24xf32>
      %309 = vector.shape_cast %308 : vector<1x8x8x24xf32> to vector<8x8x24xf32>
      %c20 = arith.constant 20 : index
      %c0_160 = arith.constant 0 : index
      %310 = vector.load %arg8[%c20, %c0_160] : memref<27x24xf32, #tpu.memory_space<vmem>>, vector<1x24xf32>
      %311 = vector.shape_cast %310 : vector<1x24xf32> to vector<24xf32>
      %312 = vector.shape_cast %311 : vector<24xf32> to vector<1x1x24xf32>
      %313 = vector.broadcast %312 : vector<1x1x24xf32> to vector<8x8x24xf32>
      %314 = arith.mulf %309, %313 : vector<8x8x24xf32>
      %315 = arith.addf %305, %314 : vector<8x8x24xf32>
      %c2_i32_161 = arith.constant 2 : i32
      %316 = arith.addi %arg16, %c2_i32_161 : i32
      %317 = arith.index_cast %316 : i32 to index
      %c1_162 = arith.constant 1 : index
      %c0_163 = arith.constant 0 : index
      %c0_164 = arith.constant 0 : index
      %318 = vector.load %arg15[%317, %c1_162, %c0_163, %c0_164] : memref<4x10x10x24xf32, #tpu.memory_space<vmem>>, vector<1x8x8x24xf32>
      %319 = vector.shape_cast %318 : vector<1x8x8x24xf32> to vector<8x8x24xf32>
      %c21 = arith.constant 21 : index
      %c0_165 = arith.constant 0 : index
      %320 = vector.load %arg8[%c21, %c0_165] : memref<27x24xf32, #tpu.memory_space<vmem>>, vector<1x24xf32>
      %321 = vector.shape_cast %320 : vector<1x24xf32> to vector<24xf32>
      %322 = vector.shape_cast %321 : vector<24xf32> to vector<1x1x24xf32>
      %323 = vector.broadcast %322 : vector<1x1x24xf32> to vector<8x8x24xf32>
      %324 = arith.mulf %319, %323 : vector<8x8x24xf32>
      %325 = arith.addf %315, %324 : vector<8x8x24xf32>
      %c2_i32_166 = arith.constant 2 : i32
      %326 = arith.addi %arg16, %c2_i32_166 : i32
      %327 = arith.index_cast %326 : i32 to index
      %c1_167 = arith.constant 1 : index
      %c1_168 = arith.constant 1 : index
      %c0_169 = arith.constant 0 : index
      %328 = vector.load %arg15[%327, %c1_167, %c1_168, %c0_169] : memref<4x10x10x24xf32, #tpu.memory_space<vmem>>, vector<1x8x8x24xf32>
      %329 = vector.shape_cast %328 : vector<1x8x8x24xf32> to vector<8x8x24xf32>
      %c22 = arith.constant 22 : index
      %c0_170 = arith.constant 0 : index
      %330 = vector.load %arg8[%c22, %c0_170] : memref<27x24xf32, #tpu.memory_space<vmem>>, vector<1x24xf32>
      %331 = vector.shape_cast %330 : vector<1x24xf32> to vector<24xf32>
      %332 = vector.shape_cast %331 : vector<24xf32> to vector<1x1x24xf32>
      %333 = vector.broadcast %332 : vector<1x1x24xf32> to vector<8x8x24xf32>
      %334 = arith.mulf %329, %333 : vector<8x8x24xf32>
      %335 = arith.addf %325, %334 : vector<8x8x24xf32>
      %c2_i32_171 = arith.constant 2 : i32
      %336 = arith.addi %arg16, %c2_i32_171 : i32
      %337 = arith.index_cast %336 : i32 to index
      %c1_172 = arith.constant 1 : index
      %c2_173 = arith.constant 2 : index
      %c0_174 = arith.constant 0 : index
      %338 = vector.load %arg15[%337, %c1_172, %c2_173, %c0_174] : memref<4x10x10x24xf32, #tpu.memory_space<vmem>>, vector<1x8x8x24xf32>
      %339 = vector.shape_cast %338 : vector<1x8x8x24xf32> to vector<8x8x24xf32>
      %c23 = arith.constant 23 : index
      %c0_175 = arith.constant 0 : index
      %340 = vector.load %arg8[%c23, %c0_175] : memref<27x24xf32, #tpu.memory_space<vmem>>, vector<1x24xf32>
      %341 = vector.shape_cast %340 : vector<1x24xf32> to vector<24xf32>
      %342 = vector.shape_cast %341 : vector<24xf32> to vector<1x1x24xf32>
      %343 = vector.broadcast %342 : vector<1x1x24xf32> to vector<8x8x24xf32>
      %344 = arith.mulf %339, %343 : vector<8x8x24xf32>
      %345 = arith.addf %335, %344 : vector<8x8x24xf32>
      %c2_i32_176 = arith.constant 2 : i32
      %346 = arith.addi %arg16, %c2_i32_176 : i32
      %347 = arith.index_cast %346 : i32 to index
      %c2_177 = arith.constant 2 : index
      %c0_178 = arith.constant 0 : index
      %c0_179 = arith.constant 0 : index
      %348 = vector.load %arg15[%347, %c2_177, %c0_178, %c0_179] : memref<4x10x10x24xf32, #tpu.memory_space<vmem>>, vector<1x8x8x24xf32>
      %349 = vector.shape_cast %348 : vector<1x8x8x24xf32> to vector<8x8x24xf32>
      %c24 = arith.constant 24 : index
      %c0_180 = arith.constant 0 : index
      %350 = vector.load %arg8[%c24, %c0_180] : memref<27x24xf32, #tpu.memory_space<vmem>>, vector<1x24xf32>
      %351 = vector.shape_cast %350 : vector<1x24xf32> to vector<24xf32>
      %352 = vector.shape_cast %351 : vector<24xf32> to vector<1x1x24xf32>
      %353 = vector.broadcast %352 : vector<1x1x24xf32> to vector<8x8x24xf32>
      %354 = arith.mulf %349, %353 : vector<8x8x24xf32>
      %355 = arith.addf %345, %354 : vector<8x8x24xf32>
      %c2_i32_181 = arith.constant 2 : i32
      %356 = arith.addi %arg16, %c2_i32_181 : i32
      %357 = arith.index_cast %356 : i32 to index
      %c2_182 = arith.constant 2 : index
      %c1_183 = arith.constant 1 : index
      %c0_184 = arith.constant 0 : index
      %358 = vector.load %arg15[%357, %c2_182, %c1_183, %c0_184] : memref<4x10x10x24xf32, #tpu.memory_space<vmem>>, vector<1x8x8x24xf32>
      %359 = vector.shape_cast %358 : vector<1x8x8x24xf32> to vector<8x8x24xf32>
      %c25 = arith.constant 25 : index
      %c0_185 = arith.constant 0 : index
      %360 = vector.load %arg8[%c25, %c0_185] : memref<27x24xf32, #tpu.memory_space<vmem>>, vector<1x24xf32>
      %361 = vector.shape_cast %360 : vector<1x24xf32> to vector<24xf32>
      %362 = vector.shape_cast %361 : vector<24xf32> to vector<1x1x24xf32>
      %363 = vector.broadcast %362 : vector<1x1x24xf32> to vector<8x8x24xf32>
      %364 = arith.mulf %359, %363 : vector<8x8x24xf32>
      %365 = arith.addf %355, %364 : vector<8x8x24xf32>
      %c2_i32_186 = arith.constant 2 : i32
      %366 = arith.addi %arg16, %c2_i32_186 : i32
      %367 = arith.index_cast %366 : i32 to index
      %c2_187 = arith.constant 2 : index
      %c2_188 = arith.constant 2 : index
      %c0_189 = arith.constant 0 : index
      %368 = vector.load %arg15[%367, %c2_187, %c2_188, %c0_189] : memref<4x10x10x24xf32, #tpu.memory_space<vmem>>, vector<1x8x8x24xf32>
      %369 = vector.shape_cast %368 : vector<1x8x8x24xf32> to vector<8x8x24xf32>
      %c26 = arith.constant 26 : index
      %c0_190 = arith.constant 0 : index
      %370 = vector.load %arg8[%c26, %c0_190] : memref<27x24xf32, #tpu.memory_space<vmem>>, vector<1x24xf32>
      %371 = vector.shape_cast %370 : vector<1x24xf32> to vector<24xf32>
      %372 = vector.shape_cast %371 : vector<24xf32> to vector<1x1x24xf32>
      %373 = vector.broadcast %372 : vector<1x1x24xf32> to vector<8x8x24xf32>
      %374 = arith.mulf %369, %373 : vector<8x8x24xf32>
      %375 = arith.addf %365, %374 : vector<8x8x24xf32>
      %c0_191 = arith.constant 0 : index
      %c0_192 = arith.constant 0 : index
      %376 = vector.load %arg9[%c0_191, %c0_192] : memref<1x24xf32, #tpu.memory_space<vmem>>, vector<1x24xf32>
      %377 = vector.shape_cast %376 : vector<1x24xf32> to vector<1x1x24xf32>
      %378 = vector.broadcast %377 : vector<1x1x24xf32> to vector<8x8x24xf32>
      %379 = arith.mulf %375, %378 : vector<8x8x24xf32>
      %c0_193 = arith.constant 0 : index
      %c0_194 = arith.constant 0 : index
      %380 = vector.load %arg10[%c0_193, %c0_194] : memref<1x24xf32, #tpu.memory_space<vmem>>, vector<1x24xf32>
      %381 = vector.shape_cast %380 : vector<1x24xf32> to vector<1x1x24xf32>
      %382 = vector.broadcast %381 : vector<1x1x24xf32> to vector<8x8x24xf32>
      %383 = arith.addf %379, %382 : vector<8x8x24xf32>
      %cst_195 = arith.constant 0.000000e+00 : f32
      %384 = vector.broadcast %cst_195 : f32 to vector<8x8x24xf32>
      %385 = arith.maximumf %383, %384 : vector<8x8x24xf32>
      %cst_196 = arith.constant 0.000000e+00 : f32
      %386 = vector.broadcast %cst_196 : f32 to vector<8x8x4xf32>
      %387 = vector.extract_strided_slice %385 {offsets = [0, 0, 0], sizes = [8, 8, 1], strides = [1, 1, 1]} : vector<8x8x24xf32> to vector<8x8x1xf32>
      %c0_197 = arith.constant 0 : index
      %c0_198 = arith.constant 0 : index
      %388 = vector.load %arg11[%c0_197, %c0_198] : memref<24x4xf32, #tpu.memory_space<vmem>>, vector<1x4xf32>
      %389 = vector.shape_cast %388 : vector<1x4xf32> to vector<4xf32>
      %390 = vector.shape_cast %389 : vector<4xf32> to vector<1x1x4xf32>
      %391 = vector.broadcast %387 : vector<8x8x1xf32> to vector<8x8x4xf32>
      %392 = vector.broadcast %390 : vector<1x1x4xf32> to vector<8x8x4xf32>
      %393 = arith.mulf %391, %392 : vector<8x8x4xf32>
      %394 = arith.addf %386, %393 : vector<8x8x4xf32>
      %395 = vector.extract_strided_slice %385 {offsets = [0, 0, 1], sizes = [8, 8, 1], strides = [1, 1, 1]} : vector<8x8x24xf32> to vector<8x8x1xf32>
      %c1_199 = arith.constant 1 : index
      %c0_200 = arith.constant 0 : index
      %396 = vector.load %arg11[%c1_199, %c0_200] : memref<24x4xf32, #tpu.memory_space<vmem>>, vector<1x4xf32>
      %397 = vector.shape_cast %396 : vector<1x4xf32> to vector<4xf32>
      %398 = vector.shape_cast %397 : vector<4xf32> to vector<1x1x4xf32>
      %399 = vector.broadcast %395 : vector<8x8x1xf32> to vector<8x8x4xf32>
      %400 = vector.broadcast %398 : vector<1x1x4xf32> to vector<8x8x4xf32>
      %401 = arith.mulf %399, %400 : vector<8x8x4xf32>
      %402 = arith.addf %394, %401 : vector<8x8x4xf32>
      %403 = vector.extract_strided_slice %385 {offsets = [0, 0, 2], sizes = [8, 8, 1], strides = [1, 1, 1]} : vector<8x8x24xf32> to vector<8x8x1xf32>
      %c2_201 = arith.constant 2 : index
      %c0_202 = arith.constant 0 : index
      %404 = vector.load %arg11[%c2_201, %c0_202] : memref<24x4xf32, #tpu.memory_space<vmem>>, vector<1x4xf32>
      %405 = vector.shape_cast %404 : vector<1x4xf32> to vector<4xf32>
      %406 = vector.shape_cast %405 : vector<4xf32> to vector<1x1x4xf32>
      %407 = vector.broadcast %403 : vector<8x8x1xf32> to vector<8x8x4xf32>
      %408 = vector.broadcast %406 : vector<1x1x4xf32> to vector<8x8x4xf32>
      %409 = arith.mulf %407, %408 : vector<8x8x4xf32>
      %410 = arith.addf %402, %409 : vector<8x8x4xf32>
      %411 = vector.extract_strided_slice %385 {offsets = [0, 0, 3], sizes = [8, 8, 1], strides = [1, 1, 1]} : vector<8x8x24xf32> to vector<8x8x1xf32>
      %c3_203 = arith.constant 3 : index
      %c0_204 = arith.constant 0 : index
      %412 = vector.load %arg11[%c3_203, %c0_204] : memref<24x4xf32, #tpu.memory_space<vmem>>, vector<1x4xf32>
      %413 = vector.shape_cast %412 : vector<1x4xf32> to vector<4xf32>
      %414 = vector.shape_cast %413 : vector<4xf32> to vector<1x1x4xf32>
      %415 = vector.broadcast %411 : vector<8x8x1xf32> to vector<8x8x4xf32>
      %416 = vector.broadcast %414 : vector<1x1x4xf32> to vector<8x8x4xf32>
      %417 = arith.mulf %415, %416 : vector<8x8x4xf32>
      %418 = arith.addf %410, %417 : vector<8x8x4xf32>
      %419 = vector.extract_strided_slice %385 {offsets = [0, 0, 4], sizes = [8, 8, 1], strides = [1, 1, 1]} : vector<8x8x24xf32> to vector<8x8x1xf32>
      %c4_205 = arith.constant 4 : index
      %c0_206 = arith.constant 0 : index
      %420 = vector.load %arg11[%c4_205, %c0_206] : memref<24x4xf32, #tpu.memory_space<vmem>>, vector<1x4xf32>
      %421 = vector.shape_cast %420 : vector<1x4xf32> to vector<4xf32>
      %422 = vector.shape_cast %421 : vector<4xf32> to vector<1x1x4xf32>
      %423 = vector.broadcast %419 : vector<8x8x1xf32> to vector<8x8x4xf32>
      %424 = vector.broadcast %422 : vector<1x1x4xf32> to vector<8x8x4xf32>
      %425 = arith.mulf %423, %424 : vector<8x8x4xf32>
      %426 = arith.addf %418, %425 : vector<8x8x4xf32>
      %427 = vector.extract_strided_slice %385 {offsets = [0, 0, 5], sizes = [8, 8, 1], strides = [1, 1, 1]} : vector<8x8x24xf32> to vector<8x8x1xf32>
      %c5_207 = arith.constant 5 : index
      %c0_208 = arith.constant 0 : index
      %428 = vector.load %arg11[%c5_207, %c0_208] : memref<24x4xf32, #tpu.memory_space<vmem>>, vector<1x4xf32>
      %429 = vector.shape_cast %428 : vector<1x4xf32> to vector<4xf32>
      %430 = vector.shape_cast %429 : vector<4xf32> to vector<1x1x4xf32>
      %431 = vector.broadcast %427 : vector<8x8x1xf32> to vector<8x8x4xf32>
      %432 = vector.broadcast %430 : vector<1x1x4xf32> to vector<8x8x4xf32>
      %433 = arith.mulf %431, %432 : vector<8x8x4xf32>
      %434 = arith.addf %426, %433 : vector<8x8x4xf32>
      %435 = vector.extract_strided_slice %385 {offsets = [0, 0, 6], sizes = [8, 8, 1], strides = [1, 1, 1]} : vector<8x8x24xf32> to vector<8x8x1xf32>
      %c6_209 = arith.constant 6 : index
      %c0_210 = arith.constant 0 : index
      %436 = vector.load %arg11[%c6_209, %c0_210] : memref<24x4xf32, #tpu.memory_space<vmem>>, vector<1x4xf32>
      %437 = vector.shape_cast %436 : vector<1x4xf32> to vector<4xf32>
      %438 = vector.shape_cast %437 : vector<4xf32> to vector<1x1x4xf32>
      %439 = vector.broadcast %435 : vector<8x8x1xf32> to vector<8x8x4xf32>
      %440 = vector.broadcast %438 : vector<1x1x4xf32> to vector<8x8x4xf32>
      %441 = arith.mulf %439, %440 : vector<8x8x4xf32>
      %442 = arith.addf %434, %441 : vector<8x8x4xf32>
      %443 = vector.extract_strided_slice %385 {offsets = [0, 0, 7], sizes = [8, 8, 1], strides = [1, 1, 1]} : vector<8x8x24xf32> to vector<8x8x1xf32>
      %c7_211 = arith.constant 7 : index
      %c0_212 = arith.constant 0 : index
      %444 = vector.load %arg11[%c7_211, %c0_212] : memref<24x4xf32, #tpu.memory_space<vmem>>, vector<1x4xf32>
      %445 = vector.shape_cast %444 : vector<1x4xf32> to vector<4xf32>
      %446 = vector.shape_cast %445 : vector<4xf32> to vector<1x1x4xf32>
      %447 = vector.broadcast %443 : vector<8x8x1xf32> to vector<8x8x4xf32>
      %448 = vector.broadcast %446 : vector<1x1x4xf32> to vector<8x8x4xf32>
      %449 = arith.mulf %447, %448 : vector<8x8x4xf32>
      %450 = arith.addf %442, %449 : vector<8x8x4xf32>
      %451 = vector.extract_strided_slice %385 {offsets = [0, 0, 8], sizes = [8, 8, 1], strides = [1, 1, 1]} : vector<8x8x24xf32> to vector<8x8x1xf32>
      %c8_213 = arith.constant 8 : index
      %c0_214 = arith.constant 0 : index
      %452 = vector.load %arg11[%c8_213, %c0_214] : memref<24x4xf32, #tpu.memory_space<vmem>>, vector<1x4xf32>
      %453 = vector.shape_cast %452 : vector<1x4xf32> to vector<4xf32>
      %454 = vector.shape_cast %453 : vector<4xf32> to vector<1x1x4xf32>
      %455 = vector.broadcast %451 : vector<8x8x1xf32> to vector<8x8x4xf32>
      %456 = vector.broadcast %454 : vector<1x1x4xf32> to vector<8x8x4xf32>
      %457 = arith.mulf %455, %456 : vector<8x8x4xf32>
      %458 = arith.addf %450, %457 : vector<8x8x4xf32>
      %459 = vector.extract_strided_slice %385 {offsets = [0, 0, 9], sizes = [8, 8, 1], strides = [1, 1, 1]} : vector<8x8x24xf32> to vector<8x8x1xf32>
      %c9_215 = arith.constant 9 : index
      %c0_216 = arith.constant 0 : index
      %460 = vector.load %arg11[%c9_215, %c0_216] : memref<24x4xf32, #tpu.memory_space<vmem>>, vector<1x4xf32>
      %461 = vector.shape_cast %460 : vector<1x4xf32> to vector<4xf32>
      %462 = vector.shape_cast %461 : vector<4xf32> to vector<1x1x4xf32>
      %463 = vector.broadcast %459 : vector<8x8x1xf32> to vector<8x8x4xf32>
      %464 = vector.broadcast %462 : vector<1x1x4xf32> to vector<8x8x4xf32>
      %465 = arith.mulf %463, %464 : vector<8x8x4xf32>
      %466 = arith.addf %458, %465 : vector<8x8x4xf32>
      %467 = vector.extract_strided_slice %385 {offsets = [0, 0, 10], sizes = [8, 8, 1], strides = [1, 1, 1]} : vector<8x8x24xf32> to vector<8x8x1xf32>
      %c10_217 = arith.constant 10 : index
      %c0_218 = arith.constant 0 : index
      %468 = vector.load %arg11[%c10_217, %c0_218] : memref<24x4xf32, #tpu.memory_space<vmem>>, vector<1x4xf32>
      %469 = vector.shape_cast %468 : vector<1x4xf32> to vector<4xf32>
      %470 = vector.shape_cast %469 : vector<4xf32> to vector<1x1x4xf32>
      %471 = vector.broadcast %467 : vector<8x8x1xf32> to vector<8x8x4xf32>
      %472 = vector.broadcast %470 : vector<1x1x4xf32> to vector<8x8x4xf32>
      %473 = arith.mulf %471, %472 : vector<8x8x4xf32>
      %474 = arith.addf %466, %473 : vector<8x8x4xf32>
      %475 = vector.extract_strided_slice %385 {offsets = [0, 0, 11], sizes = [8, 8, 1], strides = [1, 1, 1]} : vector<8x8x24xf32> to vector<8x8x1xf32>
      %c11_219 = arith.constant 11 : index
      %c0_220 = arith.constant 0 : index
      %476 = vector.load %arg11[%c11_219, %c0_220] : memref<24x4xf32, #tpu.memory_space<vmem>>, vector<1x4xf32>
      %477 = vector.shape_cast %476 : vector<1x4xf32> to vector<4xf32>
      %478 = vector.shape_cast %477 : vector<4xf32> to vector<1x1x4xf32>
      %479 = vector.broadcast %475 : vector<8x8x1xf32> to vector<8x8x4xf32>
      %480 = vector.broadcast %478 : vector<1x1x4xf32> to vector<8x8x4xf32>
      %481 = arith.mulf %479, %480 : vector<8x8x4xf32>
      %482 = arith.addf %474, %481 : vector<8x8x4xf32>
      %483 = vector.extract_strided_slice %385 {offsets = [0, 0, 12], sizes = [8, 8, 1], strides = [1, 1, 1]} : vector<8x8x24xf32> to vector<8x8x1xf32>
      %c12_221 = arith.constant 12 : index
      %c0_222 = arith.constant 0 : index
      %484 = vector.load %arg11[%c12_221, %c0_222] : memref<24x4xf32, #tpu.memory_space<vmem>>, vector<1x4xf32>
      %485 = vector.shape_cast %484 : vector<1x4xf32> to vector<4xf32>
      %486 = vector.shape_cast %485 : vector<4xf32> to vector<1x1x4xf32>
      %487 = vector.broadcast %483 : vector<8x8x1xf32> to vector<8x8x4xf32>
      %488 = vector.broadcast %486 : vector<1x1x4xf32> to vector<8x8x4xf32>
      %489 = arith.mulf %487, %488 : vector<8x8x4xf32>
      %490 = arith.addf %482, %489 : vector<8x8x4xf32>
      %491 = vector.extract_strided_slice %385 {offsets = [0, 0, 13], sizes = [8, 8, 1], strides = [1, 1, 1]} : vector<8x8x24xf32> to vector<8x8x1xf32>
      %c13_223 = arith.constant 13 : index
      %c0_224 = arith.constant 0 : index
      %492 = vector.load %arg11[%c13_223, %c0_224] : memref<24x4xf32, #tpu.memory_space<vmem>>, vector<1x4xf32>
      %493 = vector.shape_cast %492 : vector<1x4xf32> to vector<4xf32>
      %494 = vector.shape_cast %493 : vector<4xf32> to vector<1x1x4xf32>
      %495 = vector.broadcast %491 : vector<8x8x1xf32> to vector<8x8x4xf32>
      %496 = vector.broadcast %494 : vector<1x1x4xf32> to vector<8x8x4xf32>
      %497 = arith.mulf %495, %496 : vector<8x8x4xf32>
      %498 = arith.addf %490, %497 : vector<8x8x4xf32>
      %499 = vector.extract_strided_slice %385 {offsets = [0, 0, 14], sizes = [8, 8, 1], strides = [1, 1, 1]} : vector<8x8x24xf32> to vector<8x8x1xf32>
      %c14_225 = arith.constant 14 : index
      %c0_226 = arith.constant 0 : index
      %500 = vector.load %arg11[%c14_225, %c0_226] : memref<24x4xf32, #tpu.memory_space<vmem>>, vector<1x4xf32>
      %501 = vector.shape_cast %500 : vector<1x4xf32> to vector<4xf32>
      %502 = vector.shape_cast %501 : vector<4xf32> to vector<1x1x4xf32>
      %503 = vector.broadcast %499 : vector<8x8x1xf32> to vector<8x8x4xf32>
      %504 = vector.broadcast %502 : vector<1x1x4xf32> to vector<8x8x4xf32>
      %505 = arith.mulf %503, %504 : vector<8x8x4xf32>
      %506 = arith.addf %498, %505 : vector<8x8x4xf32>
      %507 = vector.extract_strided_slice %385 {offsets = [0, 0, 15], sizes = [8, 8, 1], strides = [1, 1, 1]} : vector<8x8x24xf32> to vector<8x8x1xf32>
      %c15_227 = arith.constant 15 : index
      %c0_228 = arith.constant 0 : index
      %508 = vector.load %arg11[%c15_227, %c0_228] : memref<24x4xf32, #tpu.memory_space<vmem>>, vector<1x4xf32>
      %509 = vector.shape_cast %508 : vector<1x4xf32> to vector<4xf32>
      %510 = vector.shape_cast %509 : vector<4xf32> to vector<1x1x4xf32>
      %511 = vector.broadcast %507 : vector<8x8x1xf32> to vector<8x8x4xf32>
      %512 = vector.broadcast %510 : vector<1x1x4xf32> to vector<8x8x4xf32>
      %513 = arith.mulf %511, %512 : vector<8x8x4xf32>
      %514 = arith.addf %506, %513 : vector<8x8x4xf32>
      %515 = vector.extract_strided_slice %385 {offsets = [0, 0, 16], sizes = [8, 8, 1], strides = [1, 1, 1]} : vector<8x8x24xf32> to vector<8x8x1xf32>
      %c16_229 = arith.constant 16 : index
      %c0_230 = arith.constant 0 : index
      %516 = vector.load %arg11[%c16_229, %c0_230] : memref<24x4xf32, #tpu.memory_space<vmem>>, vector<1x4xf32>
      %517 = vector.shape_cast %516 : vector<1x4xf32> to vector<4xf32>
      %518 = vector.shape_cast %517 : vector<4xf32> to vector<1x1x4xf32>
      %519 = vector.broadcast %515 : vector<8x8x1xf32> to vector<8x8x4xf32>
      %520 = vector.broadcast %518 : vector<1x1x4xf32> to vector<8x8x4xf32>
      %521 = arith.mulf %519, %520 : vector<8x8x4xf32>
      %522 = arith.addf %514, %521 : vector<8x8x4xf32>
      %523 = vector.extract_strided_slice %385 {offsets = [0, 0, 17], sizes = [8, 8, 1], strides = [1, 1, 1]} : vector<8x8x24xf32> to vector<8x8x1xf32>
      %c17_231 = arith.constant 17 : index
      %c0_232 = arith.constant 0 : index
      %524 = vector.load %arg11[%c17_231, %c0_232] : memref<24x4xf32, #tpu.memory_space<vmem>>, vector<1x4xf32>
      %525 = vector.shape_cast %524 : vector<1x4xf32> to vector<4xf32>
      %526 = vector.shape_cast %525 : vector<4xf32> to vector<1x1x4xf32>
      %527 = vector.broadcast %523 : vector<8x8x1xf32> to vector<8x8x4xf32>
      %528 = vector.broadcast %526 : vector<1x1x4xf32> to vector<8x8x4xf32>
      %529 = arith.mulf %527, %528 : vector<8x8x4xf32>
      %530 = arith.addf %522, %529 : vector<8x8x4xf32>
      %531 = vector.extract_strided_slice %385 {offsets = [0, 0, 18], sizes = [8, 8, 1], strides = [1, 1, 1]} : vector<8x8x24xf32> to vector<8x8x1xf32>
      %c18_233 = arith.constant 18 : index
      %c0_234 = arith.constant 0 : index
      %532 = vector.load %arg11[%c18_233, %c0_234] : memref<24x4xf32, #tpu.memory_space<vmem>>, vector<1x4xf32>
      %533 = vector.shape_cast %532 : vector<1x4xf32> to vector<4xf32>
      %534 = vector.shape_cast %533 : vector<4xf32> to vector<1x1x4xf32>
      %535 = vector.broadcast %531 : vector<8x8x1xf32> to vector<8x8x4xf32>
      %536 = vector.broadcast %534 : vector<1x1x4xf32> to vector<8x8x4xf32>
      %537 = arith.mulf %535, %536 : vector<8x8x4xf32>
      %538 = arith.addf %530, %537 : vector<8x8x4xf32>
      %539 = vector.extract_strided_slice %385 {offsets = [0, 0, 19], sizes = [8, 8, 1], strides = [1, 1, 1]} : vector<8x8x24xf32> to vector<8x8x1xf32>
      %c19_235 = arith.constant 19 : index
      %c0_236 = arith.constant 0 : index
      %540 = vector.load %arg11[%c19_235, %c0_236] : memref<24x4xf32, #tpu.memory_space<vmem>>, vector<1x4xf32>
      %541 = vector.shape_cast %540 : vector<1x4xf32> to vector<4xf32>
      %542 = vector.shape_cast %541 : vector<4xf32> to vector<1x1x4xf32>
      %543 = vector.broadcast %539 : vector<8x8x1xf32> to vector<8x8x4xf32>
      %544 = vector.broadcast %542 : vector<1x1x4xf32> to vector<8x8x4xf32>
      %545 = arith.mulf %543, %544 : vector<8x8x4xf32>
      %546 = arith.addf %538, %545 : vector<8x8x4xf32>
      %547 = vector.extract_strided_slice %385 {offsets = [0, 0, 20], sizes = [8, 8, 1], strides = [1, 1, 1]} : vector<8x8x24xf32> to vector<8x8x1xf32>
      %c20_237 = arith.constant 20 : index
      %c0_238 = arith.constant 0 : index
      %548 = vector.load %arg11[%c20_237, %c0_238] : memref<24x4xf32, #tpu.memory_space<vmem>>, vector<1x4xf32>
      %549 = vector.shape_cast %548 : vector<1x4xf32> to vector<4xf32>
      %550 = vector.shape_cast %549 : vector<4xf32> to vector<1x1x4xf32>
      %551 = vector.broadcast %547 : vector<8x8x1xf32> to vector<8x8x4xf32>
      %552 = vector.broadcast %550 : vector<1x1x4xf32> to vector<8x8x4xf32>
      %553 = arith.mulf %551, %552 : vector<8x8x4xf32>
      %554 = arith.addf %546, %553 : vector<8x8x4xf32>
      %555 = vector.extract_strided_slice %385 {offsets = [0, 0, 21], sizes = [8, 8, 1], strides = [1, 1, 1]} : vector<8x8x24xf32> to vector<8x8x1xf32>
      %c21_239 = arith.constant 21 : index
      %c0_240 = arith.constant 0 : index
      %556 = vector.load %arg11[%c21_239, %c0_240] : memref<24x4xf32, #tpu.memory_space<vmem>>, vector<1x4xf32>
      %557 = vector.shape_cast %556 : vector<1x4xf32> to vector<4xf32>
      %558 = vector.shape_cast %557 : vector<4xf32> to vector<1x1x4xf32>
      %559 = vector.broadcast %555 : vector<8x8x1xf32> to vector<8x8x4xf32>
      %560 = vector.broadcast %558 : vector<1x1x4xf32> to vector<8x8x4xf32>
      %561 = arith.mulf %559, %560 : vector<8x8x4xf32>
      %562 = arith.addf %554, %561 : vector<8x8x4xf32>
      %563 = vector.extract_strided_slice %385 {offsets = [0, 0, 22], sizes = [8, 8, 1], strides = [1, 1, 1]} : vector<8x8x24xf32> to vector<8x8x1xf32>
      %c22_241 = arith.constant 22 : index
      %c0_242 = arith.constant 0 : index
      %564 = vector.load %arg11[%c22_241, %c0_242] : memref<24x4xf32, #tpu.memory_space<vmem>>, vector<1x4xf32>
      %565 = vector.shape_cast %564 : vector<1x4xf32> to vector<4xf32>
      %566 = vector.shape_cast %565 : vector<4xf32> to vector<1x1x4xf32>
      %567 = vector.broadcast %563 : vector<8x8x1xf32> to vector<8x8x4xf32>
      %568 = vector.broadcast %566 : vector<1x1x4xf32> to vector<8x8x4xf32>
      %569 = arith.mulf %567, %568 : vector<8x8x4xf32>
      %570 = arith.addf %562, %569 : vector<8x8x4xf32>
      %571 = vector.extract_strided_slice %385 {offsets = [0, 0, 23], sizes = [8, 8, 1], strides = [1, 1, 1]} : vector<8x8x24xf32> to vector<8x8x1xf32>
      %c23_243 = arith.constant 23 : index
      %c0_244 = arith.constant 0 : index
      %572 = vector.load %arg11[%c23_243, %c0_244] : memref<24x4xf32, #tpu.memory_space<vmem>>, vector<1x4xf32>
      %573 = vector.shape_cast %572 : vector<1x4xf32> to vector<4xf32>
      %574 = vector.shape_cast %573 : vector<4xf32> to vector<1x1x4xf32>
      %575 = vector.broadcast %571 : vector<8x8x1xf32> to vector<8x8x4xf32>
      %576 = vector.broadcast %574 : vector<1x1x4xf32> to vector<8x8x4xf32>
      %577 = arith.mulf %575, %576 : vector<8x8x4xf32>
      %578 = arith.addf %570, %577 : vector<8x8x4xf32>
      %c0_245 = arith.constant 0 : index
      %c0_246 = arith.constant 0 : index
      %579 = vector.load %arg12[%c0_245, %c0_246] : memref<1x4xf32, #tpu.memory_space<vmem>>, vector<1x4xf32>
      %580 = vector.shape_cast %579 : vector<1x4xf32> to vector<1x1x4xf32>
      %581 = vector.broadcast %580 : vector<1x1x4xf32> to vector<8x8x4xf32>
      %582 = arith.mulf %578, %581 : vector<8x8x4xf32>
      %c0_247 = arith.constant 0 : index
      %c0_248 = arith.constant 0 : index
      %583 = vector.load %arg13[%c0_247, %c0_248] : memref<1x4xf32, #tpu.memory_space<vmem>>, vector<1x4xf32>
      %584 = vector.shape_cast %583 : vector<1x4xf32> to vector<1x1x4xf32>
      %585 = vector.broadcast %584 : vector<1x1x4xf32> to vector<8x8x4xf32>
      %586 = arith.addf %582, %585 : vector<8x8x4xf32>
      %c0_249 = arith.constant 0 : index
      %587 = arith.index_cast %arg16 : i32 to index
      %c0_250 = arith.constant 0 : index
      %c0_251 = arith.constant 0 : index
      %c0_252 = arith.constant 0 : index
      %588 = vector.load %arg2[%c0_249, %587, %c0_250, %c0_251, %c0_252] : memref<1x2x8x8x4xf32, #tpu.memory_space<vmem>>, vector<1x1x8x8x4xf32>
      %589 = vector.shape_cast %588 : vector<1x1x8x8x4xf32> to vector<8x8x4xf32>
      %590 = arith.addf %586, %589 : vector<8x8x4xf32>
      %c0_253 = arith.constant 0 : index
      %591 = arith.index_cast %arg16 : i32 to index
      %c0_254 = arith.constant 0 : index
      %c0_255 = arith.constant 0 : index
      %c0_256 = arith.constant 0 : index
      %592 = vector.load %arg14[%c0_253, %591, %c0_254, %c0_255, %c0_256] : memref<1x2x8x8x4xf32, #tpu.memory_space<vmem>>, vector<1x1x8x8x4xf32>
      %593 = vector.shape_cast %592 : vector<1x1x8x8x4xf32> to vector<8x8x4xf32>
      %594 = vector.shape_cast %590 : vector<8x8x4xf32> to vector<1x1x8x8x4xf32>
      tpu.vector_store %arg14[%c0_253, %591, %c0_254, %c0_255, %c0_256], %594 {strides = array<i32>} : memref<1x2x8x8x4xf32, #tpu.memory_space<vmem>>, vector<1x1x8x8x4xf32>,
    }
    %c2_i32_50 = arith.constant 2 : i32
    return
  }
  func.func @transform_0(%arg0: i32, %arg1: i32) -> (i32, i32, i32, i32, i32) {
    %c0_i32 = arith.constant 0 : i32
    %c0_i32_0 = arith.constant 0 : i32
    %c0_i32_1 = arith.constant 0 : i32
    %c0_i32_2 = arith.constant 0 : i32
    return %arg0, %arg1, %c0_i32, %c0_i32_0, %c0_i32_1 : i32, i32, i32, i32, i32
  }
  func.func @transform_1(%arg0: i32, %arg1: i32) -> (i32, i32, i32, i32, i32) {
    %c2_i32 = arith.constant 2 : i32
    %0 = arith.muli %arg1, %c2_i32 : i32
    %c1_i32 = arith.constant 1 : i32
    %1 = arith.subi %0, %c1_i32 : i32
    %c0_i32 = arith.constant 0 : i32
    %2 = arith.maxsi %1, %c0_i32 : i32
    %c0_i32_0 = arith.constant 0 : i32
    %c0_i32_1 = arith.constant 0 : i32
    %c0_i32_2 = arith.constant 0 : i32
    %c0_i32_3 = arith.constant 0 : i32
    return %arg0, %2, %c0_i32_0, %c0_i32_1, %c0_i32_2 : i32, i32, i32, i32, i32
  }
  func.func @transform_2(%arg0: i32, %arg1: i32) -> (i32, i32, i32, i32, i32) {
    %c1_i32 = arith.constant 1 : i32
    %0 = arith.addi %arg1, %c1_i32 : i32
    %c2_i32 = arith.constant 2 : i32
    %1 = arith.muli %0, %c2_i32 : i32
    %c5_i32 = arith.constant 5 : i32
    %2 = arith.minsi %1, %c5_i32 : i32
    %c0_i32 = arith.constant 0 : i32
    %c0_i32_0 = arith.constant 0 : i32
    %c0_i32_1 = arith.constant 0 : i32
    %c0_i32_2 = arith.constant 0 : i32
    return %arg0, %2, %c0_i32, %c0_i32_0, %c0_i32_1 : i32, i32, i32, i32, i32
  }
  func.func @transform_3(%arg0: i32, %arg1: i32) -> (i32, i32) {
    %c0_i32 = arith.constant 0 : i32
    %c0_i32_0 = arith.constant 0 : i32
    %c0_i32_1 = arith.constant 0 : i32
    return %c0_i32, %c0_i32_0 : i32, i32
  }
  func.func @transform_4(%arg0: i32, %arg1: i32) -> (i32, i32) {
    %c0_i32 = arith.constant 0 : i32
    %c0_i32_0 = arith.constant 0 : i32
    %c0_i32_1 = arith.constant 0 : i32
    return %c0_i32, %c0_i32_0 : i32, i32
  }
  func.func @transform_5(%arg0: i32, %arg1: i32) -> (i32, i32) {
    %c0_i32 = arith.constant 0 : i32
    %c0_i32_0 = arith.constant 0 : i32
    %c0_i32_1 = arith.constant 0 : i32
    return %c0_i32, %c0_i32_0 : i32, i32
  }
  func.func @transform_6(%arg0: i32, %arg1: i32) -> (i32, i32) {
    %c0_i32 = arith.constant 0 : i32
    %c0_i32_0 = arith.constant 0 : i32
    %c0_i32_1 = arith.constant 0 : i32
    return %c0_i32, %c0_i32_0 : i32, i32
  }
  func.func @transform_7(%arg0: i32, %arg1: i32) -> (i32, i32) {
    %c0_i32 = arith.constant 0 : i32
    %c0_i32_0 = arith.constant 0 : i32
    %c0_i32_1 = arith.constant 0 : i32
    return %c0_i32, %c0_i32_0 : i32, i32
  }
  func.func @transform_8(%arg0: i32, %arg1: i32) -> (i32, i32) {
    %c0_i32 = arith.constant 0 : i32
    %c0_i32_0 = arith.constant 0 : i32
    %c0_i32_1 = arith.constant 0 : i32
    return %c0_i32, %c0_i32_0 : i32, i32
  }
  func.func @transform_9(%arg0: i32, %arg1: i32) -> (i32, i32) {
    %c0_i32 = arith.constant 0 : i32
    %c0_i32_0 = arith.constant 0 : i32
    %c0_i32_1 = arith.constant 0 : i32
    return %c0_i32, %c0_i32_0 : i32, i32
  }
  func.func @transform_10(%arg0: i32, %arg1: i32) -> (i32, i32) {
    %c0_i32 = arith.constant 0 : i32
    %c0_i32_0 = arith.constant 0 : i32
    %c0_i32_1 = arith.constant 0 : i32
    return %c0_i32, %c0_i32_0 : i32, i32
  }
  func.func @transform_11(%arg0: i32, %arg1: i32) -> (i32, i32) {
    %c0_i32 = arith.constant 0 : i32
    %c0_i32_0 = arith.constant 0 : i32
    %c0_i32_1 = arith.constant 0 : i32
    return %c0_i32, %c0_i32_0 : i32, i32
  }
  func.func @transform_12(%arg0: i32, %arg1: i32) -> (i32, i32, i32, i32, i32) {
    %c0_i32 = arith.constant 0 : i32
    %c0_i32_0 = arith.constant 0 : i32
    %c0_i32_1 = arith.constant 0 : i32
    %c0_i32_2 = arith.constant 0 : i32
    return %arg0, %arg1, %c0_i32, %c0_i32_0, %c0_i32_1 : i32, i32, i32, i32, i32
  }
}

</mosaic_0001>

<llo_original>
// kernel: irf3d_block_forward.1
$region0: #{irf3d_block_forward.1}
  #allocation0 [shape = 'u32[]', space=smem, size = 0x4, offset = 0x4, fixed_abs, tag = 'smem constant byte address 0x4 - core index']
  #allocation1 [shape = 'u32[144,128]{1,0:T(1,128)}', space=vmem, size = 0x12000, scoped, tag = 'internal scratch']
  #allocation2 [shape = 'f32[4,10,10,24]{3,2,1,0:T(8,128)}', space=vmem, size = 0x50000, scoped, tag = 'scratch operand']
  %s0 = inlined_call_operand.vmem [shape: f32[2,6,8,8,4], index: 0, kind: input, shape index: {}, may-alias: {0,1,2}]
  %s1 = inlined_call_operand.vmem [shape: f32[2,6,8,8,4], index: 1, kind: input, shape index: {}, may-alias: {0,1,2}]
  %s2 = inlined_call_operand.vmem [shape: f32[2,6,8,8,4], index: 2, kind: input, shape index: {}, may-alias: {0,1,2}]
  %s3 = inlined_call_operand.vmem [shape: f32[4,24], index: 3, kind: input, shape index: {}]
  %s4 = inlined_call_operand.vmem [shape: f32[1,24], index: 4, kind: input, shape index: {}]
  %s5 = inlined_call_operand.vmem [shape: f32[1,24], index: 5, kind: input, shape index: {}]
  %s6 = inlined_call_operand.vmem [shape: f32[27,24], index: 6, kind: input, shape index: {}]
  %s7 = inlined_call_operand.vmem [shape: f32[1,24], index: 7, kind: input, shape index: {}]
  %s8 = inlined_call_operand.vmem [shape: f32[1,24], index: 8, kind: input, shape index: {}]
  %s9 = inlined_call_operand.vmem [shape: f32[24,4], index: 9, kind: input, shape index: {}]
  %s10 = inlined_call_operand.vmem [shape: f32[1,4], index: 10, kind: input, shape index: {}]
  %s11 = inlined_call_operand.vmem [shape: f32[1,4], index: 11, kind: input, shape index: {}]
  %s12 = inlined_call_operand.vmem [shape: f32[2,6,8,8,4], index: 12, kind: output, shape index: {}]
  %s13 = sld [smem:[#allocation0]]
  $region96: #{irf3d_block_forward.1} parent=0
    _
  %s15 = ssub.s32 1, %s13
  %s16 = scalar_select 0, %s15, %s13
  loop: start=0, step=1, limit=8
  $region2: #{irf3d_block_forward.1} parent=0 // loop_pre_header
    _
  $region3: #{irf3d_block_forward.1} parent=0 // loop_header
    %s18 = sphi 0, %s22
    %p19 = scmp.ge.s32.totalorder %s18, 8
    %s25 = sphi 0, %s37
    %s26 = sphi 0, %s33
    %s27 = sphi 0, %s25
    %s28 = sphi 0, %s26
    %s29 = sphi 0, %s27
    %s30 = sphi 0, %s28
    %s42 = sphi 0, %s44
    %s45 = sphi 0, %s42
    %s46 = sphi 0, %s45
    %s62 = sphi 0, %s46
    %s78 = sphi 0, %s80
    %s81 = sphi 0, %s78
    %s82 = sphi 0, %s81
    %s98 = sphi 0, %s82
    %s114 = sphi 0, %s116
    %s117 = sphi 0, %s114
    %s118 = sphi 0, %s117
    %s134 = sphi 0, %s118
    %s138 = sphi 0, %s138
    %s140 = sphi 0, %s138
    %s141 = sphi 0, %s140
    %s155 = sphi 0, %s141
    %s159 = sphi 0, %s159
    %s161 = sphi 0, %s159
    %s162 = sphi 0, %s161
    %s176 = sphi 0, %s162
    %s180 = sphi 0, %s180
    %s182 = sphi 0, %s180
    %s183 = sphi 0, %s182
    %s197 = sphi 0, %s183
    %s201 = sphi 0, %s201
    %s203 = sphi 0, %s201
    %s204 = sphi 0, %s203
    %s218 = sphi 0, %s204
    %s222 = sphi 0, %s222
    %s224 = sphi 0, %s222
    %s225 = sphi 0, %s224
    %s239 = sphi 0, %s225
    %s243 = sphi 0, %s243
    %s245 = sphi 0, %s243
    %s246 = sphi 0, %s245
    %s260 = sphi 0, %s246
    %s264 = sphi 0, %s264
    %s266 = sphi 0, %s264
    %s267 = sphi 0, %s266
    %s281 = sphi 0, %s267
    %s285 = sphi 0, %s285
    %s287 = sphi 0, %s285
    %s288 = sphi 0, %s287
    %s302 = sphi 0, %s288
    %s306 = sphi 0, %s306
    %s308 = sphi 0, %s306
    %s309 = sphi 0, %s308
    %s323 = sphi 0, %s309
    %s331 = sphi 0, %s333
    %s334 = sphi 0, %s331
    %s335 = sphi 0, %s334
    %s351 = sphi 0, %s335
  $region4: #{irf3d_block_forward.1} parent=0 // loop_header_branch
    %21 = sbr.rel (%p19) target = $region8
  $region5: #{irf3d_block_forward.1} parent=0 // loop_body
    %s23 = ssub.s32 %s18, 1
    %s24 = ssub.s32 %s18, 2
    %s31 = sadd.s32 1, %s26
    %p32 = scmp.ge.s32.totalorder %s31, 3
    %s33 = scalar_select %p32, 0, %s31
    %s34 = sadd.s32 1, %s25
    %s35 = scalar_select %p32, %s34, %s25
    %p36 = scmp.ge.s32.totalorder %s35, 2
    %s37 = scalar_select %p36, 0, %s35
    %s38 = ssub.s32 %s25, %s37
    %s39 = ssub.s32 %s26, %s33
    %s40 = sor.u32 %s38, %s39
    %p41 = scmp.eq.s32.totalorder %s40, 0
    %s43 = sadd.s32 %s42, 1
    %s44 = scalar_select %p41, %s42, %s43
    %p47 = pneg %p41
    %p48 = scmp.eq.s32.totalorder %s18, 5
    %p49 = por %p47, %p48
    %p50 = scmp.ne.s32.totalorder %s42, %s45
    %p51 = scmp.eq.s32.totalorder %s18, 0
    %p52 = por %p50, %p51
    %p53 = scmp.ne.s32.totalorder %s42, %s45
    %p54 = scmp.eq.s32.totalorder %s23, 5
    %p55 = por %p53, %p54
    %p56 = scmp.ne.s32.totalorder %s45, %s46
    %p57 = scmp.eq.s32.totalorder %s23, 0
    %p58 = por %p56, %p57
    %p59 = scmp.ne.s32.totalorder %s45, %s46
    %p60 = scmp.eq.s32.totalorder %s24, 5
    %p61 = por %p59, %p60
    %p63 = scmp.ne.s32.totalorder %s46, %s62
    %p64 = scmp.eq.s32.totalorder %s24, 0
    %p65 = por %p63, %p64
    %s66 = smul.u32 %s26, 2
    %s67 = ssub.s32 %s66, 1
    %p68 = scmp.gt.s32.totalorder %s67, 0
    %s69 = scalar_select %p68, %s67, 0
    %s70 = smul.u32 %s33, 2
    %s71 = ssub.s32 %s70, 1
    %p72 = scmp.gt.s32.totalorder %s71, 0
    %s73 = scalar_select %p72, %s71, 0
    %s74 = ssub.s32 %s25, %s37
    %s75 = ssub.s32 %s69, %s73
    %s76 = sor.u32 %s74, %s75
    %p77 = scmp.eq.s32.totalorder %s76, 0
    %s79 = sadd.s32 %s78, 1
    %s80 = scalar_select %p77, %s78, %s79
    %p83 = pneg %p77
    %p84 = scmp.eq.s32.totalorder %s18, 5
    %p85 = por %p83, %p84
    %p86 = scmp.ne.s32.totalorder %s78, %s81
    %p87 = scmp.eq.s32.totalorder %s18, 0
    %p88 = por %p86, %p87
    %p89 = scmp.ne.s32.totalorder %s78, %s81
    %p90 = scmp.eq.s32.totalorder %s23, 5
    %p91 = por %p89, %p90
    %p92 = scmp.ne.s32.totalorder %s81, %s82
    %p93 = scmp.eq.s32.totalorder %s23, 0
    %p94 = por %p92, %p93
    %p95 = scmp.ne.s32.totalorder %s81, %s82
    %p96 = scmp.eq.s32.totalorder %s24, 5
    %p97 = por %p95, %p96
    %p99 = scmp.ne.s32.totalorder %s82, %s98
    %p100 = scmp.eq.s32.totalorder %s24, 0
    %p101 = por %p99, %p100
    %s102 = sadd.s32 %s26, 1
    %s103 = smul.u32 %s102, 2
    %p104 = scmp.lt.s32.totalorder %s103, 5
    %s105 = scalar_select %p104, %s103, 5
    %s106 = sadd.s32 %s33, 1
    %s107 = smul.u32 %s106, 2
    %p108 = scmp.lt.s32.totalorder %s107, 5
    %s109 = scalar_select %p108, %s107, 5
    %s110 = ssub.s32 %s25, %s37
    %s111 = ssub.s32 %s105, %s109
    %s112 = sor.u32 %s110, %s111
    %p113 = scmp.eq.s32.totalorder %s112, 0
    %s115 = sadd.s32 %s114, 1
    %s116 = scalar_select %p113, %s114, %s115
    %p119 = pneg %p113
    %p120 = scmp.eq.s32.totalorder %s18, 5
    %p121 = por %p119, %p120
    %p122 = scmp.ne.s32.totalorder %s114, %s117
    %p123 = scmp.eq.s32.totalorder %s18, 0
    %p124 = por %p122, %p123
    %p125 = scmp.ne.s32.totalorder %s114, %s117
    %p126 = scmp.eq.s32.totalorder %s23, 5
    %p127 = por %p125, %p126
    %p128 = scmp.ne.s32.totalorder %s117, %s118
    %p129 = scmp.eq.s32.totalorder %s23, 0
    %p130 = por %p128, %p129
    %p131 = scmp.ne.s32.totalorder %s117, %s118
    %p132 = scmp.eq.s32.totalorder %s24, 5
    %p133 = por %p131, %p132
    %p135 = scmp.ne.s32.totalorder %s118, %s134
    %p136 = scmp.eq.s32.totalorder %s24, 0
    %p137 = por %p135, %p136
    %s139 = sadd.s32 %s138, 1
    %p142 = scmp.eq.s32.totalorder %s18, 5
    %p143 = scmp.ne.s32.totalorder %s138, %s140
    %p144 = scmp.eq.s32.totalorder %s18, 0
    %p145 = por %p143, %p144
    %p146 = scmp.ne.s32.totalorder %s138, %s140
    %p147 = scmp.eq.s32.totalorder %s23, 5
    %p148 = por %p146, %p147
    %p149 = scmp.ne.s32.totalorder %s140, %s141
    %p150 = scmp.eq.s32.totalorder %s23, 0
    %p151 = por %p149, %p150
    %p152 = scmp.ne.s32.totalorder %s140, %s141
    %p153 = scmp.eq.s32.totalorder %s24, 5
    %p154 = por %p152, %p153
    %p156 = scmp.ne.s32.totalorder %s141, %s155
    %p157 = scmp.eq.s32.totalorder %s24, 0
    %p158 = por %p156, %p157
    %s160 = sadd.s32 %s159, 1
    %p163 = scmp.eq.s32.totalorder %s18, 5
    %p164 = scmp.ne.s32.totalorder %s159, %s161
    %p165 = scmp.eq.s32.totalorder %s18, 0
    %p166 = por %p164, %p165
    %p167 = scmp.ne.s32.totalorder %s159, %s161
    %p168 = scmp.eq.s32.totalorder %s23, 5
    %p169 = por %p167, %p168
    %p170 = scmp.ne.s32.totalorder %s161, %s162
    %p171 = scmp.eq.s32.totalorder %s23, 0
    %p172 = por %p170, %p171
    %p173 = scmp.ne.s32.totalorder %s161, %s162
    %p174 = scmp.eq.s32.totalorder %s24, 5
    %p175 = por %p173, %p174
    %p177 = scmp.ne.s32.totalorder %s162, %s176
    %p178 = scmp.eq.s32.totalorder %s24, 0
    %p179 = por %p177, %p178
    %s181 = sadd.s32 %s180, 1
    %p184 = scmp.eq.s32.totalorder %s18, 5
    %p185 = scmp.ne.s32.totalorder %s180, %s182
    %p186 = scmp.eq.s32.totalorder %s18, 0
    %p187 = por %p185, %p186
    %p188 = scmp.ne.s32.totalorder %s180, %s182
    %p189 = scmp.eq.s32.totalorder %s23, 5
    %p190 = por %p188, %p189
    %p191 = scmp.ne.s32.totalorder %s182, %s183
    %p192 = scmp.eq.s32.totalorder %s23, 0
    %p193 = por %p191, %p192
    %p194 = scmp.ne.s32.totalorder %s182, %s183
    %p195 = scmp.eq.s32.totalorder %s24, 5
    %p196 = por %p194, %p195
    %p198 = scmp.ne.s32.totalorder %s183, %s197
    %p199 = scmp.eq.s32.totalorder %s24, 0
    %p200 = por %p198, %p199
    %s202 = sadd.s32 %s201, 1
    %p205 = scmp.eq.s32.totalorder %s18, 5
    %p206 = scmp.ne.s32.totalorder %s201, %s203
    %p207 = scmp.eq.s32.totalorder %s18, 0
    %p208 = por %p206, %p207
    %p209 = scmp.ne.s32.totalorder %s201, %s203
    %p210 = scmp.eq.s32.totalorder %s23, 5
    %p211 = por %p209, %p210
    %p212 = scmp.ne.s32.totalorder %s203, %s204
    %p213 = scmp.eq.s32.totalorder %s23, 0
    %p214 = por %p212, %p213
    %p215 = scmp.ne.s32.totalorder %s203, %s204
    %p216 = scmp.eq.s32.totalorder %s24, 5
    %p217 = por %p215, %p216
    %p219 = scmp.ne.s32.totalorder %s204, %s218
    %p220 = scmp.eq.s32.totalorder %s24, 0
    %p221 = por %p219, %p220
    %s223 = sadd.s32 %s222, 1
    %p226 = scmp.eq.s32.totalorder %s18, 5
    %p227 = scmp.ne.s32.totalorder %s222, %s224
    %p228 = scmp.eq.s32.totalorder %s18, 0
    %p229 = por %p227, %p228
    %p230 = scmp.ne.s32.totalorder %s222, %s224
    %p231 = scmp.eq.s32.totalorder %s23, 5
    %p232 = por %p230, %p231
    %p233 = scmp.ne.s32.totalorder %s224, %s225
    %p234 = scmp.eq.s32.totalorder %s23, 0
    %p235 = por %p233, %p234
    %p236 = scmp.ne.s32.totalorder %s224, %s225
    %p237 = scmp.eq.s32.totalorder %s24, 5
    %p238 = por %p236, %p237
    %p240 = scmp.ne.s32.totalorder %s225, %s239
    %p241 = scmp.eq.s32.totalorder %s24, 0
    %p242 = por %p240, %p241
    %s244 = sadd.s32 %s243, 1
    %p247 = scmp.eq.s32.totalorder %s18, 5
    %p248 = scmp.ne.s32.totalorder %s243, %s245
    %p249 = scmp.eq.s32.totalorder %s18, 0
    %p250 = por %p248, %p249
    %p251 = scmp.ne.s32.totalorder %s243, %s245
    %p252 = scmp.eq.s32.totalorder %s23, 5
    %p253 = por %p251, %p252
    %p254 = scmp.ne.s32.totalorder %s245, %s246
    %p255 = scmp.eq.s32.totalorder %s23, 0
    %p256 = por %p254, %p255
    %p257 = scmp.ne.s32.totalorder %s245, %s246
    %p258 = scmp.eq.s32.totalorder %s24, 5
    %p259 = por %p257, %p258
    %p261 = scmp.ne.s32.totalorder %s246, %s260
    %p262 = scmp.eq.s32.totalorder %s24, 0
    %p263 = por %p261, %p262
    %s265 = sadd.s32 %s264, 1
    %p268 = scmp.eq.s32.totalorder %s18, 5
    %p269 = scmp.ne.s32.totalorder %s264, %s266
    %p270 = scmp.eq.s32.totalorder %s18, 0
    %p271 = por %p269, %p270
    %p272 = scmp.ne.s32.totalorder %s264, %s266
    %p273 = scmp.eq.s32.totalorder %s23, 5
    %p274 = por %p272, %p273
    %p275 = scmp.ne.s32.totalorder %s266, %s267
    %p276 = scmp.eq.s32.totalorder %s23, 0
    %p277 = por %p275, %p276
    %p278 = scmp.ne.s32.totalorder %s266, %s267
    %p279 = scmp.eq.s32.totalorder %s24, 5
    %p280 = por %p278, %p279
    %p282 = scmp.ne.s32.totalorder %s267, %s281
    %p283 = scmp.eq.s32.totalorder %s24, 0
    %p284 = por %p282, %p283
    %s286 = sadd.s32 %s285, 1
    %p289 = scmp.eq.s32.totalorder %s18, 5
    %p290 = scmp.ne.s32.totalorder %s285, %s287
    %p291 = scmp.eq.s32.totalorder %s18, 0
    %p292 = por %p290, %p291
    %p293 = scmp.ne.s32.totalorder %s285, %s287
    %p294 = scmp.eq.s32.totalorder %s23, 5
    %p295 = por %p293, %p294
    %p296 = scmp.ne.s32.totalorder %s287, %s288
    %p297 = scmp.eq.s32.totalorder %s23, 0
    %p298 = por %p296, %p297
    %p299 = scmp.ne.s32.totalorder %s287, %s288
    %p300 = scmp.eq.s32.totalorder %s24, 5
    %p301 = por %p299, %p300
    %p303 = scmp.ne.s32.totalorder %s288, %s302
    %p304 = scmp.eq.s32.totalorder %s24, 0
    %p305 = por %p303, %p304
    %s307 = sadd.s32 %s306, 1
    %p310 = scmp.eq.s32.totalorder %s18, 5
    %p311 = scmp.ne.s32.totalorder %s306, %s308
    %p312 = scmp.eq.s32.totalorder %s18, 0
    %p313 = por %p311, %p312
    %p314 = scmp.ne.s32.totalorder %s306, %s308
    %p315 = scmp.eq.s32.totalorder %s23, 5
    %p316 = por %p314, %p315
    %p317 = scmp.ne.s32.totalorder %s308, %s309
    %p318 = scmp.eq.s32.totalorder %s23, 0
    %p319 = por %p317, %p318
    %p320 = scmp.ne.s32.totalorder %s308, %s309
    %p321 = scmp.eq.s32.totalorder %s24, 5
    %p322 = por %p320, %p321
    %p324 = scmp.ne.s32.totalorder %s309, %s323
    %p325 = scmp.eq.s32.totalorder %s24, 0
    %p326 = por %p324, %p325
    %s327 = ssub.s32 %s25, %s37
    %s328 = ssub.s32 %s26, %s33
    %s329 = sor.u32 %s327, %s328
    %p330 = scmp.eq.s32.totalorder %s329, 0
    %s332 = sadd.s32 %s331, 1
    %s333 = scalar_select %p330, %s331, %s332
    %p336 = pneg %p330
    %p337 = scmp.eq.s32.totalorder %s18, 5
    %p338 = por %p336, %p337
    %p339 = scmp.ne.s32.totalorder %s331, %s334
    %p340 = scmp.eq.s32.totalorder %s18, 0
    %p341 = por %p339, %p340
    %p342 = scmp.ne.s32.totalorder %s331, %s334
    %p343 = scmp.eq.s32.totalorder %s23, 5
    %p344 = por %p342, %p343
    %p345 = scmp.ne.s32.totalorder %s334, %s335
    %p346 = scmp.eq.s32.totalorder %s23, 0
    %p347 = por %p345, %p346
    %p348 = scmp.ne.s32.totalorder %s334, %s335
    %p349 = scmp.eq.s32.totalorder %s24, 5
    %p350 = por %p348, %p349
    %p352 = scmp.ne.s32.totalorder %s335, %s351
    %p353 = scmp.eq.s32.totalorder %s24, 0
    %p354 = por %p352, %p353
    %p355 = scmp.le.s32.totalorder 1, %s18
    %p356 = scmp.lt.s32.totalorder %s18, 7
    %p357 = pnand %p355, %p356
    %p358 = pneg %p357
    // Predicated region
    $region9: #{irf3d_block_forward.1} parent=5 // pred_check
      _
    $region10: #{irf3d_block_forward.1} parent=5 // pred_check_branch
      %360 = sbr.rel (%p357) target = $region12
    $region11: #{irf3d_block_forward.1} parent=5 // pred_region
      %s361 = ssub.s32 %s18, 1
      // Predicated region
      $region13: #{irf3d_block_forward.1} parent=11 // pred_check
        %p362 = pneg %p151
      $region14: #{irf3d_block_forward.1} parent=11 // pred_check_branch
        %364 = sbr.rel (%p362) target = $region16
      $region15: #{irf3d_block_forward.1} parent=11 // pred_region
        _
      $region16: #{irf3d_block_forward.1} parent=11 // pred_fallthru
        _
      // Predicated region
      $region17: #{irf3d_block_forward.1} parent=11 // pred_check
        %p365 = pneg %p172
      $region18: #{irf3d_block_forward.1} parent=11 // pred_check_branch
        %367 = sbr.rel (%p365) target = $region20
      $region19: #{irf3d_block_forward.1} parent=11 // pred_region
        _
      $region20: #{irf3d_block_forward.1} parent=11 // pred_fallthru
        _
      // Predicated region
      $region21: #{irf3d_block_forward.1} parent=11 // pred_check
        %p368 = pneg %p193
      $region22: #{irf3d_block_forward.1} parent=11 // pred_check_branch
        %370 = sbr.rel (%p368) target = $region24
      $region23: #{irf3d_block_forward.1} parent=11 // pred_region
        _
      $region24: #{irf3d_block_forward.1} parent=11 // pred_fallthru
        _
      // Predicated region
      $region25: #{irf3d_block_forward.1} parent=11 // pred_check
        %p371 = pneg %p214
      $region26: #{irf3d_block_forward.1} parent=11 // pred_check_branch
        %373 = sbr.rel (%p371) target = $region28
      $region27: #{irf3d_block_forward.1} parent=11 // pred_region
        _
      $region28: #{irf3d_block_forward.1} parent=11 // pred_fallthru
        _
      // Predicated region
      $region29: #{irf3d_block_forward.1} parent=11 // pred_check
        %p374 = pneg %p235
      $region30: #{irf3d_block_forward.1} parent=11 // pred_check_branch
        %376 = sbr.rel (%p374) target = $region32
      $region31: #{irf3d_block_forward.1} parent=11 // pred_region
        _
      $region32: #{irf3d_block_forward.1} parent=11 // pred_fallthru
        _
      // Predicated region
      $region33: #{irf3d_block_forward.1} parent=11 // pred_check
        %p377 = pneg %p256
      $region34: #{irf3d_block_forward.1} parent=11 // pred_check_branch
        %379 = sbr.rel (%p377) target = $region36
      $region35: #{irf3d_block_forward.1} parent=11 // pred_region
        _
      $region36: #{irf3d_block_forward.1} parent=11 // pred_fallthru
        _
      // Predicated region
      $region37: #{irf3d_block_forward.1} parent=11 // pred_check
        %p380 = pneg %p277
      $region38: #{irf3d_block_forward.1} parent=11 // pred_check_branch
        %382 = sbr.rel (%p380) target = $region40
      $region39: #{irf3d_block_forward.1} parent=11 // pred_region
        _
      $region40: #{irf3d_block_forward.1} parent=11 // pred_fallthru
        _
      // Predicated region
      $region41: #{irf3d_block_forward.1} parent=11 // pred_check
        %p383 = pneg %p298
      $region42: #{irf3d_block_forward.1} parent=11 // pred_check_branch
        %385 = sbr.rel (%p383) target = $region44
      $region43: #{irf3d_block_forward.1} parent=11 // pred_region
        _
      $region44: #{irf3d_block_forward.1} parent=11 // pred_fallthru
        _
      // Predicated region
      $region45: #{irf3d_block_forward.1} parent=11 // pred_check
        %p386 = pneg %p319
      $region46: #{irf3d_block_forward.1} parent=11 // pred_check_branch
        %388 = sbr.rel (%p386) target = $region48
      $region47: #{irf3d_block_forward.1} parent=11 // pred_region
        _
      $region48: #{irf3d_block_forward.1} parent=11 // pred_fallthru
        _
    $region12: #{irf3d_block_forward.1} parent=5 // pred_fallthru
      _
    %p389 = scmp.lt.s32.totalorder %s18, 6
    // Predicated region
    $region49: #{irf3d_block_forward.1} parent=5 // pred_check
      %p390 = pneg %p389
    $region50: #{irf3d_block_forward.1} parent=5 // pred_check_branch
      %392 = sbr.rel (%p390) target = $region52
    $region51: #{irf3d_block_forward.1} parent=5 // pred_region
      // Predicated region
      $region53: #{irf3d_block_forward.1} parent=51 // pred_check
        %p393 = pneg %p52
      $region54: #{irf3d_block_forward.1} parent=51 // pred_check_branch
        %395 = sbr.rel (%p393) target = $region56
      $region55: #{irf3d_block_forward.1} parent=51 // pred_region
        %s396 = smul.u32 2, %s26
        %p397 = scmp.lt.s32.totalorder %s25, 1
        %s398 = scalar_select %p397, %s25, 1
        %p399 = scmp.lt.s32.totalorder %s396, 5
        %s400 = scalar_select %p399, %s396, 5
        %s401 = smul.addr %s400, 8
        %s402 = smul.addr %s398, 48
        %s403 = sadd.s32 %s401, %s402
        %s404 = smul.addr %s403, 8
        %s405 = scalar_lea.vmem %s0, %s404
        %s406 = smul.u32 2, %s26
      $region56: #{irf3d_block_forward.1} parent=51 // pred_fallthru
        _
      // Predicated region
      $region57: #{irf3d_block_forward.1} parent=51 // pred_check
        %p407 = pneg %p88
      $region58: #{irf3d_block_forward.1} parent=51 // pred_check_branch
        %409 = sbr.rel (%p407) target = $region60
      $region59: #{irf3d_block_forward.1} parent=51 // pred_region
        %s410 = smul.u32 %s26, 2
        %s411 = ssub.s32 %s410, 1
        %p412 = scmp.gt.s32.totalorder %s411, 0
        %s413 = scalar_select %p412, %s411, 0
        %p414 = scmp.lt.s32.totalorder %s25, 1
        %s415 = scalar_select %p414, %s25, 1
        %p416 = scmp.lt.s32.totalorder %s413, 5
        %s417 = scalar_select %p416, %s413, 5
        %s418 = smul.addr %s417, 8
        %s419 = smul.addr %s415, 48
        %s420 = sadd.s32 %s418, %s419
        %s421 = smul.addr %s420, 8
        %s422 = scalar_lea.vmem %s1, %s421
        %s423 = smul.u32 %s26, 2
        %s424 = ssub.s32 %s423, 1
        %p425 = scmp.gt.s32.totalorder %s424, 0
        %s426 = scalar_select %p425, %s424, 0
      $region60: #{irf3d_block_forward.1} parent=51 // pred_fallthru
        _
      // Predicated region
      $region61: #{irf3d_block_forward.1} parent=51 // pred_check
        %p427 = pneg %p124
      $region62: #{irf3d_block_forward.1} parent=51 // pred_check_branch
        %429 = sbr.rel (%p427) target = $region64
      $region63: #{irf3d_block_forward.1} parent=51 // pred_region
        %s430 = sadd.s32 %s26, 1
        %s431 = smul.u32 %s430, 2
        %p432 = scmp.lt.s32.totalorder %s431, 5
        %s433 = scalar_select %p432, %s431, 5
        %p434 = scmp.lt.s32.totalorder %s25, 1
        %s435 = scalar_select %p434, %s25, 1
        %p436 = scmp.lt.s32.totalorder %s433, 5
        %s437 = scalar_select %p436, %s433, 5
        %s438 = smul.addr %s437, 8
        %s439 = smul.addr %s435, 48
        %s440 = sadd.s32 %s438, %s439
        %s441 = smul.addr %s440, 8
        %s442 = scalar_lea.vmem %s2, %s441
        %s443 = sadd.s32 %s26, 1
        %s444 = smul.u32 %s443, 2
        %p445 = scmp.lt.s32.totalorder %s444, 5
        %s446 = scalar_select %p445, %s444, 5
      $region64: #{irf3d_block_forward.1} parent=51 // pred_fallthru
        _
    $region52: #{irf3d_block_forward.1} parent=5 // pred_fallthru
      _
    %p447 = scmp.le.s32.totalorder 1, %s18
    %p448 = scmp.lt.s32.totalorder %s18, 7
    %p449 = pnand %p447, %p448
    %p450 = pneg %p449
    // Predicated region
    $region65: #{irf3d_block_forward.1} parent=5 // pred_check
      _
    $region66: #{irf3d_block_forward.1} parent=5 // pred_check_branch
      %452 = sbr.rel (%p449) target = $region68
    $region67: #{irf3d_block_forward.1} parent=5 // pred_region
      %s453 = ssub.s32 %s18, 1
      %s454 = smul.u32 2, %s28
      %p455 = scmp.lt.s32.totalorder %s27, 1
      %s456 = scalar_select %p455, %s27, 1
      %p457 = scmp.lt.s32.totalorder %s454, 5
      %s458 = scalar_select %p457, %s454, 5
      %s459 = smul.addr %s458, 8
      %s460 = smul.addr %s456, 48
      %s461 = sadd.s32 %s459, %s460
      %s462 = smul.addr %s461, 8
      %s463 = scalar_lea.vmem %s0, %s462
      %p464 = pneg %p58
      %p465 = pneg %p55
      %s466 = smul.u32 %s28, 2
      %s467 = ssub.s32 %s466, 1
      %p468 = scmp.gt.s32.totalorder %s467, 0
      %s469 = scalar_select %p468, %s467, 0
      %p470 = scmp.lt.s32.totalorder %s27, 1
      %s471 = scalar_select %p470, %s27, 1
      %p472 = scmp.lt.s32.totalorder %s469, 5
      %s473 = scalar_select %p472, %s469, 5
      %s474 = smul.addr %s473, 8
      %s475 = smul.addr %s471, 48
      %s476 = sadd.s32 %s474, %s475
      %s477 = smul.addr %s476, 8
      %s478 = scalar_lea.vmem %s1, %s477
      %p479 = pneg %p94
      %p480 = pneg %p91
      %s481 = sadd.s32 %s28, 1
      %s482 = smul.u32 %s481, 2
      %p483 = scmp.lt.s32.totalorder %s482, 5
      %s484 = scalar_select %p483, %s482, 5
      %p485 = scmp.lt.s32.totalorder %s27, 1
      %s486 = scalar_select %p485, %s27, 1
      %p487 = scmp.lt.s32.totalorder %s484, 5
      %s488 = scalar_select %p487, %s484, 5
      %s489 = smul.addr %s488, 8
      %s490 = smul.addr %s486, 48
      %s491 = sadd.s32 %s489, %s490
      %s492 = smul.addr %s491, 8
      %s493 = scalar_lea.vmem %s2, %s492
      %p494 = pneg %p130
      %p495 = pneg %p127
      %p496 = pneg %p151
      %p497 = pneg %p148
      %p498 = pneg %p172
      %p499 = pneg %p169
      %p500 = pneg %p193
      %p501 = pneg %p190
      %p502 = pneg %p214
      %p503 = pneg %p211
      %p504 = pneg %p235
      %p505 = pneg %p232
      %p506 = pneg %p256
      %p507 = pneg %p253
      %p508 = pneg %p277
      %p509 = pneg %p274
      %p510 = pneg %p298
      %p511 = pneg %p295
      %p512 = pneg %p319
      %p513 = pneg %p316
      %p514 = pneg %p347
      %p515 = pneg %p344
      %s516 = smul.u32 2, %s28
      %p517 = scmp.lt.s32.totalorder %s27, 1
      %s518 = scalar_select %p517, %s27, 1
      %p519 = scmp.lt.s32.totalorder %s516, 5
      %s520 = scalar_select %p519, %s516, 5
      %s521 = smul.addr %s520, 8
      %s522 = smul.addr %s518, 48
      %s523 = sadd.s32 %s521, %s522
      %s524 = smul.addr %s523, 8
      %s525 = scalar_lea.vmem %s12, %s524
      %s526 = smul.u32 2, %s28
      %p527 = scmp.lt.s32.totalorder %s27, 1
      %s528 = scalar_select %p527, %s27, 1
      %p529 = scmp.lt.s32.totalorder %s526, 5
      %s530 = scalar_select %p529, %s526, 5
      %s531 = smul.addr %s530, 8
      %s532 = smul.addr %s528, 48
      %s533 = sadd.s32 %s531, %s532
      %s534 = smul.addr %s533, 8
      %s535 = scalar_lea.vmem %s0, %s534
      %s536 = smul.u32 2, %s28
      %s537 = smul.u32 %s28, 2
      %s538 = ssub.s32 %s537, 1
      %p539 = scmp.gt.s32.totalorder %s538, 0
      %s540 = scalar_select %p539, %s538, 0
      %p541 = scmp.lt.s32.totalorder %s27, 1
      %s542 = scalar_select %p541, %s27, 1
      %p543 = scmp.lt.s32.totalorder %s540, 5
      %s544 = scalar_select %p543, %s540, 5
      %s545 = smul.addr %s544, 8
      %s546 = smul.addr %s542, 48
      %s547 = sadd.s32 %s545, %s546
      %s548 = smul.addr %s547, 8
      %s549 = scalar_lea.vmem %s1, %s548
      %s550 = smul.u32 %s28, 2
      %s551 = ssub.s32 %s550, 1
      %p552 = scmp.gt.s32.totalorder %s551, 0
      %s553 = scalar_select %p552, %s551, 0
      %s554 = sadd.s32 %s28, 1
      %s555 = smul.u32 %s554, 2
      %p556 = scmp.lt.s32.totalorder %s555, 5
      %s557 = scalar_select %p556, %s555, 5
      %p558 = scmp.lt.s32.totalorder %s27, 1
      %s559 = scalar_select %p558, %s27, 1
      %p560 = scmp.lt.s32.totalorder %s557, 5
      %s561 = scalar_select %p560, %s557, 5
      %s562 = smul.addr %s561, 8
      %s563 = smul.addr %s559, 48
      %s564 = sadd.s32 %s562, %s563
      %s565 = smul.addr %s564, 8
      %s566 = scalar_lea.vmem %s2, %s565
      %s567 = sadd.s32 %s28, 1
      %s568 = smul.u32 %s567, 2
      %p569 = scmp.lt.s32.totalorder %s568, 5
      %s570 = scalar_select %p569, %s568, 5
      %s571 = smul.u32 2, %s28
      %p572 = scmp.lt.s32.totalorder %s27, 1
      %s573 = scalar_select %p572, %s27, 1
      %p574 = scmp.lt.s32.totalorder %s571, 5
      %s575 = scalar_select %p574, %s571, 5
      %s576 = smul.addr %s575, 8
      %s577 = smul.addr %s573, 48
      %s578 = sadd.s32 %s576, %s577
      %s579 = smul.addr %s578, 8
      %s580 = scalar_lea.vmem %s12, %s579
      %s581 = smul.u32 2, %s28
      %vm582 = vcmask 195584
      %583 = vst.msk [vmem:[#allocation2] sm:$0xff] %vm582, 0.0
      %vm584 = vcmask 189440
      %585 = vst.msk [vmem:[#allocation2 + $0x8] sm:$0x3] %vm584, 0.0
      %586 = vst.msk [vmem:[#allocation2 + $0x10] sm:$0xff] %vm582, 0.0
      %587 = vst.msk [vmem:[#allocation2 + $0x18] sm:$0x3] %vm584, 0.0
      %588 = vst.msk [vmem:[#allocation2 + $0x20] sm:$0xff] %vm582, 0.0
      %589 = vst.msk [vmem:[#allocation2 + $0x28] sm:$0x3] %vm584, 0.0
      %590 = vst.msk [vmem:[#allocation2 + $0x30] sm:$0xff] %vm582, 0.0
      %591 = vst.msk [vmem:[#allocation2 + $0x38] sm:$0x3] %vm584, 0.0
      %592 = vst.msk [vmem:[#allocation2 + $0x40] sm:$0xff] %vm582, 0.0
      %593 = vst.msk [vmem:[#allocation2 + $0x48] sm:$0x3] %vm584, 0.0
      %594 = vst.msk [vmem:[#allocation2 + $0x50] sm:$0xff] %vm582, 0.0
      %595 = vst.msk [vmem:[#allocation2 + $0x58] sm:$0x3] %vm584, 0.0
      %596 = vst.msk [vmem:[#allocation2 + $0x60] sm:$0xff] %vm582, 0.0
      %597 = vst.msk [vmem:[#allocation2 + $0x68] sm:$0x3] %vm584, 0.0
      %598 = vst.msk [vmem:[#allocation2 + $0x70] sm:$0xff] %vm582, 0.0
      %599 = vst.msk [vmem:[#allocation2 + $0x78] sm:$0x3] %vm584, 0.0
      %600 = vst.msk [vmem:[#allocation2 + $0x80] sm:$0xff] %vm582, 0.0
      %601 = vst.msk [vmem:[#allocation2 + $0x88] sm:$0x3] %vm584, 0.0
      %602 = vst.msk [vmem:[#allocation2 + $0x90] sm:$0xff] %vm582, 0.0
      %603 = vst.msk [vmem:[#allocation2 + $0x98] sm:$0x3] %vm584, 0.0
      %604 = vst.msk [vmem:[#allocation2 + $0xa0] sm:$0xff] %vm582, 0.0
      %605 = vst.msk [vmem:[#allocation2 + $0xa8] sm:$0x3] %vm584, 0.0
      %606 = vst.msk [vmem:[#allocation2 + $0xb0] sm:$0xff] %vm582, 0.0
      %607 = vst.msk [vmem:[#allocation2 + $0xb8] sm:$0x3] %vm584, 0.0
      %608 = vst.msk [vmem:[#allocation2 + $0xc0] sm:$0xff] %vm582, 0.0
      %609 = vst.msk [vmem:[#allocation2 + $0xc8] sm:$0x3] %vm584, 0.0
      %610 = vst.msk [vmem:[#allocation2 + $0xd0] sm:$0xff] %vm582, 0.0
      %611 = vst.msk [vmem:[#allocation2 + $0xd8] sm:$0x3] %vm584, 0.0
      %612 = vst.msk [vmem:[#allocation2 + $0xe0] sm:$0xff] %vm582, 0.0
      %613 = vst.msk [vmem:[#allocation2 + $0xe8] sm:$0x3] %vm584, 0.0
      %614 = vst.msk [vmem:[#allocation2 + $0xf0] sm:$0xff] %vm582, 0.0
      %615 = vst.msk [vmem:[#allocation2 + $0xf8] sm:$0x3] %vm584, 0.0
      %616 = vst.msk [vmem:[#allocation2 + $0x100] sm:$0xff] %vm582, 0.0
      %617 = vst.msk [vmem:[#allocation2 + $0x108] sm:$0x3] %vm584, 0.0
      %618 = vst.msk [vmem:[#allocation2 + $0x110] sm:$0xff] %vm582, 0.0
      %619 = vst.msk [vmem:[#allocation2 + $0x118] sm:$0x3] %vm584, 0.0
      %620 = vst.msk [vmem:[#allocation2 + $0x120] sm:$0xff] %vm582, 0.0
      %621 = vst.msk [vmem:[#allocation2 + $0x128] sm:$0x3] %vm584, 0.0
      %622 = vst.msk [vmem:[#allocation2 + $0x130] sm:$0xff] %vm582, 0.0
      %623 = vst.msk [vmem:[#allocation2 + $0x138] sm:$0x3] %vm584, 0.0
      %624 = vst.msk [vmem:[#allocation2 + $0x140] sm:$0xff] %vm582, 0.0
      %625 = vst.msk [vmem:[#allocation2 + $0x148] sm:$0x3] %vm584, 0.0
      %626 = vst.msk [vmem:[#allocation2 + $0x150] sm:$0xff] %vm582, 0.0
      %627 = vst.msk [vmem:[#allocation2 + $0x158] sm:$0x3] %vm584, 0.0
      %628 = vst.msk [vmem:[#allocation2 + $0x160] sm:$0xff] %vm582, 0.0
      %629 = vst.msk [vmem:[#allocation2 + $0x168] sm:$0x3] %vm584, 0.0
      %630 = vst.msk [vmem:[#allocation2 + $0x170] sm:$0xff] %vm582, 0.0
      %631 = vst.msk [vmem:[#allocation2 + $0x178] sm:$0x3] %vm584, 0.0
      %632 = vst.msk [vmem:[#allocation2 + $0x180] sm:$0xff] %vm582, 0.0
      %633 = vst.msk [vmem:[#allocation2 + $0x188] sm:$0x3] %vm584, 0.0
      %634 = vst.msk [vmem:[#allocation2 + $0x190] sm:$0xff] %vm582, 0.0
      %635 = vst.msk [vmem:[#allocation2 + $0x198] sm:$0x3] %vm584, 0.0
      %636 = vst.msk [vmem:[#allocation2 + $0x1a0] sm:$0xff] %vm582, 0.0
      %637 = vst.msk [vmem:[#allocation2 + $0x1a8] sm:$0x3] %vm584, 0.0
      %638 = vst.msk [vmem:[#allocation2 + $0x1b0] sm:$0xff] %vm582, 0.0
      %639 = vst.msk [vmem:[#allocation2 + $0x1b8] sm:$0x3] %vm584, 0.0
      %640 = vst.msk [vmem:[#allocation2 + $0x1c0] sm:$0xff] %vm582, 0.0
      %641 = vst.msk [vmem:[#allocation2 + $0x1c8] sm:$0x3] %vm584, 0.0
      %642 = vst.msk [vmem:[#allocation2 + $0x1d0] sm:$0xff] %vm582, 0.0
      %643 = vst.msk [vmem:[#allocation2 + $0x1d8] sm:$0x3] %vm584, 0.0
      %644 = vst.msk [vmem:[#allocation2 + $0x1e0] sm:$0xff] %vm582, 0.0
      %645 = vst.msk [vmem:[#allocation2 + $0x1e8] sm:$0x3] %vm584, 0.0
      %646 = vst.msk [vmem:[#allocation2 + $0x1f0] sm:$0xff] %vm582, 0.0
      %647 = vst.msk [vmem:[#allocation2 + $0x1f8] sm:$0x3] %vm584, 0.0
      %648 = vst.msk [vmem:[#allocation2 + $0x200] sm:$0xff] %vm582, 0.0
      %649 = vst.msk [vmem:[#allocation2 + $0x208] sm:$0x3] %vm584, 0.0
      %650 = vst.msk [vmem:[#allocation2 + $0x210] sm:$0xff] %vm582, 0.0
      %651 = vst.msk [vmem:[#allocation2 + $0x218] sm:$0x3] %vm584, 0.0
      %652 = vst.msk [vmem:[#allocation2 + $0x220] sm:$0xff] %vm582, 0.0
      %653 = vst.msk [vmem:[#allocation2 + $0x228] sm:$0x3] %vm584, 0.0
      %654 = vst.msk [vmem:[#allocation2 + $0x230] sm:$0xff] %vm582, 0.0
      %655 = vst.msk [vmem:[#allocation2 + $0x238] sm:$0x3] %vm584, 0.0
      %656 = vst.msk [vmem:[#allocation2 + $0x240] sm:$0xff] %vm582, 0.0
      %657 = vst.msk [vmem:[#allocation2 + $0x248] sm:$0x3] %vm584, 0.0
      %658 = vst.msk [vmem:[#allocation2 + $0x250] sm:$0xff] %vm582, 0.0
      %659 = vst.msk [vmem:[#allocation2 + $0x258] sm:$0x3] %vm584, 0.0
      %660 = vst.msk [vmem:[#allocation2 + $0x260] sm:$0xff] %vm582, 0.0
      %661 = vst.msk [vmem:[#allocation2 + $0x268] sm:$0x3] %vm584, 0.0
      %662 = vst.msk [vmem:[#allocation2 + $0x270] sm:$0xff] %vm582, 0.0
      %663 = vst.msk [vmem:[#allocation2 + $0x278] sm:$0x3] %vm584, 0.0
      %v664 = vld [vmem:[%s535] sm:$0xff]
      %v665 = vld [vmem:[%s535 + $0x8] sm:$0xff]
      %v666 = vld [vmem:[%s535 + $0x10] sm:$0xff]
      %v667 = vld [vmem:[%s535 + $0x18] sm:$0xff]
      %v668 = vld [vmem:[%s535 + $0x20] sm:$0xff]
      %v669 = vld [vmem:[%s535 + $0x28] sm:$0xff]
      %v670 = vld [vmem:[%s535 + $0x30] sm:$0xff]
      %v671 = vld [vmem:[%s535 + $0x38] sm:$0xff]
      %v672 = vld [vmem:[%s3] sm:$0x1]
      %674 = vset.pattern.permute.xlu0 0
      %675 = vperm.xlu0 %674, %v664
      %v676 = vpop.permute.xlu0 %675
      %679 = vset.pattern.permute.xlu0 0
      %680 = vperm.xlu0 %679, %v665
      %v681 = vpop.permute.xlu0 %680
      %684 = vset.pattern.permute.xlu0 0
      %685 = vperm.xlu0 %684, %v666
      %v686 = vpop.permute.xlu0 %685
      %689 = vset.pattern.permute.xlu0 0
      %690 = vperm.xlu0 %689, %v667
      %v691 = vpop.permute.xlu0 %690
      %694 = vset.pattern.permute.xlu0 0
      %695 = vperm.xlu0 %694, %v668
      %v696 = vpop.permute.xlu0 %695
      %699 = vset.pattern.permute.xlu0 0
      %700 = vperm.xlu0 %699, %v669
      %v701 = vpop.permute.xlu0 %700
      %704 = vset.pattern.permute.xlu0 0
      %705 = vperm.xlu0 %704, %v670
      %v706 = vpop.permute.xlu0 %705
      %709 = vset.pattern.permute.xlu0 0
      %710 = vperm.xlu0 %709, %v671
      %v711 = vpop.permute.xlu0 %710
      %v713 = vlaneseq
      %v714 = vshrl.u32 %v713, 7
      %v715 = vsub.s32 0, %v714
      %v716 = vrot.slane %v672, %v715
      %v717 = vmul.f32 %v676, %v716
      %v718 = vmul.f32 %v681, %v716
      %v719 = vmul.f32 %v686, %v716
      %v720 = vmul.f32 %v691, %v716
      %v721 = vmul.f32 %v696, %v716
      %v722 = vmul.f32 %v701, %v716
      %v723 = vmul.f32 %v706, %v716
      %v724 = vmul.f32 %v711, %v716
      %v725 = vadd.f32 %v717, 0.0
      %v726 = vadd.f32 %v718, 0.0
      %v727 = vadd.f32 %v719, 0.0
      %v728 = vadd.f32 %v720, 0.0
      %v729 = vadd.f32 %v721, 0.0
      %v730 = vadd.f32 %v722, 0.0
      %v731 = vadd.f32 %v723, 0.0
      %v732 = vadd.f32 %v724, 0.0
      %v733 = vld [vmem:[%s3 + $0x1] sm:$0x1]
      %734 = vset.pattern.permute.xlu0 1
      %735 = vperm.xlu0 %734, %v664
      %v736 = vpop.permute.xlu0 %735
      %738 = vset.pattern.permute.xlu0 1
      %739 = vperm.xlu0 %738, %v665
      %v740 = vpop.permute.xlu0 %739
      %742 = vset.pattern.permute.xlu0 1
      %743 = vperm.xlu0 %742, %v666
      %v744 = vpop.permute.xlu0 %743
      %746 = vset.pattern.permute.xlu0 1
      %747 = vperm.xlu0 %746, %v667
      %v748 = vpop.permute.xlu0 %747
      %750 = vset.pattern.permute.xlu0 1
      %751 = vperm.xlu0 %750, %v668
      %v752 = vpop.permute.xlu0 %751
      %754 = vset.pattern.permute.xlu0 1
      %755 = vperm.xlu0 %754, %v669
      %v756 = vpop.permute.xlu0 %755
      %758 = vset.pattern.permute.xlu0 1
      %759 = vperm.xlu0 %758, %v670
      %v760 = vpop.permute.xlu0 %759
      %762 = vset.pattern.permute.xlu0 1
      %763 = vperm.xlu0 %762, %v671
      %v764 = vpop.permute.xlu0 %763
      %v766 = vlaneseq
      %v767 = vshrl.u32 %v766, 7
      %v768 = vsub.s32 0, %v767
      %v769 = vrot.slane %v733, %v768
      %v770 = vmul.f32 %v736, %v769
      %v771 = vmul.f32 %v740, %v769
      %v772 = vmul.f32 %v744, %v769
      %v773 = vmul.f32 %v748, %v769
      %v774 = vmul.f32 %v752, %v769
      %v775 = vmul.f32 %v756, %v769
      %v776 = vmul.f32 %v760, %v769
      %v777 = vmul.f32 %v764, %v769
      %v778 = vadd.f32 %v725, %v770
      %v779 = vadd.f32 %v726, %v771
      %v780 = vadd.f32 %v727, %v772
      %v781 = vadd.f32 %v728, %v773
      %v782 = vadd.f32 %v729, %v774
      %v783 = vadd.f32 %v730, %v775
      %v784 = vadd.f32 %v731, %v776
      %v785 = vadd.f32 %v732, %v777
      %v786 = vld [vmem:[%s3 + $0x2] sm:$0x1]
      %787 = vset.pattern.permute.xlu0 2
      %788 = vperm.xlu0 %787, %v664
      %v789 = vpop.permute.xlu0 %788
      %791 = vset.pattern.permute.xlu0 2
      %792 = vperm.xlu0 %791, %v665
      %v793 = vpop.permute.xlu0 %792
      %795 = vset.pattern.permute.xlu0 2
      %796 = vperm.xlu0 %795, %v666
      %v797 = vpop.permute.xlu0 %796
      %799 = vset.pattern.permute.xlu0 2
      %800 = vperm.xlu0 %799, %v667
      %v801 = vpop.permute.xlu0 %800
      %803 = vset.pattern.permute.xlu0 2
      %804 = vperm.xlu0 %803, %v668
      %v805 = vpop.permute.xlu0 %804
      %807 = vset.pattern.permute.xlu0 2
      %808 = vperm.xlu0 %807, %v669
      %v809 = vpop.permute.xlu0 %808
      %811 = vset.pattern.permute.xlu0 2
      %812 = vperm.xlu0 %811, %v670
      %v813 = vpop.permute.xlu0 %812
      %815 = vset.pattern.permute.xlu0 2
      %816 = vperm.xlu0 %815, %v671
      %v817 = vpop.permute.xlu0 %816
      %v819 = vlaneseq
      %v820 = vshrl.u32 %v819, 7
      %v821 = vsub.s32 0, %v820
      %v822 = vrot.slane %v786, %v821
      %v823 = vmul.f32 %v789, %v822
      %v824 = vmul.f32 %v793, %v822
      %v825 = vmul.f32 %v797, %v822
      %v826 = vmul.f32 %v801, %v822
      %v827 = vmul.f32 %v805, %v822
      %v828 = vmul.f32 %v809, %v822
      %v829 = vmul.f32 %v813, %v822
      %v830 = vmul.f32 %v817, %v822
      %v831 = vadd.f32 %v778, %v823
      %v832 = vadd.f32 %v779, %v824
      %v833 = vadd.f32 %v780, %v825
      %v834 = vadd.f32 %v781, %v826
      %v835 = vadd.f32 %v782, %v827
      %v836 = vadd.f32 %v783, %v828
      %v837 = vadd.f32 %v784, %v829
      %v838 = vadd.f32 %v785, %v830
      %v839 = vld [vmem:[%s3 + $0x3] sm:$0x1]
      %840 = vset.pattern.permute.xlu0 3
      %841 = vperm.xlu0 %840, %v664
      %v842 = vpop.permute.xlu0 %841
      %844 = vset.pattern.permute.xlu0 3
      %845 = vperm.xlu0 %844, %v665
      %v846 = vpop.permute.xlu0 %845
      %848 = vset.pattern.permute.xlu0 3
      %849 = vperm.xlu0 %848, %v666
      %v850 = vpop.permute.xlu0 %849
      %852 = vset.pattern.permute.xlu0 3
      %853 = vperm.xlu0 %852, %v667
      %v854 = vpop.permute.xlu0 %853
      %856 = vset.pattern.permute.xlu0 3
      %857 = vperm.xlu0 %856, %v668
      %v858 = vpop.permute.xlu0 %857
      %860 = vset.pattern.permute.xlu0 3
      %861 = vperm.xlu0 %860, %v669
      %v862 = vpop.permute.xlu0 %861
      %864 = vset.pattern.permute.xlu0 3
      %865 = vperm.xlu0 %864, %v670
      %v866 = vpop.permute.xlu0 %865
      %868 = vset.pattern.permute.xlu0 3
      %869 = vperm.xlu0 %868, %v671
      %v870 = vpop.permute.xlu0 %869
      %v872 = vlaneseq
      %v873 = vshrl.u32 %v872, 7
      %v874 = vsub.s32 0, %v873
      %v875 = vrot.slane %v839, %v874
      %v876 = vmul.f32 %v842, %v875
      %v877 = vmul.f32 %v846, %v875
      %v878 = vmul.f32 %v850, %v875
      %v879 = vmul.f32 %v854, %v875
      %v880 = vmul.f32 %v858, %v875
      %v881 = vmul.f32 %v862, %v875
      %v882 = vmul.f32 %v866, %v875
      %v883 = vmul.f32 %v870, %v875
      %v884 = vadd.f32 %v831, %v876
      %v885 = vadd.f32 %v832, %v877
      %v886 = vadd.f32 %v833, %v878
      %v887 = vadd.f32 %v834, %v879
      %v888 = vadd.f32 %v835, %v880
      %v889 = vadd.f32 %v836, %v881
      %v890 = vadd.f32 %v837, %v882
      %v891 = vadd.f32 %v838, %v883
      %v892 = vld [vmem:[%s4] sm:$0x1]
      %v894 = vlaneseq
      %v895 = vshrl.u32 %v894, 7
      %v896 = vsub.s32 0, %v895
      %v897 = vrot.slane %v892, %v896
      %v899 = vmul.f32 %v884, %v897
      %v900 = vmul.f32 %v885, %v897
      %v901 = vmul.f32 %v886, %v897
      %v902 = vmul.f32 %v887, %v897
      %v903 = vmul.f32 %v888, %v897
      %v904 = vmul.f32 %v889, %v897
      %v905 = vmul.f32 %v890, %v897
      %v906 = vmul.f32 %v891, %v897
      %v907 = vld [vmem:[%s5] sm:$0x1]
      %v909 = vlaneseq
      %v910 = vshrl.u32 %v909, 7
      %v911 = vsub.s32 0, %v910
      %v912 = vrot.slane %v907, %v911
      %v914 = vadd.f32 %v899, %v912
      %v915 = vadd.f32 %v900, %v912
      %v916 = vadd.f32 %v901, %v912
      %v917 = vadd.f32 %v902, %v912
      %v918 = vadd.f32 %v903, %v912
      %v919 = vadd.f32 %v904, %v912
      %v920 = vadd.f32 %v905, %v912
      %v921 = vadd.f32 %v906, %v912
      %v922 = vmax.f32 %v914, 0.0
      %v923 = vmax.f32 %v915, 0.0
      %v924 = vmax.f32 %v916, 0.0
      %v925 = vmax.f32 %v917, 0.0
      %v926 = vmax.f32 %v918, 0.0
      %v927 = vmax.f32 %v919, 0.0
      %v928 = vmax.f32 %v920, 0.0
      %v929 = vmax.f32 %v921, 0.0
      %s930 = scalar_lea.vmem [#allocation2], 176
      %931 = vst.msk [vmem:[%s930 + $0x1] sm:$0xff] %vm582, %v922
      %932 = vst.msk [vmem:[%s930 + $0x11] sm:$0xff] %vm582, %v923
      %933 = vst.msk [vmem:[%s930 + $0x21] sm:$0xff] %vm582, %v924
      %934 = vst.msk [vmem:[%s930 + $0x31] sm:$0xff] %vm582, %v925
      %935 = vst.msk [vmem:[%s930 + $0x41] sm:$0xff] %vm582, %v926
      %936 = vst.msk [vmem:[%s930 + $0x51] sm:$0xff] %vm582, %v927
      %937 = vst.msk [vmem:[%s930 + $0x61] sm:$0xff] %vm582, %v928
      %938 = vst.msk [vmem:[%s930 + $0x71] sm:$0xff] %vm582, %v929
      %s939 = scalar_lea.vmem %s535, 64
      %v940 = vld [vmem:[%s939] sm:$0xff]
      %v941 = vld [vmem:[%s939 + $0x8] sm:$0xff]
      %v942 = vld [vmem:[%s939 + $0x10] sm:$0xff]
      %v943 = vld [vmem:[%s939 + $0x18] sm:$0xff]
      %v944 = vld [vmem:[%s939 + $0x20] sm:$0xff]
      %v945 = vld [vmem:[%s939 + $0x28] sm:$0xff]
      %v946 = vld [vmem:[%s939 + $0x30] sm:$0xff]
      %v947 = vld [vmem:[%s939 + $0x38] sm:$0xff]
      %v948 = vld [vmem:[%s3] sm:$0x1]
      %950 = vset.pattern.permute.xlu0 0
      %951 = vperm.xlu0 %950, %v940
      %v952 = vpop.permute.xlu0 %951
      %955 = vset.pattern.permute.xlu0 0
      %956 = vperm.xlu0 %955, %v941
      %v957 = vpop.permute.xlu0 %956
      %960 = vset.pattern.permute.xlu0 0
      %961 = vperm.xlu0 %960, %v942
      %v962 = vpop.permute.xlu0 %961
      %965 = vset.pattern.permute.xlu0 0
      %966 = vperm.xlu0 %965, %v943
      %v967 = vpop.permute.xlu0 %966
      %970 = vset.pattern.permute.xlu0 0
      %971 = vperm.xlu0 %970, %v944
      %v972 = vpop.permute.xlu0 %971
      %975 = vset.pattern.permute.xlu0 0
      %976 = vperm.xlu0 %975, %v945
      %v977 = vpop.permute.xlu0 %976
      %980 = vset.pattern.permute.xlu0 0
      %981 = vperm.xlu0 %980, %v946
      %v982 = vpop.permute.xlu0 %981
      %985 = vset.pattern.permute.xlu0 0
      %986 = vperm.xlu0 %985, %v947
      %v987 = vpop.permute.xlu0 %986
      %v989 = vlaneseq
      %v990 = vshrl.u32 %v989, 7
      %v991 = vsub.s32 0, %v990
      %v992 = vrot.slane %v948, %v991
      %v993 = vmul.f32 %v952, %v992
      %v994 = vmul.f32 %v957, %v992
      %v995 = vmul.f32 %v962, %v992
      %v996 = vmul.f32 %v967, %v992
      %v997 = vmul.f32 %v972, %v992
      %v998 = vmul.f32 %v977, %v992
      %v999 = vmul.f32 %v982, %v992
      %v1000 = vmul.f32 %v987, %v992
      %v1001 = vadd.f32 %v993, 0.0
      %v1002 = vadd.f32 %v994, 0.0
      %v1003 = vadd.f32 %v995, 0.0
      %v1004 = vadd.f32 %v996, 0.0
      %v1005 = vadd.f32 %v997, 0.0
      %v1006 = vadd.f32 %v998, 0.0
      %v1007 = vadd.f32 %v999, 0.0
      %v1008 = vadd.f32 %v1000, 0.0
      %v1009 = vld [vmem:[%s3 + $0x1] sm:$0x1]
      %1010 = vset.pattern.permute.xlu0 1
      %1011 = vperm.xlu0 %1010, %v940
      %v1012 = vpop.permute.xlu0 %1011
      %1014 = vset.pattern.permute.xlu0 1
      %1015 = vperm.xlu0 %1014, %v941
      %v1016 = vpop.permute.xlu0 %1015
      %1018 = vset.pattern.permute.xlu0 1
      %1019 = vperm.xlu0 %1018, %v942
      %v1020 = vpop.permute.xlu0 %1019
      %1022 = vset.pattern.permute.xlu0 1
      %1023 = vperm.xlu0 %1022, %v943
      %v1024 = vpop.permute.xlu0 %1023
      %1026 = vset.pattern.permute.xlu0 1
      %1027 = vperm.xlu0 %1026, %v944
      %v1028 = vpop.permute.xlu0 %1027
      %1030 = vset.pattern.permute.xlu0 1
      %1031 = vperm.xlu0 %1030, %v945
      %v1032 = vpop.permute.xlu0 %1031
      %1034 = vset.pattern.permute.xlu0 1
      %1035 = vperm.xlu0 %1034, %v946
      %v1036 = vpop.permute.xlu0 %1035
      %1038 = vset.pattern.permute.xlu0 1
      %1039 = vperm.xlu0 %1038, %v947
      %v1040 = vpop.permute.xlu0 %1039
      %v1042 = vlaneseq
      %v1043 = vshrl.u32 %v1042, 7
      %v1044 = vsub.s32 0, %v1043
      %v1045 = vrot.slane %v1009, %v1044
      %v1046 = vmul.f32 %v1012, %v1045
      %v1047 = vmul.f32 %v1016, %v1045
      %v1048 = vmul.f32 %v1020, %v1045
      %v1049 = vmul.f32 %v1024, %v1045
      %v1050 = vmul.f32 %v1028, %v1045
      %v1051 = vmul.f32 %v1032, %v1045
      %v1052 = vmul.f32 %v1036, %v1045
      %v1053 = vmul.f32 %v1040, %v1045
      %v1054 = vadd.f32 %v1001, %v1046
      %v1055 = vadd.f32 %v1002, %v1047
      %v1056 = vadd.f32 %v1003, %v1048
      %v1057 = vadd.f32 %v1004, %v1049
      %v1058 = vadd.f32 %v1005, %v1050
      %v1059 = vadd.f32 %v1006, %v1051
      %v1060 = vadd.f32 %v1007, %v1052
      %v1061 = vadd.f32 %v1008, %v1053
      %v1062 = vld [vmem:[%s3 + $0x2] sm:$0x1]
      %1063 = vset.pattern.permute.xlu0 2
      %1064 = vperm.xlu0 %1063, %v940
      %v1065 = vpop.permute.xlu0 %1064
      %1067 = vset.pattern.permute.xlu0 2
      %1068 = vperm.xlu0 %1067, %v941
      %v1069 = vpop.permute.xlu0 %1068
      %1071 = vset.pattern.permute.xlu0 2
      %1072 = vperm.xlu0 %1071, %v942
      %v1073 = vpop.permute.xlu0 %1072
      %1075 = vset.pattern.permute.xlu0 2
      %1076 = vperm.xlu0 %1075, %v943
      %v1077 = vpop.permute.xlu0 %1076
      %1079 = vset.pattern.permute.xlu0 2
      %1080 = vperm.xlu0 %1079, %v944
      %v1081 = vpop.permute.xlu0 %1080
      %1083 = vset.pattern.permute.xlu0 2
      %1084 = vperm.xlu0 %1083, %v945
      %v1085 = vpop.permute.xlu0 %1084
      %1087 = vset.pattern.permute.xlu0 2
      %1088 = vperm.xlu0 %1087, %v946
      %v1089 = vpop.permute.xlu0 %1088
      %1091 = vset.pattern.permute.xlu0 2
      %1092 = vperm.xlu0 %1091, %v947
      %v1093 = vpop.permute.xlu0 %1092
      %v1095 = vlaneseq
      %v1096 = vshrl.u32 %v1095, 7
      %v1097 = vsub.s32 0, %v1096
      %v1098 = vrot.slane %v1062, %v1097
      %v1099 = vmul.f32 %v1065, %v1098
      %v1100 = vmul.f32 %v1069, %v1098
      %v1101 = vmul.f32 %v1073, %v1098
      %v1102 = vmul.f32 %v1077, %v1098
      %v1103 = vmul.f32 %v1081, %v1098
      %v1104 = vmul.f32 %v1085, %v1098
      %v1105 = vmul.f32 %v1089, %v1098
      %v1106 = vmul.f32 %v1093, %v1098
      %v1107 = vadd.f32 %v1054, %v1099
      %v1108 = vadd.f32 %v1055, %v1100
      %v1109 = vadd.f32 %v1056, %v1101
      %v1110 = vadd.f32 %v1057, %v1102
      %v1111 = vadd.f32 %v1058, %v1103
      %v1112 = vadd.f32 %v1059, %v1104
      %v1113 = vadd.f32 %v1060, %v1105
      %v1114 = vadd.f32 %v1061, %v1106
      %v1115 = vld [vmem:[%s3 + $0x3] sm:$0x1]
      %1116 = vset.pattern.permute.xlu0 3
      %1117 = vperm.xlu0 %1116, %v940
      %v1118 = vpop.permute.xlu0 %1117
      %1120 = vset.pattern.permute.xlu0 3
      %1121 = vperm.xlu0 %1120, %v941
      %v1122 = vpop.permute.xlu0 %1121
      %1124 = vset.pattern.permute.xlu0 3
      %1125 = vperm.xlu0 %1124, %v942
      %v1126 = vpop.permute.xlu0 %1125
      %1128 = vset.pattern.permute.xlu0 3
      %1129 = vperm.xlu0 %1128, %v943
      %v1130 = vpop.permute.xlu0 %1129
      %1132 = vset.pattern.permute.xlu0 3
      %1133 = vperm.xlu0 %1132, %v944
      %v1134 = vpop.permute.xlu0 %1133
      %1136 = vset.pattern.permute.xlu0 3
      %1137 = vperm.xlu0 %1136, %v945
      %v1138 = vpop.permute.xlu0 %1137
      %1140 = vset.pattern.permute.xlu0 3
      %1141 = vperm.xlu0 %1140, %v946
      %v1142 = vpop.permute.xlu0 %1141
      %1144 = vset.pattern.permute.xlu0 3
      %1145 = vperm.xlu0 %1144, %v947
      %v1146 = vpop.permute.xlu0 %1145
      %v1148 = vlaneseq
      %v1149 = vshrl.u32 %v1148, 7
      %v1150 = vsub.s32 0, %v1149
      %v1151 = vrot.slane %v1115, %v1150
      %v1152 = vmul.f32 %v1118, %v1151
      %v1153 = vmul.f32 %v1122, %v1151
      %v1154 = vmul.f32 %v1126, %v1151
      %v1155 = vmul.f32 %v1130, %v1151
      %v1156 = vmul.f32 %v1134, %v1151
      %v1157 = vmul.f32 %v1138, %v1151
      %v1158 = vmul.f32 %v1142, %v1151
      %v1159 = vmul.f32 %v1146, %v1151
      %v1160 = vadd.f32 %v1107, %v1152
      %v1161 = vadd.f32 %v1108, %v1153
      %v1162 = vadd.f32 %v1109, %v1154
      %v1163 = vadd.f32 %v1110, %v1155
      %v1164 = vadd.f32 %v1111, %v1156
      %v1165 = vadd.f32 %v1112, %v1157
      %v1166 = vadd.f32 %v1113, %v1158
      %v1167 = vadd.f32 %v1114, %v1159
      %v1168 = vld [vmem:[%s4] sm:$0x1]
      %v1170 = vlaneseq
      %v1171 = vshrl.u32 %v1170, 7
      %v1172 = vsub.s32 0, %v1171
      %v1173 = vrot.slane %v1168, %v1172
      %v1175 = vmul.f32 %v1160, %v1173
      %v1176 = vmul.f32 %v1161, %v1173
      %v1177 = vmul.f32 %v1162, %v1173
      %v1178 = vmul.f32 %v1163, %v1173
      %v1179 = vmul.f32 %v1164, %v1173
      %v1180 = vmul.f32 %v1165, %v1173
      %v1181 = vmul.f32 %v1166, %v1173
      %v1182 = vmul.f32 %v1167, %v1173
      %v1183 = vld [vmem:[%s5] sm:$0x1]
      %v1185 = vlaneseq
      %v1186 = vshrl.u32 %v1185, 7
      %v1187 = vsub.s32 0, %v1186
      %v1188 = vrot.slane %v1183, %v1187
      %v1190 = vadd.f32 %v1175, %v1188
      %v1191 = vadd.f32 %v1176, %v1188
      %v1192 = vadd.f32 %v1177, %v1188
      %v1193 = vadd.f32 %v1178, %v1188
      %v1194 = vadd.f32 %v1179, %v1188
      %v1195 = vadd.f32 %v1180, %v1188
      %v1196 = vadd.f32 %v1181, %v1188
      %v1197 = vadd.f32 %v1182, %v1188
      %v1198 = vmax.f32 %v1190, 0.0
      %v1199 = vmax.f32 %v1191, 0.0
      %v1200 = vmax.f32 %v1192, 0.0
      %v1201 = vmax.f32 %v1193, 0.0
      %v1202 = vmax.f32 %v1194, 0.0
      %v1203 = vmax.f32 %v1195, 0.0
      %v1204 = vmax.f32 %v1196, 0.0
      %v1205 = vmax.f32 %v1197, 0.0
      %s1206 = scalar_lea.vmem [#allocation2], 336
      %1207 = vst.msk [vmem:[%s1206 + $0x1] sm:$0xff] %vm582, %v1198
      %1208 = vst.msk [vmem:[%s1206 + $0x11] sm:$0xff] %vm582, %v1199
      %1209 = vst.msk [vmem:[%s1206 + $0x21] sm:$0xff] %vm582, %v1200
      %1210 = vst.msk [vmem:[%s1206 + $0x31] sm:$0xff] %vm582, %v1201
      %1211 = vst.msk [vmem:[%s1206 + $0x41] sm:$0xff] %vm582, %v1202
      %1212 = vst.msk [vmem:[%s1206 + $0x51] sm:$0xff] %vm582, %v1203
      %1213 = vst.msk [vmem:[%s1206 + $0x61] sm:$0xff] %vm582, %v1204
      %1214 = vst.msk [vmem:[%s1206 + $0x71] sm:$0xff] %vm582, %v1205
      %p1215 = scmp.gt.s32.totalorder %s28, 0
      // Predicated region
      $region69: #{irf3d_block_forward.1} parent=67 // pred_check
        %p1216 = pneg %p1215
      $region70: #{irf3d_block_forward.1} parent=67 // pred_check_branch
        %1218 = sbr.rel (%p1216) target = $region72
      $region71: #{irf3d_block_forward.1} parent=67 // pred_region
        %v1219 = vld [vmem:[%s549] sm:$0xff]
        %v1220 = vld [vmem:[%s549 + $0x8] sm:$0xff]
        %v1221 = vld [vmem:[%s549 + $0x10] sm:$0xff]
        %v1222 = vld [vmem:[%s549 + $0x18] sm:$0xff]
        %v1223 = vld [vmem:[%s549 + $0x20] sm:$0xff]
        %v1224 = vld [vmem:[%s549 + $0x28] sm:$0xff]
        %v1225 = vld [vmem:[%s549 + $0x30] sm:$0xff]
        %v1226 = vld [vmem:[%s549 + $0x38] sm:$0xff]
        %v1227 = vld [vmem:[%s3] sm:$0x1]
        %1229 = vset.pattern.permute.xlu0 0
        %1230 = vperm.xlu0 %1229, %v1219
        %v1231 = vpop.permute.xlu0 %1230
        %1234 = vset.pattern.permute.xlu0 0
        %1235 = vperm.xlu0 %1234, %v1220
        %v1236 = vpop.permute.xlu0 %1235
        %1239 = vset.pattern.permute.xlu0 0
        %1240 = vperm.xlu0 %1239, %v1221
        %v1241 = vpop.permute.xlu0 %1240
        %1244 = vset.pattern.permute.xlu0 0
        %1245 = vperm.xlu0 %1244, %v1222
        %v1246 = vpop.permute.xlu0 %1245
        %1249 = vset.pattern.permute.xlu0 0
        %1250 = vperm.xlu0 %1249, %v1223
        %v1251 = vpop.permute.xlu0 %1250
        %1254 = vset.pattern.permute.xlu0 0
        %1255 = vperm.xlu0 %1254, %v1224
        %v1256 = vpop.permute.xlu0 %1255
        %1259 = vset.pattern.permute.xlu0 0
        %1260 = vperm.xlu0 %1259, %v1225
        %v1261 = vpop.permute.xlu0 %1260
        %1264 = vset.pattern.permute.xlu0 0
        %1265 = vperm.xlu0 %1264, %v1226
        %v1266 = vpop.permute.xlu0 %1265
        %v1268 = vlaneseq
        %v1269 = vshrl.u32 %v1268, 7
        %v1270 = vsub.s32 0, %v1269
        %v1271 = vrot.slane %v1227, %v1270
        %v1272 = vmul.f32 %v1231, %v1271
        %v1273 = vmul.f32 %v1236, %v1271
        %v1274 = vmul.f32 %v1241, %v1271
        %v1275 = vmul.f32 %v1246, %v1271
        %v1276 = vmul.f32 %v1251, %v1271
        %v1277 = vmul.f32 %v1256, %v1271
        %v1278 = vmul.f32 %v1261, %v1271
        %v1279 = vmul.f32 %v1266, %v1271
        %v1280 = vadd.f32 %v1272, 0.0
        %v1281 = vadd.f32 %v1273, 0.0
        %v1282 = vadd.f32 %v1274, 0.0
        %v1283 = vadd.f32 %v1275, 0.0
        %v1284 = vadd.f32 %v1276, 0.0
        %v1285 = vadd.f32 %v1277, 0.0
        %v1286 = vadd.f32 %v1278, 0.0
        %v1287 = vadd.f32 %v1279, 0.0
        %v1288 = vld [vmem:[%s3 + $0x1] sm:$0x1]
        %1289 = vset.pattern.permute.xlu0 1
        %1290 = vperm.xlu0 %1289, %v1219
        %v1291 = vpop.permute.xlu0 %1290
        %1293 = vset.pattern.permute.xlu0 1
        %1294 = vperm.xlu0 %1293, %v1220
        %v1295 = vpop.permute.xlu0 %1294
        %1297 = vset.pattern.permute.xlu0 1
        %1298 = vperm.xlu0 %1297, %v1221
        %v1299 = vpop.permute.xlu0 %1298
        %1301 = vset.pattern.permute.xlu0 1
        %1302 = vperm.xlu0 %1301, %v1222
        %v1303 = vpop.permute.xlu0 %1302
        %1305 = vset.pattern.permute.xlu0 1
        %1306 = vperm.xlu0 %1305, %v1223
        %v1307 = vpop.permute.xlu0 %1306
        %1309 = vset.pattern.permute.xlu0 1
        %1310 = vperm.xlu0 %1309, %v1224
        %v1311 = vpop.permute.xlu0 %1310
        %1313 = vset.pattern.permute.xlu0 1
        %1314 = vperm.xlu0 %1313, %v1225
        %v1315 = vpop.permute.xlu0 %1314
        %1317 = vset.pattern.permute.xlu0 1
        %1318 = vperm.xlu0 %1317, %v1226
        %v1319 = vpop.permute.xlu0 %1318
        %v1321 = vlaneseq
        %v1322 = vshrl.u32 %v1321, 7
        %v1323 = vsub.s32 0, %v1322
        %v1324 = vrot.slane %v1288, %v1323
        %v1325 = vmul.f32 %v1291, %v1324
        %v1326 = vmul.f32 %v1295, %v1324
        %v1327 = vmul.f32 %v1299, %v1324
        %v1328 = vmul.f32 %v1303, %v1324
        %v1329 = vmul.f32 %v1307, %v1324
        %v1330 = vmul.f32 %v1311, %v1324
        %v1331 = vmul.f32 %v1315, %v1324
        %v1332 = vmul.f32 %v1319, %v1324
        %v1333 = vadd.f32 %v1280, %v1325
        %v1334 = vadd.f32 %v1281, %v1326
        %v1335 = vadd.f32 %v1282, %v1327
        %v1336 = vadd.f32 %v1283, %v1328
        %v1337 = vadd.f32 %v1284, %v1329
        %v1338 = vadd.f32 %v1285, %v1330
        %v1339 = vadd.f32 %v1286, %v1331
        %v1340 = vadd.f32 %v1287, %v1332
        %v1341 = vld [vmem:[%s3 + $0x2] sm:$0x1]
        %1342 = vset.pattern.permute.xlu0 2
        %1343 = vperm.xlu0 %1342, %v1219
        %v1344 = vpop.permute.xlu0 %1343
        %1346 = vset.pattern.permute.xlu0 2
        %1347 = vperm.xlu0 %1346, %v1220
        %v1348 = vpop.permute.xlu0 %1347
        %1350 = vset.pattern.permute.xlu0 2
        %1351 = vperm.xlu0 %1350, %v1221
        %v1352 = vpop.permute.xlu0 %1351
        %1354 = vset.pattern.permute.xlu0 2
        %1355 = vperm.xlu0 %1354, %v1222
        %v1356 = vpop.permute.xlu0 %1355
        %1358 = vset.pattern.permute.xlu0 2
        %1359 = vperm.xlu0 %1358, %v1223
        %v1360 = vpop.permute.xlu0 %1359
        %1362 = vset.pattern.permute.xlu0 2
        %1363 = vperm.xlu0 %1362, %v1224
        %v1364 = vpop.permute.xlu0 %1363
        %1366 = vset.pattern.permute.xlu0 2
        %1367 = vperm.xlu0 %1366, %v1225
        %v1368 = vpop.permute.xlu0 %1367
        %1370 = vset.pattern.permute.xlu0 2
        %1371 = vperm.xlu0 %1370, %v1226
        %v1372 = vpop.permute.xlu0 %1371
        %v1374 = vlaneseq
        %v1375 = vshrl.u32 %v1374, 7
        %v1376 = vsub.s32 0, %v1375
        %v1377 = vrot.slane %v1341, %v1376
        %v1378 = vmul.f32 %v1344, %v1377
        %v1379 = vmul.f32 %v1348, %v1377
        %v1380 = vmul.f32 %v1352, %v1377
        %v1381 = vmul.f32 %v1356, %v1377
        %v1382 = vmul.f32 %v1360, %v1377
        %v1383 = vmul.f32 %v1364, %v1377
        %v1384 = vmul.f32 %v1368, %v1377
        %v1385 = vmul.f32 %v1372, %v1377
        %v1386 = vadd.f32 %v1333, %v1378
        %v1387 = vadd.f32 %v1334, %v1379
        %v1388 = vadd.f32 %v1335, %v1380
        %v1389 = vadd.f32 %v1336, %v1381
        %v1390 = vadd.f32 %v1337, %v1382
        %v1391 = vadd.f32 %v1338, %v1383
        %v1392 = vadd.f32 %v1339, %v1384
        %v1393 = vadd.f32 %v1340, %v1385
        %v1394 = vld [vmem:[%s3 + $0x3] sm:$0x1]
        %1395 = vset.pattern.permute.xlu0 3
        %1396 = vperm.xlu0 %1395, %v1219
        %v1397 = vpop.permute.xlu0 %1396
        %1399 = vset.pattern.permute.xlu0 3
        %1400 = vperm.xlu0 %1399, %v1220
        %v1401 = vpop.permute.xlu0 %1400
        %1403 = vset.pattern.permute.xlu0 3
        %1404 = vperm.xlu0 %1403, %v1221
        %v1405 = vpop.permute.xlu0 %1404
        %1407 = vset.pattern.permute.xlu0 3
        %1408 = vperm.xlu0 %1407, %v1222
        %v1409 = vpop.permute.xlu0 %1408
        %1411 = vset.pattern.permute.xlu0 3
        %1412 = vperm.xlu0 %1411, %v1223
        %v1413 = vpop.permute.xlu0 %1412
        %1415 = vset.pattern.permute.xlu0 3
        %1416 = vperm.xlu0 %1415, %v1224
        %v1417 = vpop.permute.xlu0 %1416
        %1419 = vset.pattern.permute.xlu0 3
        %1420 = vperm.xlu0 %1419, %v1225
        %v1421 = vpop.permute.xlu0 %1420
        %1423 = vset.pattern.permute.xlu0 3
        %1424 = vperm.xlu0 %1423, %v1226
        %v1425 = vpop.permute.xlu0 %1424
        %v1427 = vlaneseq
        %v1428 = vshrl.u32 %v1427, 7
        %v1429 = vsub.s32 0, %v1428
        %v1430 = vrot.slane %v1394, %v1429
        %v1431 = vmul.f32 %v1397, %v1430
        %v1432 = vmul.f32 %v1401, %v1430
        %v1433 = vmul.f32 %v1405, %v1430
        %v1434 = vmul.f32 %v1409, %v1430
        %v1435 = vmul.f32 %v1413, %v1430
        %v1436 = vmul.f32 %v1417, %v1430
        %v1437 = vmul.f32 %v1421, %v1430
        %v1438 = vmul.f32 %v1425, %v1430
        %v1439 = vadd.f32 %v1386, %v1431
        %v1440 = vadd.f32 %v1387, %v1432
        %v1441 = vadd.f32 %v1388, %v1433
        %v1442 = vadd.f32 %v1389, %v1434
        %v1443 = vadd.f32 %v1390, %v1435
        %v1444 = vadd.f32 %v1391, %v1436
        %v1445 = vadd.f32 %v1392, %v1437
        %v1446 = vadd.f32 %v1393, %v1438
        %v1447 = vld [vmem:[%s4] sm:$0x1]
        %v1449 = vlaneseq
        %v1450 = vshrl.u32 %v1449, 7
        %v1451 = vsub.s32 0, %v1450
        %v1452 = vrot.slane %v1447, %v1451
        %v1454 = vmul.f32 %v1439, %v1452
        %v1455 = vmul.f32 %v1440, %v1452
        %v1456 = vmul.f32 %v1441, %v1452
        %v1457 = vmul.f32 %v1442, %v1452
        %v1458 = vmul.f32 %v1443, %v1452
        %v1459 = vmul.f32 %v1444, %v1452
        %v1460 = vmul.f32 %v1445, %v1452
        %v1461 = vmul.f32 %v1446, %v1452
        %v1462 = vld [vmem:[%s5] sm:$0x1]
        %v1464 = vlaneseq
        %v1465 = vshrl.u32 %v1464, 7
        %v1466 = vsub.s32 0, %v1465
        %v1467 = vrot.slane %v1462, %v1466
        %v1469 = vadd.f32 %v1454, %v1467
        %v1470 = vadd.f32 %v1455, %v1467
        %v1471 = vadd.f32 %v1456, %v1467
        %v1472 = vadd.f32 %v1457, %v1467
        %v1473 = vadd.f32 %v1458, %v1467
        %v1474 = vadd.f32 %v1459, %v1467
        %v1475 = vadd.f32 %v1460, %v1467
        %v1476 = vadd.f32 %v1461, %v1467
        %v1477 = vmax.f32 %v1469, 0.0
        %v1478 = vmax.f32 %v1470, 0.0
        %v1479 = vmax.f32 %v1471, 0.0
        %v1480 = vmax.f32 %v1472, 0.0
        %v1481 = vmax.f32 %v1473, 0.0
        %v1482 = vmax.f32 %v1474, 0.0
        %v1483 = vmax.f32 %v1475, 0.0
        %v1484 = vmax.f32 %v1476, 0.0
        %s1485 = scalar_lea.vmem [#allocation2], 16
        %1486 = vst.msk [vmem:[%s1485 + $0x1] sm:$0xff] %vm582, %v1477
        %1487 = vst.msk [vmem:[%s1485 + $0x11] sm:$0xff] %vm582, %v1478
        %1488 = vst.msk [vmem:[%s1485 + $0x21] sm:$0xff] %vm582, %v1479
        %1489 = vst.msk [vmem:[%s1485 + $0x31] sm:$0xff] %vm582, %v1480
        %1490 = vst.msk [vmem:[%s1485 + $0x41] sm:$0xff] %vm582, %v1481
        %1491 = vst.msk [vmem:[%s1485 + $0x51] sm:$0xff] %vm582, %v1482
        %1492 = vst.msk [vmem:[%s1485 + $0x61] sm:$0xff] %vm582, %v1483
        %1493 = vst.msk [vmem:[%s1485 + $0x71] sm:$0xff] %vm582, %v1484
      $region72: #{irf3d_block_forward.1} parent=67 // pred_fallthru
        _
      %p1494 = scmp.lt.s32.totalorder %s28, 2
      // Predicated region
      $region73: #{irf3d_block_forward.1} parent=67 // pred_check
        %p1495 = pneg %p1494
      $region74: #{irf3d_block_forward.1} parent=67 // pred_check_branch
        %1497 = sbr.rel (%p1495) target = $region76
      $region75: #{irf3d_block_forward.1} parent=67 // pred_region
        %v1498 = vld [vmem:[%s566] sm:$0xff]
        %v1499 = vld [vmem:[%s566 + $0x8] sm:$0xff]
        %v1500 = vld [vmem:[%s566 + $0x10] sm:$0xff]
        %v1501 = vld [vmem:[%s566 + $0x18] sm:$0xff]
        %v1502 = vld [vmem:[%s566 + $0x20] sm:$0xff]
        %v1503 = vld [vmem:[%s566 + $0x28] sm:$0xff]
        %v1504 = vld [vmem:[%s566 + $0x30] sm:$0xff]
        %v1505 = vld [vmem:[%s566 + $0x38] sm:$0xff]
        %v1506 = vld [vmem:[%s3] sm:$0x1]
        %1508 = vset.pattern.permute.xlu0 0
        %1509 = vperm.xlu0 %1508, %v1498
        %v1510 = vpop.permute.xlu0 %1509
        %1513 = vset.pattern.permute.xlu0 0
        %1514 = vperm.xlu0 %1513, %v1499
        %v1515 = vpop.permute.xlu0 %1514
        %1518 = vset.pattern.permute.xlu0 0
        %1519 = vperm.xlu0 %1518, %v1500
        %v1520 = vpop.permute.xlu0 %1519
        %1523 = vset.pattern.permute.xlu0 0
        %1524 = vperm.xlu0 %1523, %v1501
        %v1525 = vpop.permute.xlu0 %1524
        %1528 = vset.pattern.permute.xlu0 0
        %1529 = vperm.xlu0 %1528, %v1502
        %v1530 = vpop.permute.xlu0 %1529
        %1533 = vset.pattern.permute.xlu0 0
        %1534 = vperm.xlu0 %1533, %v1503
        %v1535 = vpop.permute.xlu0 %1534
        %1538 = vset.pattern.permute.xlu0 0
        %1539 = vperm.xlu0 %1538, %v1504
        %v1540 = vpop.permute.xlu0 %1539
        %1543 = vset.pattern.permute.xlu0 0
        %1544 = vperm.xlu0 %1543, %v1505
        %v1545 = vpop.permute.xlu0 %1544
        %v1547 = vlaneseq
        %v1548 = vshrl.u32 %v1547, 7
        %v1549 = vsub.s32 0, %v1548
        %v1550 = vrot.slane %v1506, %v1549
        %v1551 = vmul.f32 %v1510, %v1550
        %v1552 = vmul.f32 %v1515, %v1550
        %v1553 = vmul.f32 %v1520, %v1550
        %v1554 = vmul.f32 %v1525, %v1550
        %v1555 = vmul.f32 %v1530, %v1550
        %v1556 = vmul.f32 %v1535, %v1550
        %v1557 = vmul.f32 %v1540, %v1550
        %v1558 = vmul.f32 %v1545, %v1550
        %v1559 = vadd.f32 %v1551, 0.0
        %v1560 = vadd.f32 %v1552, 0.0
        %v1561 = vadd.f32 %v1553, 0.0
        %v1562 = vadd.f32 %v1554, 0.0
        %v1563 = vadd.f32 %v1555, 0.0
        %v1564 = vadd.f32 %v1556, 0.0
        %v1565 = vadd.f32 %v1557, 0.0
        %v1566 = vadd.f32 %v1558, 0.0
        %v1567 = vld [vmem:[%s3 + $0x1] sm:$0x1]
        %1568 = vset.pattern.permute.xlu0 1
        %1569 = vperm.xlu0 %1568, %v1498
        %v1570 = vpop.permute.xlu0 %1569
        %1572 = vset.pattern.permute.xlu0 1
        %1573 = vperm.xlu0 %1572, %v1499
        %v1574 = vpop.permute.xlu0 %1573
        %1576 = vset.pattern.permute.xlu0 1
        %1577 = vperm.xlu0 %1576, %v1500
        %v1578 = vpop.permute.xlu0 %1577
        %1580 = vset.pattern.permute.xlu0 1
        %1581 = vperm.xlu0 %1580, %v1501
        %v1582 = vpop.permute.xlu0 %1581
        %1584 = vset.pattern.permute.xlu0 1
        %1585 = vperm.xlu0 %1584, %v1502
        %v1586 = vpop.permute.xlu0 %1585
        %1588 = vset.pattern.permute.xlu0 1
        %1589 = vperm.xlu0 %1588, %v1503
        %v1590 = vpop.permute.xlu0 %1589
        %1592 = vset.pattern.permute.xlu0 1
        %1593 = vperm.xlu0 %1592, %v1504
        %v1594 = vpop.permute.xlu0 %1593
        %1596 = vset.pattern.permute.xlu0 1
        %1597 = vperm.xlu0 %1596, %v1505
        %v1598 = vpop.permute.xlu0 %1597
        %v1600 = vlaneseq
        %v1601 = vshrl.u32 %v1600, 7
        %v1602 = vsub.s32 0, %v1601
        %v1603 = vrot.slane %v1567, %v1602
        %v1604 = vmul.f32 %v1570, %v1603
        %v1605 = vmul.f32 %v1574, %v1603
        %v1606 = vmul.f32 %v1578, %v1603
        %v1607 = vmul.f32 %v1582, %v1603
        %v1608 = vmul.f32 %v1586, %v1603
        %v1609 = vmul.f32 %v1590, %v1603
        %v1610 = vmul.f32 %v1594, %v1603
        %v1611 = vmul.f32 %v1598, %v1603
        %v1612 = vadd.f32 %v1559, %v1604
        %v1613 = vadd.f32 %v1560, %v1605
        %v1614 = vadd.f32 %v1561, %v1606
        %v1615 = vadd.f32 %v1562, %v1607
        %v1616 = vadd.f32 %v1563, %v1608
        %v1617 = vadd.f32 %v1564, %v1609
        %v1618 = vadd.f32 %v1565, %v1610
        %v1619 = vadd.f32 %v1566, %v1611
        %v1620 = vld [vmem:[%s3 + $0x2] sm:$0x1]
        %1621 = vset.pattern.permute.xlu0 2
        %1622 = vperm.xlu0 %1621, %v1498
        %v1623 = vpop.permute.xlu0 %1622
        %1625 = vset.pattern.permute.xlu0 2
        %1626 = vperm.xlu0 %1625, %v1499
        %v1627 = vpop.permute.xlu0 %1626
        %1629 = vset.pattern.permute.xlu0 2
        %1630 = vperm.xlu0 %1629, %v1500
        %v1631 = vpop.permute.xlu0 %1630
        %1633 = vset.pattern.permute.xlu0 2
        %1634 = vperm.xlu0 %1633, %v1501
        %v1635 = vpop.permute.xlu0 %1634
        %1637 = vset.pattern.permute.xlu0 2
        %1638 = vperm.xlu0 %1637, %v1502
        %v1639 = vpop.permute.xlu0 %1638
        %1641 = vset.pattern.permute.xlu0 2
        %1642 = vperm.xlu0 %1641, %v1503
        %v1643 = vpop.permute.xlu0 %1642
        %1645 = vset.pattern.permute.xlu0 2
        %1646 = vperm.xlu0 %1645, %v1504
        %v1647 = vpop.permute.xlu0 %1646
        %1649 = vset.pattern.permute.xlu0 2
        %1650 = vperm.xlu0 %1649, %v1505
        %v1651 = vpop.permute.xlu0 %1650
        %v1653 = vlaneseq
        %v1654 = vshrl.u32 %v1653, 7
        %v1655 = vsub.s32 0, %v1654
        %v1656 = vrot.slane %v1620, %v1655
        %v1657 = vmul.f32 %v1623, %v1656
        %v1658 = vmul.f32 %v1627, %v1656
        %v1659 = vmul.f32 %v1631, %v1656
        %v1660 = vmul.f32 %v1635, %v1656
        %v1661 = vmul.f32 %v1639, %v1656
        %v1662 = vmul.f32 %v1643, %v1656
        %v1663 = vmul.f32 %v1647, %v1656
        %v1664 = vmul.f32 %v1651, %v1656
        %v1665 = vadd.f32 %v1612, %v1657
        %v1666 = vadd.f32 %v1613, %v1658
        %v1667 = vadd.f32 %v1614, %v1659
        %v1668 = vadd.f32 %v1615, %v1660
        %v1669 = vadd.f32 %v1616, %v1661
        %v1670 = vadd.f32 %v1617, %v1662
        %v1671 = vadd.f32 %v1618, %v1663
        %v1672 = vadd.f32 %v1619, %v1664
        %v1673 = vld [vmem:[%s3 + $0x3] sm:$0x1]
        %1674 = vset.pattern.permute.xlu0 3
        %1675 = vperm.xlu0 %1674, %v1498
        %v1676 = vpop.permute.xlu0 %1675
        %1678 = vset.pattern.permute.xlu0 3
        %1679 = vperm.xlu0 %1678, %v1499
        %v1680 = vpop.permute.xlu0 %1679
        %1682 = vset.pattern.permute.xlu0 3
        %1683 = vperm.xlu0 %1682, %v1500
        %v1684 = vpop.permute.xlu0 %1683
        %1686 = vset.pattern.permute.xlu0 3
        %1687 = vperm.xlu0 %1686, %v1501
        %v1688 = vpop.permute.xlu0 %1687
        %1690 = vset.pattern.permute.xlu0 3
        %1691 = vperm.xlu0 %1690, %v1502
        %v1692 = vpop.permute.xlu0 %1691
        %1694 = vset.pattern.permute.xlu0 3
        %1695 = vperm.xlu0 %1694, %v1503
        %v1696 = vpop.permute.xlu0 %1695
        %1698 = vset.pattern.permute.xlu0 3
        %1699 = vperm.xlu0 %1698, %v1504
        %v1700 = vpop.permute.xlu0 %1699
        %1702 = vset.pattern.permute.xlu0 3
        %1703 = vperm.xlu0 %1702, %v1505
        %v1704 = vpop.permute.xlu0 %1703
        %v1706 = vlaneseq
        %v1707 = vshrl.u32 %v1706, 7
        %v1708 = vsub.s32 0, %v1707
        %v1709 = vrot.slane %v1673, %v1708
        %v1710 = vmul.f32 %v1676, %v1709
        %v1711 = vmul.f32 %v1680, %v1709
        %v1712 = vmul.f32 %v1684, %v1709
        %v1713 = vmul.f32 %v1688, %v1709
        %v1714 = vmul.f32 %v1692, %v1709
        %v1715 = vmul.f32 %v1696, %v1709
        %v1716 = vmul.f32 %v1700, %v1709
        %v1717 = vmul.f32 %v1704, %v1709
        %v1718 = vadd.f32 %v1665, %v1710
        %v1719 = vadd.f32 %v1666, %v1711
        %v1720 = vadd.f32 %v1667, %v1712
        %v1721 = vadd.f32 %v1668, %v1713
        %v1722 = vadd.f32 %v1669, %v1714
        %v1723 = vadd.f32 %v1670, %v1715
        %v1724 = vadd.f32 %v1671, %v1716
        %v1725 = vadd.f32 %v1672, %v1717
        %v1726 = vld [vmem:[%s4] sm:$0x1]
        %v1728 = vlaneseq
        %v1729 = vshrl.u32 %v1728, 7
        %v1730 = vsub.s32 0, %v1729
        %v1731 = vrot.slane %v1726, %v1730
        %v1733 = vmul.f32 %v1718, %v1731
        %v1734 = vmul.f32 %v1719, %v1731
        %v1735 = vmul.f32 %v1720, %v1731
        %v1736 = vmul.f32 %v1721, %v1731
        %v1737 = vmul.f32 %v1722, %v1731
        %v1738 = vmul.f32 %v1723, %v1731
        %v1739 = vmul.f32 %v1724, %v1731
        %v1740 = vmul.f32 %v1725, %v1731
        %v1741 = vld [vmem:[%s5] sm:$0x1]
        %v1743 = vlaneseq
        %v1744 = vshrl.u32 %v1743, 7
        %v1745 = vsub.s32 0, %v1744
        %v1746 = vrot.slane %v1741, %v1745
        %v1748 = vadd.f32 %v1733, %v1746
        %v1749 = vadd.f32 %v1734, %v1746
        %v1750 = vadd.f32 %v1735, %v1746
        %v1751 = vadd.f32 %v1736, %v1746
        %v1752 = vadd.f32 %v1737, %v1746
        %v1753 = vadd.f32 %v1738, %v1746
        %v1754 = vadd.f32 %v1739, %v1746
        %v1755 = vadd.f32 %v1740, %v1746
        %v1756 = vmax.f32 %v1748, 0.0
        %v1757 = vmax.f32 %v1749, 0.0
        %v1758 = vmax.f32 %v1750, 0.0
        %v1759 = vmax.f32 %v1751, 0.0
        %v1760 = vmax.f32 %v1752, 0.0
        %v1761 = vmax.f32 %v1753, 0.0
        %v1762 = vmax.f32 %v1754, 0.0
        %v1763 = vmax.f32 %v1755, 0.0
        %s1764 = scalar_lea.vmem [#allocation2], 496
        %1765 = vst.msk [vmem:[%s1764 + $0x1] sm:$0xff] %vm582, %v1756
        %1766 = vst.msk [vmem:[%s1764 + $0x11] sm:$0xff] %vm582, %v1757
        %1767 = vst.msk [vmem:[%s1764 + $0x21] sm:$0xff] %vm582, %v1758
        %1768 = vst.msk [vmem:[%s1764 + $0x31] sm:$0xff] %vm582, %v1759
        %1769 = vst.msk [vmem:[%s1764 + $0x41] sm:$0xff] %vm582, %v1760
        %1770 = vst.msk [vmem:[%s1764 + $0x51] sm:$0xff] %vm582, %v1761
        %1771 = vst.msk [vmem:[%s1764 + $0x61] sm:$0xff] %vm582, %v1762
        %1772 = vst.msk [vmem:[%s1764 + $0x71] sm:$0xff] %vm582, %v1763
      $region76: #{irf3d_block_forward.1} parent=67 // pred_fallthru
        _
      loop: start=0, step=1, limit=2
      $region77: #{irf3d_block_forward.1} parent=67 // loop_pre_header
        _
      $region78: #{irf3d_block_forward.1} parent=67 // loop_header
        %s1774 = sphi 0, %s1778
        %p1775 = scmp.ge.s32.totalorder %s1774, 2
      $region79: #{irf3d_block_forward.1} parent=67 // loop_header_branch
        %1777 = sbr.rel (%p1775) target = $region83
      $region80: #{irf3d_block_forward.1} parent=67 // loop_body
        %s1779 = smul.u32 %s1774, 160
        %s1780 = scalar_lea.vmem [#allocation2], %s1779
        %v1781 = vld [vmem:[%s1780] sm:$0xff]
        %v1782 = vld [vmem:[%s1780 + $0x10] sm:$0xff]
        %v1783 = vld [vmem:[%s1780 + $0x20] sm:$0xff]
        %v1784 = vld [vmem:[%s1780 + $0x30] sm:$0xff]
        %v1785 = vld [vmem:[%s1780 + $0x40] sm:$0xff]
        %v1786 = vld [vmem:[%s1780 + $0x50] sm:$0xff]
        %v1787 = vld [vmem:[%s1780 + $0x60] sm:$0xff]
        %v1788 = vld [vmem:[%s1780 + $0x70] sm:$0xff]
        %v1789 = vld [vmem:[%s6] sm:$0x1]
        %v1790 = vlaneseq
        %v1791 = vshrl.u32 %v1790, 7
        %v1792 = vsub.s32 0, %v1791
        %v1793 = vrot.slane %v1789, %v1792
        %v1794 = vmul.f32 %v1781, %v1793
        %v1795 = vmul.f32 %v1782, %v1793
        %v1796 = vmul.f32 %v1783, %v1793
        %v1797 = vmul.f32 %v1784, %v1793
        %v1798 = vmul.f32 %v1785, %v1793
        %v1799 = vmul.f32 %v1786, %v1793
        %v1800 = vmul.f32 %v1787, %v1793
        %v1801 = vmul.f32 %v1788, %v1793
        %v1802 = vadd.f32 %v1794, 0.0
        %v1803 = vadd.f32 %v1795, 0.0
        %v1804 = vadd.f32 %v1796, 0.0
        %v1805 = vadd.f32 %v1797, 0.0
        %v1806 = vadd.f32 %v1798, 0.0
        %v1807 = vadd.f32 %v1799, 0.0
        %v1808 = vadd.f32 %v1800, 0.0
        %v1809 = vadd.f32 %v1801, 0.0
        %v1810 = vld [vmem:[%s1780 + $0x1] sm:$0xff]
        %v1811 = vld [vmem:[%s1780 + $0x11] sm:$0xff]
        %v1812 = vld [vmem:[%s1780 + $0x21] sm:$0xff]
        %v1813 = vld [vmem:[%s1780 + $0x31] sm:$0xff]
        %v1814 = vld [vmem:[%s1780 + $0x41] sm:$0xff]
        %v1815 = vld [vmem:[%s1780 + $0x51] sm:$0xff]
        %v1816 = vld [vmem:[%s1780 + $0x61] sm:$0xff]
        %v1817 = vld [vmem:[%s1780 + $0x71] sm:$0xff]
        %v1818 = vld [vmem:[%s6 + $0x1] sm:$0x1]
        %v1819 = vlaneseq
        %v1820 = vshrl.u32 %v1819, 7
        %v1821 = vsub.s32 0, %v1820
        %v1822 = vrot.slane %v1818, %v1821
        %v1823 = vmul.f32 %v1810, %v1822
        %v1824 = vmul.f32 %v1811, %v1822
        %v1825 = vmul.f32 %v1812, %v1822
        %v1826 = vmul.f32 %v1813, %v1822
        %v1827 = vmul.f32 %v1814, %v1822
        %v1828 = vmul.f32 %v1815, %v1822
        %v1829 = vmul.f32 %v1816, %v1822
        %v1830 = vmul.f32 %v1817, %v1822
        %v1831 = vadd.f32 %v1802, %v1823
        %v1832 = vadd.f32 %v1803, %v1824
        %v1833 = vadd.f32 %v1804, %v1825
        %v1834 = vadd.f32 %v1805, %v1826
        %v1835 = vadd.f32 %v1806, %v1827
        %v1836 = vadd.f32 %v1807, %v1828
        %v1837 = vadd.f32 %v1808, %v1829
        %v1838 = vadd.f32 %v1809, %v1830
        %v1839 = vld [vmem:[%s1780 + $0x2] sm:$0xff]
        %v1840 = vld [vmem:[%s1780 + $0x12] sm:$0xff]
        %v1841 = vld [vmem:[%s1780 + $0x22] sm:$0xff]
        %v1842 = vld [vmem:[%s1780 + $0x32] sm:$0xff]
        %v1843 = vld [vmem:[%s1780 + $0x42] sm:$0xff]
        %v1844 = vld [vmem:[%s1780 + $0x52] sm:$0xff]
        %v1845 = vld [vmem:[%s1780 + $0x62] sm:$0xff]
        %v1846 = vld [vmem:[%s1780 + $0x72] sm:$0xff]
        %v1847 = vld [vmem:[%s6 + $0x2] sm:$0x1]
        %v1848 = vlaneseq
        %v1849 = vshrl.u32 %v1848, 7
        %v1850 = vsub.s32 0, %v1849
        %v1851 = vrot.slane %v1847, %v1850
        %v1852 = vmul.f32 %v1839, %v1851
        %v1853 = vmul.f32 %v1840, %v1851
        %v1854 = vmul.f32 %v1841, %v1851
        %v1855 = vmul.f32 %v1842, %v1851
        %v1856 = vmul.f32 %v1843, %v1851
        %v1857 = vmul.f32 %v1844, %v1851
        %v1858 = vmul.f32 %v1845, %v1851
        %v1859 = vmul.f32 %v1846, %v1851
        %v1860 = vadd.f32 %v1831, %v1852
        %v1861 = vadd.f32 %v1832, %v1853
        %v1862 = vadd.f32 %v1833, %v1854
        %v1863 = vadd.f32 %v1834, %v1855
        %v1864 = vadd.f32 %v1835, %v1856
        %v1865 = vadd.f32 %v1836, %v1857
        %v1866 = vadd.f32 %v1837, %v1858
        %v1867 = vadd.f32 %v1838, %v1859
        %s1868 = sadd.s32 16, %s1779
        %s1869 = scalar_lea.vmem [#allocation2], %s1868
        %v1870 = vld [vmem:[%s1869] sm:$0xff]
        %v1871 = vld [vmem:[%s1869 + $0x10] sm:$0xff]
        %v1872 = vld [vmem:[%s1869 + $0x20] sm:$0xff]
        %v1873 = vld [vmem:[%s1869 + $0x30] sm:$0xff]
        %v1874 = vld [vmem:[%s1869 + $0x40] sm:$0xff]
        %v1875 = vld [vmem:[%s1869 + $0x50] sm:$0xff]
        %v1876 = vld [vmem:[%s1869 + $0x60] sm:$0xff]
        %v1877 = vld [vmem:[%s1869 + $0x70] sm:$0xff]
        %v1878 = vld [vmem:[%s6 + $0x3] sm:$0x1]
        %v1879 = vlaneseq
        %v1880 = vshrl.u32 %v1879, 7
        %v1881 = vsub.s32 0, %v1880
        %v1882 = vrot.slane %v1878, %v1881
        %v1883 = vmul.f32 %v1870, %v1882
        %v1884 = vmul.f32 %v1871, %v1882
        %v1885 = vmul.f32 %v1872, %v1882
        %v1886 = vmul.f32 %v1873, %v1882
        %v1887 = vmul.f32 %v1874, %v1882
        %v1888 = vmul.f32 %v1875, %v1882
        %v1889 = vmul.f32 %v1876, %v1882
        %v1890 = vmul.f32 %v1877, %v1882
        %v1891 = vadd.f32 %v1860, %v1883
        %v1892 = vadd.f32 %v1861, %v1884
        %v1893 = vadd.f32 %v1862, %v1885
        %v1894 = vadd.f32 %v1863, %v1886
        %v1895 = vadd.f32 %v1864, %v1887
        %v1896 = vadd.f32 %v1865, %v1888
        %v1897 = vadd.f32 %v1866, %v1889
        %v1898 = vadd.f32 %v1867, %v1890
        %v1899 = vld [vmem:[%s1869 + $0x1] sm:$0xff]
        %v1900 = vld [vmem:[%s1869 + $0x11] sm:$0xff]
        %v1901 = vld [vmem:[%s1869 + $0x21] sm:$0xff]
        %v1902 = vld [vmem:[%s1869 + $0x31] sm:$0xff]
        %v1903 = vld [vmem:[%s1869 + $0x41] sm:$0xff]
        %v1904 = vld [vmem:[%s1869 + $0x51] sm:$0xff]
        %v1905 = vld [vmem:[%s1869 + $0x61] sm:$0xff]
        %v1906 = vld [vmem:[%s1869 + $0x71] sm:$0xff]
        %v1907 = vld [vmem:[%s6 + $0x4] sm:$0x1]
        %v1908 = vlaneseq
        %v1909 = vshrl.u32 %v1908, 7
        %v1910 = vsub.s32 0, %v1909
        %v1911 = vrot.slane %v1907, %v1910
        %v1912 = vmul.f32 %v1899, %v1911
        %v1913 = vmul.f32 %v1900, %v1911
        %v1914 = vmul.f32 %v1901, %v1911
        %v1915 = vmul.f32 %v1902, %v1911
        %v1916 = vmul.f32 %v1903, %v1911
        %v1917 = vmul.f32 %v1904, %v1911
        %v1918 = vmul.f32 %v1905, %v1911
        %v1919 = vmul.f32 %v1906, %v1911
        %v1920 = vadd.f32 %v1891, %v1912
        %v1921 = vadd.f32 %v1892, %v1913
        %v1922 = vadd.f32 %v1893, %v1914
        %v1923 = vadd.f32 %v1894, %v1915
        %v1924 = vadd.f32 %v1895, %v1916
        %v1925 = vadd.f32 %v1896, %v1917
        %v1926 = vadd.f32 %v1897, %v1918
        %v1927 = vadd.f32 %v1898, %v1919
        %v1928 = vld [vmem:[%s1869 + $0x2] sm:$0xff]
        %v1929 = vld [vmem:[%s1869 + $0x12] sm:$0xff]
        %v1930 = vld [vmem:[%s1869 + $0x22] sm:$0xff]
        %v1931 = vld [vmem:[%s1869 + $0x32] sm:$0xff]
        %v1932 = vld [vmem:[%s1869 + $0x42] sm:$0xff]
        %v1933 = vld [vmem:[%s1869 + $0x52] sm:$0xff]
        %v1934 = vld [vmem:[%s1869 + $0x62] sm:$0xff]
        %v1935 = vld [vmem:[%s1869 + $0x72] sm:$0xff]
        %v1936 = vld [vmem:[%s6 + $0x5] sm:$0x1]
        %v1937 = vlaneseq
        %v1938 = vshrl.u32 %v1937, 7
        %v1939 = vsub.s32 0, %v1938
        %v1940 = vrot.slane %v1936, %v1939
        %v1941 = vmul.f32 %v1928, %v1940
        %v1942 = vmul.f32 %v1929, %v1940
        %v1943 = vmul.f32 %v1930, %v1940
        %v1944 = vmul.f32 %v1931, %v1940
        %v1945 = vmul.f32 %v1932, %v1940
        %v1946 = vmul.f32 %v1933, %v1940
        %v1947 = vmul.f32 %v1934, %v1940
        %v1948 = vmul.f32 %v1935, %v1940
        %v1949 = vadd.f32 %v1920, %v1941
        %v1950 = vadd.f32 %v1921, %v1942
        %v1951 = vadd.f32 %v1922, %v1943
        %v1952 = vadd.f32 %v1923, %v1944
        %v1953 = vadd.f32 %v1924, %v1945
        %v1954 = vadd.f32 %v1925, %v1946
        %v1955 = vadd.f32 %v1926, %v1947
        %v1956 = vadd.f32 %v1927, %v1948
        %s1957 = sadd.s32 32, %s1779
        %s1958 = scalar_lea.vmem [#allocation2], %s1957
        %v1959 = vld [vmem:[%s1958] sm:$0xff]
        %v1960 = vld [vmem:[%s1958 + $0x10] sm:$0xff]
        %v1961 = vld [vmem:[%s1958 + $0x20] sm:$0xff]
        %v1962 = vld [vmem:[%s1958 + $0x30] sm:$0xff]
        %v1963 = vld [vmem:[%s1958 + $0x40] sm:$0xff]
        %v1964 = vld [vmem:[%s1958 + $0x50] sm:$0xff]
        %v1965 = vld [vmem:[%s1958 + $0x60] sm:$0xff]
        %v1966 = vld [vmem:[%s1958 + $0x70] sm:$0xff]
        %v1967 = vld [vmem:[%s6 + $0x6] sm:$0x1]
        %v1968 = vlaneseq
        %v1969 = vshrl.u32 %v1968, 7
        %v1970 = vsub.s32 0, %v1969
        %v1971 = vrot.slane %v1967, %v1970
        %v1972 = vmul.f32 %v1959, %v1971
        %v1973 = vmul.f32 %v1960, %v1971
        %v1974 = vmul.f32 %v1961, %v1971
        %v1975 = vmul.f32 %v1962, %v1971
        %v1976 = vmul.f32 %v1963, %v1971
        %v1977 = vmul.f32 %v1964, %v1971
        %v1978 = vmul.f32 %v1965, %v1971
        %v1979 = vmul.f32 %v1966, %v1971
        %v1980 = vadd.f32 %v1949, %v1972
        %v1981 = vadd.f32 %v1950, %v1973
        %v1982 = vadd.f32 %v1951, %v1974
        %v1983 = vadd.f32 %v1952, %v1975
        %v1984 = vadd.f32 %v1953, %v1976
        %v1985 = vadd.f32 %v1954, %v1977
        %v1986 = vadd.f32 %v1955, %v1978
        %v1987 = vadd.f32 %v1956, %v1979
        %v1988 = vld [vmem:[%s1958 + $0x1] sm:$0xff]
        %v1989 = vld [vmem:[%s1958 + $0x11] sm:$0xff]
        %v1990 = vld [vmem:[%s1958 + $0x21] sm:$0xff]
        %v1991 = vld [vmem:[%s1958 + $0x31] sm:$0xff]
        %v1992 = vld [vmem:[%s1958 + $0x41] sm:$0xff]
        %v1993 = vld [vmem:[%s1958 + $0x51] sm:$0xff]
        %v1994 = vld [vmem:[%s1958 + $0x61] sm:$0xff]
        %v1995 = vld [vmem:[%s1958 + $0x71] sm:$0xff]
        %v1996 = vld [vmem:[%s6 + $0x7] sm:$0x1]
        %v1997 = vlaneseq
        %v1998 = vshrl.u32 %v1997, 7
        %v1999 = vsub.s32 0, %v1998
        %v2000 = vrot.slane %v1996, %v1999
        %v2001 = vmul.f32 %v1988, %v2000
        %v2002 = vmul.f32 %v1989, %v2000
        %v2003 = vmul.f32 %v1990, %v2000
        %v2004 = vmul.f32 %v1991, %v2000
        %v2005 = vmul.f32 %v1992, %v2000
        %v2006 = vmul.f32 %v1993, %v2000
        %v2007 = vmul.f32 %v1994, %v2000
        %v2008 = vmul.f32 %v1995, %v2000
        %v2009 = vadd.f32 %v1980, %v2001
        %v2010 = vadd.f32 %v1981, %v2002
        %v2011 = vadd.f32 %v1982, %v2003
        %v2012 = vadd.f32 %v1983, %v2004
        %v2013 = vadd.f32 %v1984, %v2005
        %v2014 = vadd.f32 %v1985, %v2006
        %v2015 = vadd.f32 %v1986, %v2007
        %v2016 = vadd.f32 %v1987, %v2008
        %v2017 = vld [vmem:[%s1958 + $0x2] sm:$0xff]
        %v2018 = vld [vmem:[%s1958 + $0x12] sm:$0xff]
        %v2019 = vld [vmem:[%s1958 + $0x22] sm:$0xff]
        %v2020 = vld [vmem:[%s1958 + $0x32] sm:$0xff]
        %v2021 = vld [vmem:[%s1958 + $0x42] sm:$0xff]
        %v2022 = vld [vmem:[%s1958 + $0x52] sm:$0xff]
        %v2023 = vld [vmem:[%s1958 + $0x62] sm:$0xff]
        %v2024 = vld [vmem:[%s1958 + $0x72] sm:$0xff]
        %v2025 = vld [vmem:[%s6 + $0x8] sm:$0x1]
        %v2026 = vlaneseq
        %v2027 = vshrl.u32 %v2026, 7
        %v2028 = vsub.s32 0, %v2027
        %v2029 = vrot.slane %v2025, %v2028
        %v2030 = vmul.f32 %v2017, %v2029
        %v2031 = vmul.f32 %v2018, %v2029
        %v2032 = vmul.f32 %v2019, %v2029
        %v2033 = vmul.f32 %v2020, %v2029
        %v2034 = vmul.f32 %v2021, %v2029
        %v2035 = vmul.f32 %v2022, %v2029
        %v2036 = vmul.f32 %v2023, %v2029
        %v2037 = vmul.f32 %v2024, %v2029
        %v2038 = vadd.f32 %v2009, %v2030
        %v2039 = vadd.f32 %v2010, %v2031
        %v2040 = vadd.f32 %v2011, %v2032
        %v2041 = vadd.f32 %v2012, %v2033
        %v2042 = vadd.f32 %v2013, %v2034
        %v2043 = vadd.f32 %v2014, %v2035
        %v2044 = vadd.f32 %v2015, %v2036
        %v2045 = vadd.f32 %v2016, %v2037
        %s2046 = sadd.s32 %s1774, 1
        %s2047 = smul.u32 %s2046, 160
        %s2048 = scalar_lea.vmem [#allocation2], %s2047
        %v2049 = vld [vmem:[%s2048] sm:$0xff]
        %v2050 = vld [vmem:[%s2048 + $0x10] sm:$0xff]
        %v2051 = vld [vmem:[%s2048 + $0x20] sm:$0xff]
        %v2052 = vld [vmem:[%s2048 + $0x30] sm:$0xff]
        %v2053 = vld [vmem:[%s2048 + $0x40] sm:$0xff]
        %v2054 = vld [vmem:[%s2048 + $0x50] sm:$0xff]
        %v2055 = vld [vmem:[%s2048 + $0x60] sm:$0xff]
        %v2056 = vld [vmem:[%s2048 + $0x70] sm:$0xff]
        %v2057 = vld [vmem:[%s6 + $0x9] sm:$0x1]
        %v2058 = vlaneseq
        %v2059 = vshrl.u32 %v2058, 7
        %v2060 = vsub.s32 0, %v2059
        %v2061 = vrot.slane %v2057, %v2060
        %v2062 = vmul.f32 %v2049, %v2061
        %v2063 = vmul.f32 %v2050, %v2061
        %v2064 = vmul.f32 %v2051, %v2061
        %v2065 = vmul.f32 %v2052, %v2061
        %v2066 = vmul.f32 %v2053, %v2061
        %v2067 = vmul.f32 %v2054, %v2061
        %v2068 = vmul.f32 %v2055, %v2061
        %v2069 = vmul.f32 %v2056, %v2061
        %v2070 = vadd.f32 %v2038, %v2062
        %v2071 = vadd.f32 %v2039, %v2063
        %v2072 = vadd.f32 %v2040, %v2064
        %v2073 = vadd.f32 %v2041, %v2065
        %v2074 = vadd.f32 %v2042, %v2066
        %v2075 = vadd.f32 %v2043, %v2067
        %v2076 = vadd.f32 %v2044, %v2068
        %v2077 = vadd.f32 %v2045, %v2069
        %v2078 = vld [vmem:[%s2048 + $0x1] sm:$0xff]
        %v2079 = vld [vmem:[%s2048 + $0x11] sm:$0xff]
        %v2080 = vld [vmem:[%s2048 + $0x21] sm:$0xff]
        %v2081 = vld [vmem:[%s2048 + $0x31] sm:$0xff]
        %v2082 = vld [vmem:[%s2048 + $0x41] sm:$0xff]
        %v2083 = vld [vmem:[%s2048 + $0x51] sm:$0xff]
        %v2084 = vld [vmem:[%s2048 + $0x61] sm:$0xff]
        %v2085 = vld [vmem:[%s2048 + $0x71] sm:$0xff]
        %v2086 = vld [vmem:[%s6 + $0xa] sm:$0x1]
        %v2087 = vlaneseq
        %v2088 = vshrl.u32 %v2087, 7
        %v2089 = vsub.s32 0, %v2088
        %v2090 = vrot.slane %v2086, %v2089
        %v2091 = vmul.f32 %v2078, %v2090
        %v2092 = vmul.f32 %v2079, %v2090
        %v2093 = vmul.f32 %v2080, %v2090
        %v2094 = vmul.f32 %v2081, %v2090
        %v2095 = vmul.f32 %v2082, %v2090
        %v2096 = vmul.f32 %v2083, %v2090
        %v2097 = vmul.f32 %v2084, %v2090
        %v2098 = vmul.f32 %v2085, %v2090
        %v2099 = vadd.f32 %v2070, %v2091
        %v2100 = vadd.f32 %v2071, %v2092
        %v2101 = vadd.f32 %v2072, %v2093
        %v2102 = vadd.f32 %v2073, %v2094
        %v2103 = vadd.f32 %v2074, %v2095
        %v2104 = vadd.f32 %v2075, %v2096
        %v2105 = vadd.f32 %v2076, %v2097
        %v2106 = vadd.f32 %v2077, %v2098
        %v2107 = vld [vmem:[%s2048 + $0x2] sm:$0xff]
        %v2108 = vld [vmem:[%s2048 + $0x12] sm:$0xff]
        %v2109 = vld [vmem:[%s2048 + $0x22] sm:$0xff]
        %v2110 = vld [vmem:[%s2048 + $0x32] sm:$0xff]
        %v2111 = vld [vmem:[%s2048 + $0x42] sm:$0xff]
        %v2112 = vld [vmem:[%s2048 + $0x52] sm:$0xff]
        %v2113 = vld [vmem:[%s2048 + $0x62] sm:$0xff]
        %v2114 = vld [vmem:[%s2048 + $0x72] sm:$0xff]
        %v2115 = vld [vmem:[%s6 + $0xb] sm:$0x1]
        %v2116 = vlaneseq
        %v2117 = vshrl.u32 %v2116, 7
        %v2118 = vsub.s32 0, %v2117
        %v2119 = vrot.slane %v2115, %v2118
        %v2120 = vmul.f32 %v2107, %v2119
        %v2121 = vmul.f32 %v2108, %v2119
        %v2122 = vmul.f32 %v2109, %v2119
        %v2123 = vmul.f32 %v2110, %v2119
        %v2124 = vmul.f32 %v2111, %v2119
        %v2125 = vmul.f32 %v2112, %v2119
        %v2126 = vmul.f32 %v2113, %v2119
        %v2127 = vmul.f32 %v2114, %v2119
        %v2128 = vadd.f32 %v2099, %v2120
        %v2129 = vadd.f32 %v2100, %v2121
        %v2130 = vadd.f32 %v2101, %v2122
        %v2131 = vadd.f32 %v2102, %v2123
        %v2132 = vadd.f32 %v2103, %v2124
        %v2133 = vadd.f32 %v2104, %v2125
        %v2134 = vadd.f32 %v2105, %v2126
        %v2135 = vadd.f32 %v2106, %v2127
        %s2136 = sadd.s32 16, %s2047
        %s2137 = scalar_lea.vmem [#allocation2], %s2136
        %v2138 = vld [vmem:[%s2137] sm:$0xff]
        %v2139 = vld [vmem:[%s2137 + $0x10] sm:$0xff]
        %v2140 = vld [vmem:[%s2137 + $0x20] sm:$0xff]
        %v2141 = vld [vmem:[%s2137 + $0x30] sm:$0xff]
        %v2142 = vld [vmem:[%s2137 + $0x40] sm:$0xff]
        %v2143 = vld [vmem:[%s2137 + $0x50] sm:$0xff]
        %v2144 = vld [vmem:[%s2137 + $0x60] sm:$0xff]
        %v2145 = vld [vmem:[%s2137 + $0x70] sm:$0xff]
        %v2146 = vld [vmem:[%s6 + $0xc] sm:$0x1]
        %v2147 = vlaneseq
        %v2148 = vshrl.u32 %v2147, 7
        %v2149 = vsub.s32 0, %v2148
        %v2150 = vrot.slane %v2146, %v2149
        %v2151 = vmul.f32 %v2138, %v2150
        %v2152 = vmul.f32 %v2139, %v2150
        %v2153 = vmul.f32 %v2140, %v2150
        %v2154 = vmul.f32 %v2141, %v2150
        %v2155 = vmul.f32 %v2142, %v2150
        %v2156 = vmul.f32 %v2143, %v2150
        %v2157 = vmul.f32 %v2144, %v2150
        %v2158 = vmul.f32 %v2145, %v2150
        %v2159 = vadd.f32 %v2128, %v2151
        %v2160 = vadd.f32 %v2129, %v2152
        %v2161 = vadd.f32 %v2130, %v2153
        %v2162 = vadd.f32 %v2131, %v2154
        %v2163 = vadd.f32 %v2132, %v2155
        %v2164 = vadd.f32 %v2133, %v2156
        %v2165 = vadd.f32 %v2134, %v2157
        %v2166 = vadd.f32 %v2135, %v2158
        %v2167 = vld [vmem:[%s2137 + $0x1] sm:$0xff]
        %v2168 = vld [vmem:[%s2137 + $0x11] sm:$0xff]
        %v2169 = vld [vmem:[%s2137 + $0x21] sm:$0xff]
        %v2170 = vld [vmem:[%s2137 + $0x31] sm:$0xff]
        %v2171 = vld [vmem:[%s2137 + $0x41] sm:$0xff]
        %v2172 = vld [vmem:[%s2137 + $0x51] sm:$0xff]
        %v2173 = vld [vmem:[%s2137 + $0x61] sm:$0xff]
        %v2174 = vld [vmem:[%s2137 + $0x71] sm:$0xff]
        %v2175 = vld [vmem:[%s6 + $0xd] sm:$0x1]
        %v2176 = vlaneseq
        %v2177 = vshrl.u32 %v2176, 7
        %v2178 = vsub.s32 0, %v2177
        %v2179 = vrot.slane %v2175, %v2178
        %v2180 = vmul.f32 %v2167, %v2179
        %v2181 = vmul.f32 %v2168, %v2179
        %v2182 = vmul.f32 %v2169, %v2179
        %v2183 = vmul.f32 %v2170, %v2179
        %v2184 = vmul.f32 %v2171, %v2179
        %v2185 = vmul.f32 %v2172, %v2179
        %v2186 = vmul.f32 %v2173, %v2179
        %v2187 = vmul.f32 %v2174, %v2179
        %v2188 = vadd.f32 %v2159, %v2180
        %v2189 = vadd.f32 %v2160, %v2181
        %v2190 = vadd.f32 %v2161, %v2182
        %v2191 = vadd.f32 %v2162, %v2183
        %v2192 = vadd.f32 %v2163, %v2184
        %v2193 = vadd.f32 %v2164, %v2185
        %v2194 = vadd.f32 %v2165, %v2186
        %v2195 = vadd.f32 %v2166, %v2187
        %v2196 = vld [vmem:[%s2137 + $0x2] sm:$0xff]
        %v2197 = vld [vmem:[%s2137 + $0x12] sm:$0xff]
        %v2198 = vld [vmem:[%s2137 + $0x22] sm:$0xff]
        %v2199 = vld [vmem:[%s2137 + $0x32] sm:$0xff]
        %v2200 = vld [vmem:[%s2137 + $0x42] sm:$0xff]
        %v2201 = vld [vmem:[%s2137 + $0x52] sm:$0xff]
        %v2202 = vld [vmem:[%s2137 + $0x62] sm:$0xff]
        %v2203 = vld [vmem:[%s2137 + $0x72] sm:$0xff]
        %v2204 = vld [vmem:[%s6 + $0xe] sm:$0x1]
        %v2205 = vlaneseq
        %v2206 = vshrl.u32 %v2205, 7
        %v2207 = vsub.s32 0, %v2206
        %v2208 = vrot.slane %v2204, %v2207
        %v2209 = vmul.f32 %v2196, %v2208
        %v2210 = vmul.f32 %v2197, %v2208
        %v2211 = vmul.f32 %v2198, %v2208
        %v2212 = vmul.f32 %v2199, %v2208
        %v2213 = vmul.f32 %v2200, %v2208
        %v2214 = vmul.f32 %v2201, %v2208
        %v2215 = vmul.f32 %v2202, %v2208
        %v2216 = vmul.f32 %v2203, %v2208
        %v2217 = vadd.f32 %v2188, %v2209
        %v2218 = vadd.f32 %v2189, %v2210
        %v2219 = vadd.f32 %v2190, %v2211
        %v2220 = vadd.f32 %v2191, %v2212
        %v2221 = vadd.f32 %v2192, %v2213
        %v2222 = vadd.f32 %v2193, %v2214
        %v2223 = vadd.f32 %v2194, %v2215
        %v2224 = vadd.f32 %v2195, %v2216
        %s2225 = sadd.s32 32, %s2047
        %s2226 = scalar_lea.vmem [#allocation2], %s2225
        %v2227 = vld [vmem:[%s2226] sm:$0xff]
        %v2228 = vld [vmem:[%s2226 + $0x10] sm:$0xff]
        %v2229 = vld [vmem:[%s2226 + $0x20] sm:$0xff]
        %v2230 = vld [vmem:[%s2226 + $0x30] sm:$0xff]
        %v2231 = vld [vmem:[%s2226 + $0x40] sm:$0xff]
        %v2232 = vld [vmem:[%s2226 + $0x50] sm:$0xff]
        %v2233 = vld [vmem:[%s2226 + $0x60] sm:$0xff]
        %v2234 = vld [vmem:[%s2226 + $0x70] sm:$0xff]
        %v2235 = vld [vmem:[%s6 + $0xf] sm:$0x1]
        %v2236 = vlaneseq
        %v2237 = vshrl.u32 %v2236, 7
        %v2238 = vsub.s32 0, %v2237
        %v2239 = vrot.slane %v2235, %v2238
        %v2240 = vmul.f32 %v2227, %v2239
        %v2241 = vmul.f32 %v2228, %v2239
        %v2242 = vmul.f32 %v2229, %v2239
        %v2243 = vmul.f32 %v2230, %v2239
        %v2244 = vmul.f32 %v2231, %v2239
        %v2245 = vmul.f32 %v2232, %v2239
        %v2246 = vmul.f32 %v2233, %v2239
        %v2247 = vmul.f32 %v2234, %v2239
        %v2248 = vadd.f32 %v2217, %v2240
        %v2249 = vadd.f32 %v2218, %v2241
        %v2250 = vadd.f32 %v2219, %v2242
        %v2251 = vadd.f32 %v2220, %v2243
        %v2252 = vadd.f32 %v2221, %v2244
        %v2253 = vadd.f32 %v2222, %v2245
        %v2254 = vadd.f32 %v2223, %v2246
        %v2255 = vadd.f32 %v2224, %v2247
        %v2256 = vld [vmem:[%s2226 + $0x1] sm:$0xff]
        %v2257 = vld [vmem:[%s2226 + $0x11] sm:$0xff]
        %v2258 = vld [vmem:[%s2226 + $0x21] sm:$0xff]
        %v2259 = vld [vmem:[%s2226 + $0x31] sm:$0xff]
        %v2260 = vld [vmem:[%s2226 + $0x41] sm:$0xff]
        %v2261 = vld [vmem:[%s2226 + $0x51] sm:$0xff]
        %v2262 = vld [vmem:[%s2226 + $0x61] sm:$0xff]
        %v2263 = vld [vmem:[%s2226 + $0x71] sm:$0xff]
        %v2264 = vld [vmem:[%s6 + $0x10] sm:$0x1]
        %v2265 = vlaneseq
        %v2266 = vshrl.u32 %v2265, 7
        %v2267 = vsub.s32 0, %v2266
        %v2268 = vrot.slane %v2264, %v2267
        %v2269 = vmul.f32 %v2256, %v2268
        %v2270 = vmul.f32 %v2257, %v2268
        %v2271 = vmul.f32 %v2258, %v2268
        %v2272 = vmul.f32 %v2259, %v2268
        %v2273 = vmul.f32 %v2260, %v2268
        %v2274 = vmul.f32 %v2261, %v2268
        %v2275 = vmul.f32 %v2262, %v2268
        %v2276 = vmul.f32 %v2263, %v2268
        %v2277 = vadd.f32 %v2248, %v2269
        %v2278 = vadd.f32 %v2249, %v2270
        %v2279 = vadd.f32 %v2250, %v2271
        %v2280 = vadd.f32 %v2251, %v2272
        %v2281 = vadd.f32 %v2252, %v2273
        %v2282 = vadd.f32 %v2253, %v2274
        %v2283 = vadd.f32 %v2254, %v2275
        %v2284 = vadd.f32 %v2255, %v2276
        %v2285 = vld [vmem:[%s2226 + $0x2] sm:$0xff]
        %v2286 = vld [vmem:[%s2226 + $0x12] sm:$0xff]
        %v2287 = vld [vmem:[%s2226 + $0x22] sm:$0xff]
        %v2288 = vld [vmem:[%s2226 + $0x32] sm:$0xff]
        %v2289 = vld [vmem:[%s2226 + $0x42] sm:$0xff]
        %v2290 = vld [vmem:[%s2226 + $0x52] sm:$0xff]
        %v2291 = vld [vmem:[%s2226 + $0x62] sm:$0xff]
        %v2292 = vld [vmem:[%s2226 + $0x72] sm:$0xff]
        %v2293 = vld [vmem:[%s6 + $0x11] sm:$0x1]
        %v2294 = vlaneseq
        %v2295 = vshrl.u32 %v2294, 7
        %v2296 = vsub.s32 0, %v2295
        %v2297 = vrot.slane %v2293, %v2296
        %v2298 = vmul.f32 %v2285, %v2297
        %v2299 = vmul.f32 %v2286, %v2297
        %v2300 = vmul.f32 %v2287, %v2297
        %v2301 = vmul.f32 %v2288, %v2297
        %v2302 = vmul.f32 %v2289, %v2297
        %v2303 = vmul.f32 %v2290, %v2297
        %v2304 = vmul.f32 %v2291, %v2297
        %v2305 = vmul.f32 %v2292, %v2297
        %v2306 = vadd.f32 %v2277, %v2298
        %v2307 = vadd.f32 %v2278, %v2299
        %v2308 = vadd.f32 %v2279, %v2300
        %v2309 = vadd.f32 %v2280, %v2301
        %v2310 = vadd.f32 %v2281, %v2302
        %v2311 = vadd.f32 %v2282, %v2303
        %v2312 = vadd.f32 %v2283, %v2304
        %v2313 = vadd.f32 %v2284, %v2305
        %s2314 = sadd.s32 %s1774, 2
        %s2315 = smul.u32 %s2314, 160
        %s2316 = scalar_lea.vmem [#allocation2], %s2315
        %v2317 = vld [vmem:[%s2316] sm:$0xff]
        %v2318 = vld [vmem:[%s2316 + $0x10] sm:$0xff]
        %v2319 = vld [vmem:[%s2316 + $0x20] sm:$0xff]
        %v2320 = vld [vmem:[%s2316 + $0x30] sm:$0xff]
        %v2321 = vld [vmem:[%s2316 + $0x40] sm:$0xff]
        %v2322 = vld [vmem:[%s2316 + $0x50] sm:$0xff]
        %v2323 = vld [vmem:[%s2316 + $0x60] sm:$0xff]
        %v2324 = vld [vmem:[%s2316 + $0x70] sm:$0xff]
        %v2325 = vld [vmem:[%s6 + $0x12] sm:$0x1]
        %v2326 = vlaneseq
        %v2327 = vshrl.u32 %v2326, 7
        %v2328 = vsub.s32 0, %v2327
        %v2329 = vrot.slane %v2325, %v2328
        %v2330 = vmul.f32 %v2317, %v2329
        %v2331 = vmul.f32 %v2318, %v2329
        %v2332 = vmul.f32 %v2319, %v2329
        %v2333 = vmul.f32 %v2320, %v2329
        %v2334 = vmul.f32 %v2321, %v2329
        %v2335 = vmul.f32 %v2322, %v2329
        %v2336 = vmul.f32 %v2323, %v2329
        %v2337 = vmul.f32 %v2324, %v2329
        %v2338 = vadd.f32 %v2306, %v2330
        %v2339 = vadd.f32 %v2307, %v2331
        %v2340 = vadd.f32 %v2308, %v2332
        %v2341 = vadd.f32 %v2309, %v2333
        %v2342 = vadd.f32 %v2310, %v2334
        %v2343 = vadd.f32 %v2311, %v2335
        %v2344 = vadd.f32 %v2312, %v2336
        %v2345 = vadd.f32 %v2313, %v2337
        %v2346 = vld [vmem:[%s2316 + $0x1] sm:$0xff]
        %v2347 = vld [vmem:[%s2316 + $0x11] sm:$0xff]
        %v2348 = vld [vmem:[%s2316 + $0x21] sm:$0xff]
        %v2349 = vld [vmem:[%s2316 + $0x31] sm:$0xff]
        %v2350 = vld [vmem:[%s2316 + $0x41] sm:$0xff]
        %v2351 = vld [vmem:[%s2316 + $0x51] sm:$0xff]
        %v2352 = vld [vmem:[%s2316 + $0x61] sm:$0xff]
        %v2353 = vld [vmem:[%s2316 + $0x71] sm:$0xff]
        %v2354 = vld [vmem:[%s6 + $0x13] sm:$0x1]
        %v2355 = vlaneseq
        %v2356 = vshrl.u32 %v2355, 7
        %v2357 = vsub.s32 0, %v2356
        %v2358 = vrot.slane %v2354, %v2357
        %v2359 = vmul.f32 %v2346, %v2358
        %v2360 = vmul.f32 %v2347, %v2358
        %v2361 = vmul.f32 %v2348, %v2358
        %v2362 = vmul.f32 %v2349, %v2358
        %v2363 = vmul.f32 %v2350, %v2358
        %v2364 = vmul.f32 %v2351, %v2358
        %v2365 = vmul.f32 %v2352, %v2358
        %v2366 = vmul.f32 %v2353, %v2358
        %v2367 = vadd.f32 %v2338, %v2359
        %v2368 = vadd.f32 %v2339, %v2360
        %v2369 = vadd.f32 %v2340, %v2361
        %v2370 = vadd.f32 %v2341, %v2362
        %v2371 = vadd.f32 %v2342, %v2363
        %v2372 = vadd.f32 %v2343, %v2364
        %v2373 = vadd.f32 %v2344, %v2365
        %v2374 = vadd.f32 %v2345, %v2366
        %v2375 = vld [vmem:[%s2316 + $0x2] sm:$0xff]
        %v2376 = vld [vmem:[%s2316 + $0x12] sm:$0xff]
        %v2377 = vld [vmem:[%s2316 + $0x22] sm:$0xff]
        %v2378 = vld [vmem:[%s2316 + $0x32] sm:$0xff]
        %v2379 = vld [vmem:[%s2316 + $0x42] sm:$0xff]
        %v2380 = vld [vmem:[%s2316 + $0x52] sm:$0xff]
        %v2381 = vld [vmem:[%s2316 + $0x62] sm:$0xff]
        %v2382 = vld [vmem:[%s2316 + $0x72] sm:$0xff]
        %v2383 = vld [vmem:[%s6 + $0x14] sm:$0x1]
        %v2384 = vlaneseq
        %v2385 = vshrl.u32 %v2384, 7
        %v2386 = vsub.s32 0, %v2385
        %v2387 = vrot.slane %v2383, %v2386
        %v2388 = vmul.f32 %v2375, %v2387
        %v2389 = vmul.f32 %v2376, %v2387
        %v2390 = vmul.f32 %v2377, %v2387
        %v2391 = vmul.f32 %v2378, %v2387
        %v2392 = vmul.f32 %v2379, %v2387
        %v2393 = vmul.f32 %v2380, %v2387
        %v2394 = vmul.f32 %v2381, %v2387
        %v2395 = vmul.f32 %v2382, %v2387
        %v2396 = vadd.f32 %v2367, %v2388
        %v2397 = vadd.f32 %v2368, %v2389
        %v2398 = vadd.f32 %v2369, %v2390
        %v2399 = vadd.f32 %v2370, %v2391
        %v2400 = vadd.f32 %v2371, %v2392
        %v2401 = vadd.f32 %v2372, %v2393
        %v2402 = vadd.f32 %v2373, %v2394
        %v2403 = vadd.f32 %v2374, %v2395
        %s2404 = sadd.s32 16, %s2315
        %s2405 = scalar_lea.vmem [#allocation2], %s2404
        %v2406 = vld [vmem:[%s2405] sm:$0xff]
        %v2407 = vld [vmem:[%s2405 + $0x10] sm:$0xff]
        %v2408 = vld [vmem:[%s2405 + $0x20] sm:$0xff]
        %v2409 = vld [vmem:[%s2405 + $0x30] sm:$0xff]
        %v2410 = vld [vmem:[%s2405 + $0x40] sm:$0xff]
        %v2411 = vld [vmem:[%s2405 + $0x50] sm:$0xff]
        %v2412 = vld [vmem:[%s2405 + $0x60] sm:$0xff]
        %v2413 = vld [vmem:[%s2405 + $0x70] sm:$0xff]
        %v2414 = vld [vmem:[%s6 + $0x15] sm:$0x1]
        %v2415 = vlaneseq
        %v2416 = vshrl.u32 %v2415, 7
        %v2417 = vsub.s32 0, %v2416
        %v2418 = vrot.slane %v2414, %v2417
        %v2419 = vmul.f32 %v2406, %v2418
        %v2420 = vmul.f32 %v2407, %v2418
        %v2421 = vmul.f32 %v2408, %v2418
        %v2422 = vmul.f32 %v2409, %v2418
        %v2423 = vmul.f32 %v2410, %v2418
        %v2424 = vmul.f32 %v2411, %v2418
        %v2425 = vmul.f32 %v2412, %v2418
        %v2426 = vmul.f32 %v2413, %v2418
        %v2427 = vadd.f32 %v2396, %v2419
        %v2428 = vadd.f32 %v2397, %v2420
        %v2429 = vadd.f32 %v2398, %v2421
        %v2430 = vadd.f32 %v2399, %v2422
        %v2431 = vadd.f32 %v2400, %v2423
        %v2432 = vadd.f32 %v2401, %v2424
        %v2433 = vadd.f32 %v2402, %v2425
        %v2434 = vadd.f32 %v2403, %v2426
        %v2435 = vld [vmem:[%s2405 + $0x1] sm:$0xff]
        %v2436 = vld [vmem:[%s2405 + $0x11] sm:$0xff]
        %v2437 = vld [vmem:[%s2405 + $0x21] sm:$0xff]
        %v2438 = vld [vmem:[%s2405 + $0x31] sm:$0xff]
        %v2439 = vld [vmem:[%s2405 + $0x41] sm:$0xff]
        %v2440 = vld [vmem:[%s2405 + $0x51] sm:$0xff]
        %v2441 = vld [vmem:[%s2405 + $0x61] sm:$0xff]
        %v2442 = vld [vmem:[%s2405 + $0x71] sm:$0xff]
        %v2443 = vld [vmem:[%s6 + $0x16] sm:$0x1]
        %v2444 = vlaneseq
        %v2445 = vshrl.u32 %v2444, 7
        %v2446 = vsub.s32 0, %v2445
        %v2447 = vrot.slane %v2443, %v2446
        %v2448 = vmul.f32 %v2435, %v2447
        %v2449 = vmul.f32 %v2436, %v2447
        %v2450 = vmul.f32 %v2437, %v2447
        %v2451 = vmul.f32 %v2438, %v2447
        %v2452 = vmul.f32 %v2439, %v2447
        %v2453 = vmul.f32 %v2440, %v2447
        %v2454 = vmul.f32 %v2441, %v2447
        %v2455 = vmul.f32 %v2442, %v2447
        %v2456 = vadd.f32 %v2427, %v2448
        %v2457 = vadd.f32 %v2428, %v2449
        %v2458 = vadd.f32 %v2429, %v2450
        %v2459 = vadd.f32 %v2430, %v2451
        %v2460 = vadd.f32 %v2431, %v2452
        %v2461 = vadd.f32 %v2432, %v2453
        %v2462 = vadd.f32 %v2433, %v2454
        %v2463 = vadd.f32 %v2434, %v2455
        %v2464 = vld [vmem:[%s2405 + $0x2] sm:$0xff]
        %v2465 = vld [vmem:[%s2405 + $0x12] sm:$0xff]
        %v2466 = vld [vmem:[%s2405 + $0x22] sm:$0xff]
        %v2467 = vld [vmem:[%s2405 + $0x32] sm:$0xff]
        %v2468 = vld [vmem:[%s2405 + $0x42] sm:$0xff]
        %v2469 = vld [vmem:[%s2405 + $0x52] sm:$0xff]
        %v2470 = vld [vmem:[%s2405 + $0x62] sm:$0xff]
        %v2471 = vld [vmem:[%s2405 + $0x72] sm:$0xff]
        %v2472 = vld [vmem:[%s6 + $0x17] sm:$0x1]
        %v2473 = vlaneseq
        %v2474 = vshrl.u32 %v2473, 7
        %v2475 = vsub.s32 0, %v2474
        %v2476 = vrot.slane %v2472, %v2475
        %v2477 = vmul.f32 %v2464, %v2476
        %v2478 = vmul.f32 %v2465, %v2476
        %v2479 = vmul.f32 %v2466, %v2476
        %v2480 = vmul.f32 %v2467, %v2476
        %v2481 = vmul.f32 %v2468, %v2476
        %v2482 = vmul.f32 %v2469, %v2476
        %v2483 = vmul.f32 %v2470, %v2476
        %v2484 = vmul.f32 %v2471, %v2476
        %v2485 = vadd.f32 %v2456, %v2477
        %v2486 = vadd.f32 %v2457, %v2478
        %v2487 = vadd.f32 %v2458, %v2479
        %v2488 = vadd.f32 %v2459, %v2480
        %v2489 = vadd.f32 %v2460, %v2481
        %v2490 = vadd.f32 %v2461, %v2482
        %v2491 = vadd.f32 %v2462, %v2483
        %v2492 = vadd.f32 %v2463, %v2484
        %s2493 = sadd.s32 32, %s2315
        %s2494 = scalar_lea.vmem [#allocation2], %s2493
        %v2495 = vld [vmem:[%s2494] sm:$0xff]
        %v2496 = vld [vmem:[%s2494 + $0x10] sm:$0xff]
        %v2497 = vld [vmem:[%s2494 + $0x20] sm:$0xff]
        %v2498 = vld [vmem:[%s2494 + $0x30] sm:$0xff]
        %v2499 = vld [vmem:[%s2494 + $0x40] sm:$0xff]
        %v2500 = vld [vmem:[%s2494 + $0x50] sm:$0xff]
        %v2501 = vld [vmem:[%s2494 + $0x60] sm:$0xff]
        %v2502 = vld [vmem:[%s2494 + $0x70] sm:$0xff]
        %v2503 = vld [vmem:[%s6 + $0x18] sm:$0x1]
        %v2504 = vlaneseq
        %v2505 = vshrl.u32 %v2504, 7
        %v2506 = vsub.s32 0, %v2505
        %v2507 = vrot.slane %v2503, %v2506
        %v2508 = vmul.f32 %v2495, %v2507
        %v2509 = vmul.f32 %v2496, %v2507
        %v2510 = vmul.f32 %v2497, %v2507
        %v2511 = vmul.f32 %v2498, %v2507
        %v2512 = vmul.f32 %v2499, %v2507
        %v2513 = vmul.f32 %v2500, %v2507
        %v2514 = vmul.f32 %v2501, %v2507
        %v2515 = vmul.f32 %v2502, %v2507
        %v2516 = vadd.f32 %v2485, %v2508
        %v2517 = vadd.f32 %v2486, %v2509
        %v2518 = vadd.f32 %v2487, %v2510
        %v2519 = vadd.f32 %v2488, %v2511
        %v2520 = vadd.f32 %v2489, %v2512
        %v2521 = vadd.f32 %v2490, %v2513
        %v2522 = vadd.f32 %v2491, %v2514
        %v2523 = vadd.f32 %v2492, %v2515
        %v2524 = vld [vmem:[%s2494 + $0x1] sm:$0xff]
        %v2525 = vld [vmem:[%s2494 + $0x11] sm:$0xff]
        %v2526 = vld [vmem:[%s2494 + $0x21] sm:$0xff]
        %v2527 = vld [vmem:[%s2494 + $0x31] sm:$0xff]
        %v2528 = vld [vmem:[%s2494 + $0x41] sm:$0xff]
        %v2529 = vld [vmem:[%s2494 + $0x51] sm:$0xff]
        %v2530 = vld [vmem:[%s2494 + $0x61] sm:$0xff]
        %v2531 = vld [vmem:[%s2494 + $0x71] sm:$0xff]
        %v2532 = vld [vmem:[%s6 + $0x19] sm:$0x1]
        %v2533 = vlaneseq
        %v2534 = vshrl.u32 %v2533, 7
        %v2535 = vsub.s32 0, %v2534
        %v2536 = vrot.slane %v2532, %v2535
        %v2537 = vmul.f32 %v2524, %v2536
        %v2538 = vmul.f32 %v2525, %v2536
        %v2539 = vmul.f32 %v2526, %v2536
        %v2540 = vmul.f32 %v2527, %v2536
        %v2541 = vmul.f32 %v2528, %v2536
        %v2542 = vmul.f32 %v2529, %v2536
        %v2543 = vmul.f32 %v2530, %v2536
        %v2544 = vmul.f32 %v2531, %v2536
        %v2545 = vadd.f32 %v2516, %v2537
        %v2546 = vadd.f32 %v2517, %v2538
        %v2547 = vadd.f32 %v2518, %v2539
        %v2548 = vadd.f32 %v2519, %v2540
        %v2549 = vadd.f32 %v2520, %v2541
        %v2550 = vadd.f32 %v2521, %v2542
        %v2551 = vadd.f32 %v2522, %v2543
        %v2552 = vadd.f32 %v2523, %v2544
        %v2553 = vld [vmem:[%s2494 + $0x2] sm:$0xff]
        %v2554 = vld [vmem:[%s2494 + $0x12] sm:$0xff]
        %v2555 = vld [vmem:[%s2494 + $0x22] sm:$0xff]
        %v2556 = vld [vmem:[%s2494 + $0x32] sm:$0xff]
        %v2557 = vld [vmem:[%s2494 + $0x42] sm:$0xff]
        %v2558 = vld [vmem:[%s2494 + $0x52] sm:$0xff]
        %v2559 = vld [vmem:[%s2494 + $0x62] sm:$0xff]
        %v2560 = vld [vmem:[%s2494 + $0x72] sm:$0xff]
        %v2561 = vld [vmem:[%s6 + $0x1a] sm:$0x1]
        %v2562 = vlaneseq
        %v2563 = vshrl.u32 %v2562, 7
        %v2564 = vsub.s32 0, %v2563
        %v2565 = vrot.slane %v2561, %v2564
        %v2566 = vmul.f32 %v2553, %v2565
        %v2567 = vmul.f32 %v2554, %v2565
        %v2568 = vmul.f32 %v2555, %v2565
        %v2569 = vmul.f32 %v2556, %v2565
        %v2570 = vmul.f32 %v2557, %v2565
        %v2571 = vmul.f32 %v2558, %v2565
        %v2572 = vmul.f32 %v2559, %v2565
        %v2573 = vmul.f32 %v2560, %v2565
        %v2574 = vadd.f32 %v2545, %v2566
        %v2575 = vadd.f32 %v2546, %v2567
        %v2576 = vadd.f32 %v2547, %v2568
        %v2577 = vadd.f32 %v2548, %v2569
        %v2578 = vadd.f32 %v2549, %v2570
        %v2579 = vadd.f32 %v2550, %v2571
        %v2580 = vadd.f32 %v2551, %v2572
        %v2581 = vadd.f32 %v2552, %v2573
        %v2582 = vld [vmem:[%s7] sm:$0x1]
        %v2584 = vlaneseq
        %v2585 = vshrl.u32 %v2584, 7
        %v2586 = vsub.s32 0, %v2585
        %v2587 = vrot.slane %v2582, %v2586
        %v2589 = vmul.f32 %v2574, %v2587
        %v2590 = vmul.f32 %v2575, %v2587
        %v2591 = vmul.f32 %v2576, %v2587
        %v2592 = vmul.f32 %v2577, %v2587
        %v2593 = vmul.f32 %v2578, %v2587
        %v2594 = vmul.f32 %v2579, %v2587
        %v2595 = vmul.f32 %v2580, %v2587
        %v2596 = vmul.f32 %v2581, %v2587
        %v2597 = vld [vmem:[%s8] sm:$0x1]
        %v2599 = vlaneseq
        %v2600 = vshrl.u32 %v2599, 7
        %v2601 = vsub.s32 0, %v2600
        %v2602 = vrot.slane %v2597, %v2601
        %v2604 = vadd.f32 %v2589, %v2602
        %v2605 = vadd.f32 %v2590, %v2602
        %v2606 = vadd.f32 %v2591, %v2602
        %v2607 = vadd.f32 %v2592, %v2602
        %v2608 = vadd.f32 %v2593, %v2602
        %v2609 = vadd.f32 %v2594, %v2602
        %v2610 = vadd.f32 %v2595, %v2602
        %v2611 = vadd.f32 %v2596, %v2602
        %v2612 = vmax.f32 %v2604, 0.0
        %v2613 = vmax.f32 %v2605, 0.0
        %v2614 = vmax.f32 %v2606, 0.0
        %v2615 = vmax.f32 %v2607, 0.0
        %v2616 = vmax.f32 %v2608, 0.0
        %v2617 = vmax.f32 %v2609, 0.0
        %v2618 = vmax.f32 %v2610, 0.0
        %v2619 = vmax.f32 %v2611, 0.0
        %v2620 = vld [vmem:[%s9] sm:$0x1]
        %2622 = vset.pattern.permute.xlu0 0
        %2623 = vperm.xlu0 %2622, %v2612
        %v2624 = vpop.permute.xlu0 %2623
        %2627 = vset.pattern.permute.xlu0 0
        %2628 = vperm.xlu0 %2627, %v2613
        %v2629 = vpop.permute.xlu0 %2628
        %2632 = vset.pattern.permute.xlu0 0
        %2633 = vperm.xlu0 %2632, %v2614
        %v2634 = vpop.permute.xlu0 %2633
        %2637 = vset.pattern.permute.xlu0 0
        %2638 = vperm.xlu0 %2637, %v2615
        %v2639 = vpop.permute.xlu0 %2638
        %2642 = vset.pattern.permute.xlu0 0
        %2643 = vperm.xlu0 %2642, %v2616
        %v2644 = vpop.permute.xlu0 %2643
        %2647 = vset.pattern.permute.xlu0 0
        %2648 = vperm.xlu0 %2647, %v2617
        %v2649 = vpop.permute.xlu0 %2648
        %2652 = vset.pattern.permute.xlu0 0
        %2653 = vperm.xlu0 %2652, %v2618
        %v2654 = vpop.permute.xlu0 %2653
        %2657 = vset.pattern.permute.xlu0 0
        %2658 = vperm.xlu0 %2657, %v2619
        %v2659 = vpop.permute.xlu0 %2658
        %v2661 = vlaneseq
        %v2662 = vshrl.u32 %v2661, 7
        %v2663 = vsub.s32 0, %v2662
        %v2664 = vrot.slane %v2620, %v2663
        %v2665 = vmul.f32 %v2624, %v2664
        %v2666 = vmul.f32 %v2629, %v2664
        %v2667 = vmul.f32 %v2634, %v2664
        %v2668 = vmul.f32 %v2639, %v2664
        %v2669 = vmul.f32 %v2644, %v2664
        %v2670 = vmul.f32 %v2649, %v2664
        %v2671 = vmul.f32 %v2654, %v2664
        %v2672 = vmul.f32 %v2659, %v2664
        %v2673 = vadd.f32 %v2665, 0.0
        %v2674 = vadd.f32 %v2666, 0.0
        %v2675 = vadd.f32 %v2667, 0.0
        %v2676 = vadd.f32 %v2668, 0.0
        %v2677 = vadd.f32 %v2669, 0.0
        %v2678 = vadd.f32 %v2670, 0.0
        %v2679 = vadd.f32 %v2671, 0.0
        %v2680 = vadd.f32 %v2672, 0.0
        %v2681 = vld [vmem:[%s9 + $0x1] sm:$0x1]
        %2682 = vset.pattern.permute.xlu0 1
        %2683 = vperm.xlu0 %2682, %v2612
        %v2684 = vpop.permute.xlu0 %2683
        %2686 = vset.pattern.permute.xlu0 1
        %2687 = vperm.xlu0 %2686, %v2613
        %v2688 = vpop.permute.xlu0 %2687
        %2690 = vset.pattern.permute.xlu0 1
        %2691 = vperm.xlu0 %2690, %v2614
        %v2692 = vpop.permute.xlu0 %2691
        %2694 = vset.pattern.permute.xlu0 1
        %2695 = vperm.xlu0 %2694, %v2615
        %v2696 = vpop.permute.xlu0 %2695
        %2698 = vset.pattern.permute.xlu0 1
        %2699 = vperm.xlu0 %2698, %v2616
        %v2700 = vpop.permute.xlu0 %2699
        %2702 = vset.pattern.permute.xlu0 1
        %2703 = vperm.xlu0 %2702, %v2617
        %v2704 = vpop.permute.xlu0 %2703
        %2706 = vset.pattern.permute.xlu0 1
        %2707 = vperm.xlu0 %2706, %v2618
        %v2708 = vpop.permute.xlu0 %2707
        %2710 = vset.pattern.permute.xlu0 1
        %2711 = vperm.xlu0 %2710, %v2619
        %v2712 = vpop.permute.xlu0 %2711
        %v2714 = vlaneseq
        %v2715 = vshrl.u32 %v2714, 7
        %v2716 = vsub.s32 0, %v2715
        %v2717 = vrot.slane %v2681, %v2716
        %v2718 = vmul.f32 %v2684, %v2717
        %v2719 = vmul.f32 %v2688, %v2717
        %v2720 = vmul.f32 %v2692, %v2717
        %v2721 = vmul.f32 %v2696, %v2717
        %v2722 = vmul.f32 %v2700, %v2717
        %v2723 = vmul.f32 %v2704, %v2717
        %v2724 = vmul.f32 %v2708, %v2717
        %v2725 = vmul.f32 %v2712, %v2717
        %v2726 = vadd.f32 %v2673, %v2718
        %v2727 = vadd.f32 %v2674, %v2719
        %v2728 = vadd.f32 %v2675, %v2720
        %v2729 = vadd.f32 %v2676, %v2721
        %v2730 = vadd.f32 %v2677, %v2722
        %v2731 = vadd.f32 %v2678, %v2723
        %v2732 = vadd.f32 %v2679, %v2724
        %v2733 = vadd.f32 %v2680, %v2725
        %v2734 = vld [vmem:[%s9 + $0x2] sm:$0x1]
        %2735 = vset.pattern.permute.xlu0 2
        %2736 = vperm.xlu0 %2735, %v2612
        %v2737 = vpop.permute.xlu0 %2736
        %2739 = vset.pattern.permute.xlu0 2
        %2740 = vperm.xlu0 %2739, %v2613
        %v2741 = vpop.permute.xlu0 %2740
        %2743 = vset.pattern.permute.xlu0 2
        %2744 = vperm.xlu0 %2743, %v2614
        %v2745 = vpop.permute.xlu0 %2744
        %2747 = vset.pattern.permute.xlu0 2
        %2748 = vperm.xlu0 %2747, %v2615
        %v2749 = vpop.permute.xlu0 %2748
        %2751 = vset.pattern.permute.xlu0 2
        %2752 = vperm.xlu0 %2751, %v2616
        %v2753 = vpop.permute.xlu0 %2752
        %2755 = vset.pattern.permute.xlu0 2
        %2756 = vperm.xlu0 %2755, %v2617
        %v2757 = vpop.permute.xlu0 %2756
        %2759 = vset.pattern.permute.xlu0 2
        %2760 = vperm.xlu0 %2759, %v2618
        %v2761 = vpop.permute.xlu0 %2760
        %2763 = vset.pattern.permute.xlu0 2
        %2764 = vperm.xlu0 %2763, %v2619
        %v2765 = vpop.permute.xlu0 %2764
        %v2767 = vlaneseq
        %v2768 = vshrl.u32 %v2767, 7
        %v2769 = vsub.s32 0, %v2768
        %v2770 = vrot.slane %v2734, %v2769
        %v2771 = vmul.f32 %v2737, %v2770
        %v2772 = vmul.f32 %v2741, %v2770
        %v2773 = vmul.f32 %v2745, %v2770
        %v2774 = vmul.f32 %v2749, %v2770
        %v2775 = vmul.f32 %v2753, %v2770
        %v2776 = vmul.f32 %v2757, %v2770
        %v2777 = vmul.f32 %v2761, %v2770
        %v2778 = vmul.f32 %v2765, %v2770
        %v2779 = vadd.f32 %v2726, %v2771
        %v2780 = vadd.f32 %v2727, %v2772
        %v2781 = vadd.f32 %v2728, %v2773
        %v2782 = vadd.f32 %v2729, %v2774
        %v2783 = vadd.f32 %v2730, %v2775
        %v2784 = vadd.f32 %v2731, %v2776
        %v2785 = vadd.f32 %v2732, %v2777
        %v2786 = vadd.f32 %v2733, %v2778
        %v2787 = vld [vmem:[%s9 + $0x3] sm:$0x1]
        %2788 = vset.pattern.permute.xlu0 3
        %2789 = vperm.xlu0 %2788, %v2612
        %v2790 = vpop.permute.xlu0 %2789
        %2792 = vset.pattern.permute.xlu0 3
        %2793 = vperm.xlu0 %2792, %v2613
        %v2794 = vpop.permute.xlu0 %2793
        %2796 = vset.pattern.permute.xlu0 3
        %2797 = vperm.xlu0 %2796, %v2614
        %v2798 = vpop.permute.xlu0 %2797
        %2800 = vset.pattern.permute.xlu0 3
        %2801 = vperm.xlu0 %2800, %v2615
        %v2802 = vpop.permute.xlu0 %2801
        %2804 = vset.pattern.permute.xlu0 3
        %2805 = vperm.xlu0 %2804, %v2616
        %v2806 = vpop.permute.xlu0 %2805
        %2808 = vset.pattern.permute.xlu0 3
        %2809 = vperm.xlu0 %2808, %v2617
        %v2810 = vpop.permute.xlu0 %2809
        %2812 = vset.pattern.permute.xlu0 3
        %2813 = vperm.xlu0 %2812, %v2618
        %v2814 = vpop.permute.xlu0 %2813
        %2816 = vset.pattern.permute.xlu0 3
        %2817 = vperm.xlu0 %2816, %v2619
        %v2818 = vpop.permute.xlu0 %2817
        %v2820 = vlaneseq
        %v2821 = vshrl.u32 %v2820, 7
        %v2822 = vsub.s32 0, %v2821
        %v2823 = vrot.slane %v2787, %v2822
        %v2824 = vmul.f32 %v2790, %v2823
        %v2825 = vmul.f32 %v2794, %v2823
        %v2826 = vmul.f32 %v2798, %v2823
        %v2827 = vmul.f32 %v2802, %v2823
        %v2828 = vmul.f32 %v2806, %v2823
        %v2829 = vmul.f32 %v2810, %v2823
        %v2830 = vmul.f32 %v2814, %v2823
        %v2831 = vmul.f32 %v2818, %v2823
        %v2832 = vadd.f32 %v2779, %v2824
        %v2833 = vadd.f32 %v2780, %v2825
        %v2834 = vadd.f32 %v2781, %v2826
        %v2835 = vadd.f32 %v2782, %v2827
        %v2836 = vadd.f32 %v2783, %v2828
        %v2837 = vadd.f32 %v2784, %v2829
        %v2838 = vadd.f32 %v2785, %v2830
        %v2839 = vadd.f32 %v2786, %v2831
        %v2840 = vld [vmem:[%s9 + $0x4] sm:$0x1]
        %2841 = vset.pattern.permute.xlu0 4
        %2842 = vperm.xlu0 %2841, %v2612
        %v2843 = vpop.permute.xlu0 %2842
        %2845 = vset.pattern.permute.xlu0 4
        %2846 = vperm.xlu0 %2845, %v2613
        %v2847 = vpop.permute.xlu0 %2846
        %2849 = vset.pattern.permute.xlu0 4
        %2850 = vperm.xlu0 %2849, %v2614
        %v2851 = vpop.permute.xlu0 %2850
        %2853 = vset.pattern.permute.xlu0 4
        %2854 = vperm.xlu0 %2853, %v2615
        %v2855 = vpop.permute.xlu0 %2854
        %2857 = vset.pattern.permute.xlu0 4
        %2858 = vperm.xlu0 %2857, %v2616
        %v2859 = vpop.permute.xlu0 %2858
        %2861 = vset.pattern.permute.xlu0 4
        %2862 = vperm.xlu0 %2861, %v2617
        %v2863 = vpop.permute.xlu0 %2862
        %2865 = vset.pattern.permute.xlu0 4
        %2866 = vperm.xlu0 %2865, %v2618
        %v2867 = vpop.permute.xlu0 %2866
        %2869 = vset.pattern.permute.xlu0 4
        %2870 = vperm.xlu0 %2869, %v2619
        %v2871 = vpop.permute.xlu0 %2870
        %v2873 = vlaneseq
        %v2874 = vshrl.u32 %v2873, 7
        %v2875 = vsub.s32 0, %v2874
        %v2876 = vrot.slane %v2840, %v2875
        %v2877 = vmul.f32 %v2843, %v2876
        %v2878 = vmul.f32 %v2847, %v2876
        %v2879 = vmul.f32 %v2851, %v2876
        %v2880 = vmul.f32 %v2855, %v2876
        %v2881 = vmul.f32 %v2859, %v2876
        %v2882 = vmul.f32 %v2863, %v2876
        %v2883 = vmul.f32 %v2867, %v2876
        %v2884 = vmul.f32 %v2871, %v2876
        %v2885 = vadd.f32 %v2832, %v2877
        %v2886 = vadd.f32 %v2833, %v2878
        %v2887 = vadd.f32 %v2834, %v2879
        %v2888 = vadd.f32 %v2835, %v2880
        %v2889 = vadd.f32 %v2836, %v2881
        %v2890 = vadd.f32 %v2837, %v2882
        %v2891 = vadd.f32 %v2838, %v2883
        %v2892 = vadd.f32 %v2839, %v2884
        %v2893 = vld [vmem:[%s9 + $0x5] sm:$0x1]
        %2894 = vset.pattern.permute.xlu0 5
        %2895 = vperm.xlu0 %2894, %v2612
        %v2896 = vpop.permute.xlu0 %2895
        %2898 = vset.pattern.permute.xlu0 5
        %2899 = vperm.xlu0 %2898, %v2613
        %v2900 = vpop.permute.xlu0 %2899
        %2902 = vset.pattern.permute.xlu0 5
        %2903 = vperm.xlu0 %2902, %v2614
        %v2904 = vpop.permute.xlu0 %2903
        %2906 = vset.pattern.permute.xlu0 5
        %2907 = vperm.xlu0 %2906, %v2615
        %v2908 = vpop.permute.xlu0 %2907
        %2910 = vset.pattern.permute.xlu0 5
        %2911 = vperm.xlu0 %2910, %v2616
        %v2912 = vpop.permute.xlu0 %2911
        %2914 = vset.pattern.permute.xlu0 5
        %2915 = vperm.xlu0 %2914, %v2617
        %v2916 = vpop.permute.xlu0 %2915
        %2918 = vset.pattern.permute.xlu0 5
        %2919 = vperm.xlu0 %2918, %v2618
        %v2920 = vpop.permute.xlu0 %2919
        %2922 = vset.pattern.permute.xlu0 5
        %2923 = vperm.xlu0 %2922, %v2619
        %v2924 = vpop.permute.xlu0 %2923
        %v2926 = vlaneseq
        %v2927 = vshrl.u32 %v2926, 7
        %v2928 = vsub.s32 0, %v2927
        %v2929 = vrot.slane %v2893, %v2928
        %v2930 = vmul.f32 %v2896, %v2929
        %v2931 = vmul.f32 %v2900, %v2929
        %v2932 = vmul.f32 %v2904, %v2929
        %v2933 = vmul.f32 %v2908, %v2929
        %v2934 = vmul.f32 %v2912, %v2929
        %v2935 = vmul.f32 %v2916, %v2929
        %v2936 = vmul.f32 %v2920, %v2929
        %v2937 = vmul.f32 %v2924, %v2929
        %v2938 = vadd.f32 %v2885, %v2930
        %v2939 = vadd.f32 %v2886, %v2931
        %v2940 = vadd.f32 %v2887, %v2932
        %v2941 = vadd.f32 %v2888, %v2933
        %v2942 = vadd.f32 %v2889, %v2934
        %v2943 = vadd.f32 %v2890, %v2935
        %v2944 = vadd.f32 %v2891, %v2936
        %v2945 = vadd.f32 %v2892, %v2937
        %v2946 = vld [vmem:[%s9 + $0x6] sm:$0x1]
        %2947 = vset.pattern.permute.xlu0 6
        %2948 = vperm.xlu0 %2947, %v2612
        %v2949 = vpop.permute.xlu0 %2948
        %2951 = vset.pattern.permute.xlu0 6
        %2952 = vperm.xlu0 %2951, %v2613
        %v2953 = vpop.permute.xlu0 %2952
        %2955 = vset.pattern.permute.xlu0 6
        %2956 = vperm.xlu0 %2955, %v2614
        %v2957 = vpop.permute.xlu0 %2956
        %2959 = vset.pattern.permute.xlu0 6
        %2960 = vperm.xlu0 %2959, %v2615
        %v2961 = vpop.permute.xlu0 %2960
        %2963 = vset.pattern.permute.xlu0 6
        %2964 = vperm.xlu0 %2963, %v2616
        %v2965 = vpop.permute.xlu0 %2964
        %2967 = vset.pattern.permute.xlu0 6
        %2968 = vperm.xlu0 %2967, %v2617
        %v2969 = vpop.permute.xlu0 %2968
        %2971 = vset.pattern.permute.xlu0 6
        %2972 = vperm.xlu0 %2971, %v2618
        %v2973 = vpop.permute.xlu0 %2972
        %2975 = vset.pattern.permute.xlu0 6
        %2976 = vperm.xlu0 %2975, %v2619
        %v2977 = vpop.permute.xlu0 %2976
        %v2979 = vlaneseq
        %v2980 = vshrl.u32 %v2979, 7
        %v2981 = vsub.s32 0, %v2980
        %v2982 = vrot.slane %v2946, %v2981
        %v2983 = vmul.f32 %v2949, %v2982
        %v2984 = vmul.f32 %v2953, %v2982
        %v2985 = vmul.f32 %v2957, %v2982
        %v2986 = vmul.f32 %v2961, %v2982
        %v2987 = vmul.f32 %v2965, %v2982
        %v2988 = vmul.f32 %v2969, %v2982
        %v2989 = vmul.f32 %v2973, %v2982
        %v2990 = vmul.f32 %v2977, %v2982
        %v2991 = vadd.f32 %v2938, %v2983
        %v2992 = vadd.f32 %v2939, %v2984
        %v2993 = vadd.f32 %v2940, %v2985
        %v2994 = vadd.f32 %v2941, %v2986
        %v2995 = vadd.f32 %v2942, %v2987
        %v2996 = vadd.f32 %v2943, %v2988
        %v2997 = vadd.f32 %v2944, %v2989
        %v2998 = vadd.f32 %v2945, %v2990
        %v2999 = vld [vmem:[%s9 + $0x7] sm:$0x1]
        %3000 = vset.pattern.permute.xlu0 7
        %3001 = vperm.xlu0 %3000, %v2612
        %v3002 = vpop.permute.xlu0 %3001
        %3004 = vset.pattern.permute.xlu0 7
        %3005 = vperm.xlu0 %3004, %v2613
        %v3006 = vpop.permute.xlu0 %3005
        %3008 = vset.pattern.permute.xlu0 7
        %3009 = vperm.xlu0 %3008, %v2614
        %v3010 = vpop.permute.xlu0 %3009
        %3012 = vset.pattern.permute.xlu0 7
        %3013 = vperm.xlu0 %3012, %v2615
        %v3014 = vpop.permute.xlu0 %3013
        %3016 = vset.pattern.permute.xlu0 7
        %3017 = vperm.xlu0 %3016, %v2616
        %v3018 = vpop.permute.xlu0 %3017
        %3020 = vset.pattern.permute.xlu0 7
        %3021 = vperm.xlu0 %3020, %v2617
        %v3022 = vpop.permute.xlu0 %3021
        %3024 = vset.pattern.permute.xlu0 7
        %3025 = vperm.xlu0 %3024, %v2618
        %v3026 = vpop.permute.xlu0 %3025
        %3028 = vset.pattern.permute.xlu0 7
        %3029 = vperm.xlu0 %3028, %v2619
        %v3030 = vpop.permute.xlu0 %3029
        %v3032 = vlaneseq
        %v3033 = vshrl.u32 %v3032, 7
        %v3034 = vsub.s32 0, %v3033
        %v3035 = vrot.slane %v2999, %v3034
        %v3036 = vmul.f32 %v3002, %v3035
        %v3037 = vmul.f32 %v3006, %v3035
        %v3038 = vmul.f32 %v3010, %v3035
        %v3039 = vmul.f32 %v3014, %v3035
        %v3040 = vmul.f32 %v3018, %v3035
        %v3041 = vmul.f32 %v3022, %v3035
        %v3042 = vmul.f32 %v3026, %v3035
        %v3043 = vmul.f32 %v3030, %v3035
        %v3044 = vadd.f32 %v2991, %v3036
        %v3045 = vadd.f32 %v2992, %v3037
        %v3046 = vadd.f32 %v2993, %v3038
        %v3047 = vadd.f32 %v2994, %v3039
        %v3048 = vadd.f32 %v2995, %v3040
        %v3049 = vadd.f32 %v2996, %v3041
        %v3050 = vadd.f32 %v2997, %v3042
        %v3051 = vadd.f32 %v2998, %v3043
        %v3052 = vld [vmem:[%s9 + $0x8] sm:$0x1]
        %3053 = vset.pattern.permute.xlu0 8
        %3054 = vperm.xlu0 %3053, %v2612
        %v3055 = vpop.permute.xlu0 %3054
        %3057 = vset.pattern.permute.xlu0 8
        %3058 = vperm.xlu0 %3057, %v2613
        %v3059 = vpop.permute.xlu0 %3058
        %3061 = vset.pattern.permute.xlu0 8
        %3062 = vperm.xlu0 %3061, %v2614
        %v3063 = vpop.permute.xlu0 %3062
        %3065 = vset.pattern.permute.xlu0 8
        %3066 = vperm.xlu0 %3065, %v2615
        %v3067 = vpop.permute.xlu0 %3066
        %3069 = vset.pattern.permute.xlu0 8
        %3070 = vperm.xlu0 %3069, %v2616
        %v3071 = vpop.permute.xlu0 %3070
        %3073 = vset.pattern.permute.xlu0 8
        %3074 = vperm.xlu0 %3073, %v2617
        %v3075 = vpop.permute.xlu0 %3074
        %3077 = vset.pattern.permute.xlu0 8
        %3078 = vperm.xlu0 %3077, %v2618
        %v3079 = vpop.permute.xlu0 %3078
        %3081 = vset.pattern.permute.xlu0 8
        %3082 = vperm.xlu0 %3081, %v2619
        %v3083 = vpop.permute.xlu0 %3082
        %v3085 = vlaneseq
        %v3086 = vshrl.u32 %v3085, 7
        %v3087 = vsub.s32 0, %v3086
        %v3088 = vrot.slane %v3052, %v3087
        %v3089 = vmul.f32 %v3055, %v3088
        %v3090 = vmul.f32 %v3059, %v3088
        %v3091 = vmul.f32 %v3063, %v3088
        %v3092 = vmul.f32 %v3067, %v3088
        %v3093 = vmul.f32 %v3071, %v3088
        %v3094 = vmul.f32 %v3075, %v3088
        %v3095 = vmul.f32 %v3079, %v3088
        %v3096 = vmul.f32 %v3083, %v3088
        %v3097 = vadd.f32 %v3044, %v3089
        %v3098 = vadd.f32 %v3045, %v3090
        %v3099 = vadd.f32 %v3046, %v3091
        %v3100 = vadd.f32 %v3047, %v3092
        %v3101 = vadd.f32 %v3048, %v3093
        %v3102 = vadd.f32 %v3049, %v3094
        %v3103 = vadd.f32 %v3050, %v3095
        %v3104 = vadd.f32 %v3051, %v3096
        %v3105 = vld [vmem:[%s9 + $0x9] sm:$0x1]
        %3106 = vset.pattern.permute.xlu0 9
        %3107 = vperm.xlu0 %3106, %v2612
        %v3108 = vpop.permute.xlu0 %3107
        %3110 = vset.pattern.permute.xlu0 9
        %3111 = vperm.xlu0 %3110, %v2613
        %v3112 = vpop.permute.xlu0 %3111
        %3114 = vset.pattern.permute.xlu0 9
        %3115 = vperm.xlu0 %3114, %v2614
        %v3116 = vpop.permute.xlu0 %3115
        %3118 = vset.pattern.permute.xlu0 9
        %3119 = vperm.xlu0 %3118, %v2615
        %v3120 = vpop.permute.xlu0 %3119
        %3122 = vset.pattern.permute.xlu0 9
        %3123 = vperm.xlu0 %3122, %v2616
        %v3124 = vpop.permute.xlu0 %3123
        %3126 = vset.pattern.permute.xlu0 9
        %3127 = vperm.xlu0 %3126, %v2617
        %v3128 = vpop.permute.xlu0 %3127
        %3130 = vset.pattern.permute.xlu0 9
        %3131 = vperm.xlu0 %3130, %v2618
        %v3132 = vpop.permute.xlu0 %3131
        %3134 = vset.pattern.permute.xlu0 9
        %3135 = vperm.xlu0 %3134, %v2619
        %v3136 = vpop.permute.xlu0 %3135
        %v3138 = vlaneseq
        %v3139 = vshrl.u32 %v3138, 7
        %v3140 = vsub.s32 0, %v3139
        %v3141 = vrot.slane %v3105, %v3140
        %v3142 = vmul.f32 %v3108, %v3141
        %v3143 = vmul.f32 %v3112, %v3141
        %v3144 = vmul.f32 %v3116, %v3141
        %v3145 = vmul.f32 %v3120, %v3141
        %v3146 = vmul.f32 %v3124, %v3141
        %v3147 = vmul.f32 %v3128, %v3141
        %v3148 = vmul.f32 %v3132, %v3141
        %v3149 = vmul.f32 %v3136, %v3141
        %v3150 = vadd.f32 %v3097, %v3142
        %v3151 = vadd.f32 %v3098, %v3143
        %v3152 = vadd.f32 %v3099, %v3144
        %v3153 = vadd.f32 %v3100, %v3145
        %v3154 = vadd.f32 %v3101, %v3146
        %v3155 = vadd.f32 %v3102, %v3147
        %v3156 = vadd.f32 %v3103, %v3148
        %v3157 = vadd.f32 %v3104, %v3149
        %v3158 = vld [vmem:[%s9 + $0xa] sm:$0x1]
        %3159 = vset.pattern.permute.xlu0 10
        %3160 = vperm.xlu0 %3159, %v2612
        %v3161 = vpop.permute.xlu0 %3160
        %3163 = vset.pattern.permute.xlu0 10
        %3164 = vperm.xlu0 %3163, %v2613
        %v3165 = vpop.permute.xlu0 %3164
        %3167 = vset.pattern.permute.xlu0 10
        %3168 = vperm.xlu0 %3167, %v2614
        %v3169 = vpop.permute.xlu0 %3168
        %3171 = vset.pattern.permute.xlu0 10
        %3172 = vperm.xlu0 %3171, %v2615
        %v3173 = vpop.permute.xlu0 %3172
        %3175 = vset.pattern.permute.xlu0 10
        %3176 = vperm.xlu0 %3175, %v2616
        %v3177 = vpop.permute.xlu0 %3176
        %3179 = vset.pattern.permute.xlu0 10
        %3180 = vperm.xlu0 %3179, %v2617
        %v3181 = vpop.permute.xlu0 %3180
        %3183 = vset.pattern.permute.xlu0 10
        %3184 = vperm.xlu0 %3183, %v2618
        %v3185 = vpop.permute.xlu0 %3184
        %3187 = vset.pattern.permute.xlu0 10
        %3188 = vperm.xlu0 %3187, %v2619
        %v3189 = vpop.permute.xlu0 %3188
        %v3191 = vlaneseq
        %v3192 = vshrl.u32 %v3191, 7
        %v3193 = vsub.s32 0, %v3192
        %v3194 = vrot.slane %v3158, %v3193
        %v3195 = vmul.f32 %v3161, %v3194
        %v3196 = vmul.f32 %v3165, %v3194
        %v3197 = vmul.f32 %v3169, %v3194
        %v3198 = vmul.f32 %v3173, %v3194
        %v3199 = vmul.f32 %v3177, %v3194
        %v3200 = vmul.f32 %v3181, %v3194
        %v3201 = vmul.f32 %v3185, %v3194
        %v3202 = vmul.f32 %v3189, %v3194
        %v3203 = vadd.f32 %v3150, %v3195
        %v3204 = vadd.f32 %v3151, %v3196
        %v3205 = vadd.f32 %v3152, %v3197
        %v3206 = vadd.f32 %v3153, %v3198
        %v3207 = vadd.f32 %v3154, %v3199
        %v3208 = vadd.f32 %v3155, %v3200
        %v3209 = vadd.f32 %v3156, %v3201
        %v3210 = vadd.f32 %v3157, %v3202
        %v3211 = vld [vmem:[%s9 + $0xb] sm:$0x1]
        %3212 = vset.pattern.permute.xlu0 11
        %3213 = vperm.xlu0 %3212, %v2612
        %v3214 = vpop.permute.xlu0 %3213
        %3216 = vset.pattern.permute.xlu0 11
        %3217 = vperm.xlu0 %3216, %v2613
        %v3218 = vpop.permute.xlu0 %3217
        %3220 = vset.pattern.permute.xlu0 11
        %3221 = vperm.xlu0 %3220, %v2614
        %v3222 = vpop.permute.xlu0 %3221
        %3224 = vset.pattern.permute.xlu0 11
        %3225 = vperm.xlu0 %3224, %v2615
        %v3226 = vpop.permute.xlu0 %3225
        %3228 = vset.pattern.permute.xlu0 11
        %3229 = vperm.xlu0 %3228, %v2616
        %v3230 = vpop.permute.xlu0 %3229
        %3232 = vset.pattern.permute.xlu0 11
        %3233 = vperm.xlu0 %3232, %v2617
        %v3234 = vpop.permute.xlu0 %3233
        %3236 = vset.pattern.permute.xlu0 11
        %3237 = vperm.xlu0 %3236, %v2618
        %v3238 = vpop.permute.xlu0 %3237
        %3240 = vset.pattern.permute.xlu0 11
        %3241 = vperm.xlu0 %3240, %v2619
        %v3242 = vpop.permute.xlu0 %3241
        %v3244 = vlaneseq
        %v3245 = vshrl.u32 %v3244, 7
        %v3246 = vsub.s32 0, %v3245
        %v3247 = vrot.slane %v3211, %v3246
        %v3248 = vmul.f32 %v3214, %v3247
        %v3249 = vmul.f32 %v3218, %v3247
        %v3250 = vmul.f32 %v3222, %v3247
        %v3251 = vmul.f32 %v3226, %v3247
        %v3252 = vmul.f32 %v3230, %v3247
        %v3253 = vmul.f32 %v3234, %v3247
        %v3254 = vmul.f32 %v3238, %v3247
        %v3255 = vmul.f32 %v3242, %v3247
        %v3256 = vadd.f32 %v3203, %v3248
        %v3257 = vadd.f32 %v3204, %v3249
        %v3258 = vadd.f32 %v3205, %v3250
        %v3259 = vadd.f32 %v3206, %v3251
        %v3260 = vadd.f32 %v3207, %v3252
        %v3261 = vadd.f32 %v3208, %v3253
        %v3262 = vadd.f32 %v3209, %v3254
        %v3263 = vadd.f32 %v3210, %v3255
        %v3264 = vld [vmem:[%s9 + $0xc] sm:$0x1]
        %3265 = vset.pattern.permute.xlu0 12
        %3266 = vperm.xlu0 %3265, %v2612
        %v3267 = vpop.permute.xlu0 %3266
        %3269 = vset.pattern.permute.xlu0 12
        %3270 = vperm.xlu0 %3269, %v2613
        %v3271 = vpop.permute.xlu0 %3270
        %3273 = vset.pattern.permute.xlu0 12
        %3274 = vperm.xlu0 %3273, %v2614
        %v3275 = vpop.permute.xlu0 %3274
        %3277 = vset.pattern.permute.xlu0 12
        %3278 = vperm.xlu0 %3277, %v2615
        %v3279 = vpop.permute.xlu0 %3278
        %3281 = vset.pattern.permute.xlu0 12
        %3282 = vperm.xlu0 %3281, %v2616
        %v3283 = vpop.permute.xlu0 %3282
        %3285 = vset.pattern.permute.xlu0 12
        %3286 = vperm.xlu0 %3285, %v2617
        %v3287 = vpop.permute.xlu0 %3286
        %3289 = vset.pattern.permute.xlu0 12
        %3290 = vperm.xlu0 %3289, %v2618
        %v3291 = vpop.permute.xlu0 %3290
        %3293 = vset.pattern.permute.xlu0 12
        %3294 = vperm.xlu0 %3293, %v2619
        %v3295 = vpop.permute.xlu0 %3294
        %v3297 = vlaneseq
        %v3298 = vshrl.u32 %v3297, 7
        %v3299 = vsub.s32 0, %v3298
        %v3300 = vrot.slane %v3264, %v3299
        %v3301 = vmul.f32 %v3267, %v3300
        %v3302 = vmul.f32 %v3271, %v3300
        %v3303 = vmul.f32 %v3275, %v3300
        %v3304 = vmul.f32 %v3279, %v3300
        %v3305 = vmul.f32 %v3283, %v3300
        %v3306 = vmul.f32 %v3287, %v3300
        %v3307 = vmul.f32 %v3291, %v3300
        %v3308 = vmul.f32 %v3295, %v3300
        %v3309 = vadd.f32 %v3256, %v3301
        %v3310 = vadd.f32 %v3257, %v3302
        %v3311 = vadd.f32 %v3258, %v3303
        %v3312 = vadd.f32 %v3259, %v3304
        %v3313 = vadd.f32 %v3260, %v3305
        %v3314 = vadd.f32 %v3261, %v3306
        %v3315 = vadd.f32 %v3262, %v3307
        %v3316 = vadd.f32 %v3263, %v3308
        %v3317 = vld [vmem:[%s9 + $0xd] sm:$0x1]
        %3318 = vset.pattern.permute.xlu0 13
        %3319 = vperm.xlu0 %3318, %v2612
        %v3320 = vpop.permute.xlu0 %3319
        %3322 = vset.pattern.permute.xlu0 13
        %3323 = vperm.xlu0 %3322, %v2613
        %v3324 = vpop.permute.xlu0 %3323
        %3326 = vset.pattern.permute.xlu0 13
        %3327 = vperm.xlu0 %3326, %v2614
        %v3328 = vpop.permute.xlu0 %3327
        %3330 = vset.pattern.permute.xlu0 13
        %3331 = vperm.xlu0 %3330, %v2615
        %v3332 = vpop.permute.xlu0 %3331
        %3334 = vset.pattern.permute.xlu0 13
        %3335 = vperm.xlu0 %3334, %v2616
        %v3336 = vpop.permute.xlu0 %3335
        %3338 = vset.pattern.permute.xlu0 13
        %3339 = vperm.xlu0 %3338, %v2617
        %v3340 = vpop.permute.xlu0 %3339
        %3342 = vset.pattern.permute.xlu0 13
        %3343 = vperm.xlu0 %3342, %v2618
        %v3344 = vpop.permute.xlu0 %3343
        %3346 = vset.pattern.permute.xlu0 13
        %3347 = vperm.xlu0 %3346, %v2619
        %v3348 = vpop.permute.xlu0 %3347
        %v3350 = vlaneseq
        %v3351 = vshrl.u32 %v3350, 7
        %v3352 = vsub.s32 0, %v3351
        %v3353 = vrot.slane %v3317, %v3352
        %v3354 = vmul.f32 %v3320, %v3353
        %v3355 = vmul.f32 %v3324, %v3353
        %v3356 = vmul.f32 %v3328, %v3353
        %v3357 = vmul.f32 %v3332, %v3353
        %v3358 = vmul.f32 %v3336, %v3353
        %v3359 = vmul.f32 %v3340, %v3353
        %v3360 = vmul.f32 %v3344, %v3353
        %v3361 = vmul.f32 %v3348, %v3353
        %v3362 = vadd.f32 %v3309, %v3354
        %v3363 = vadd.f32 %v3310, %v3355
        %v3364 = vadd.f32 %v3311, %v3356
        %v3365 = vadd.f32 %v3312, %v3357
        %v3366 = vadd.f32 %v3313, %v3358
        %v3367 = vadd.f32 %v3314, %v3359
        %v3368 = vadd.f32 %v3315, %v3360
        %v3369 = vadd.f32 %v3316, %v3361
        %v3370 = vld [vmem:[%s9 + $0xe] sm:$0x1]
        %3371 = vset.pattern.permute.xlu0 14
        %3372 = vperm.xlu0 %3371, %v2612
        %v3373 = vpop.permute.xlu0 %3372
        %3375 = vset.pattern.permute.xlu0 14
        %3376 = vperm.xlu0 %3375, %v2613
        %v3377 = vpop.permute.xlu0 %3376
        %3379 = vset.pattern.permute.xlu0 14
        %3380 = vperm.xlu0 %3379, %v2614
        %v3381 = vpop.permute.xlu0 %3380
        %3383 = vset.pattern.permute.xlu0 14
        %3384 = vperm.xlu0 %3383, %v2615
        %v3385 = vpop.permute.xlu0 %3384
        %3387 = vset.pattern.permute.xlu0 14
        %3388 = vperm.xlu0 %3387, %v2616
        %v3389 = vpop.permute.xlu0 %3388
        %3391 = vset.pattern.permute.xlu0 14
        %3392 = vperm.xlu0 %3391, %v2617
        %v3393 = vpop.permute.xlu0 %3392
        %3395 = vset.pattern.permute.xlu0 14
        %3396 = vperm.xlu0 %3395, %v2618
        %v3397 = vpop.permute.xlu0 %3396
        %3399 = vset.pattern.permute.xlu0 14
        %3400 = vperm.xlu0 %3399, %v2619
        %v3401 = vpop.permute.xlu0 %3400
        %v3403 = vlaneseq
        %v3404 = vshrl.u32 %v3403, 7
        %v3405 = vsub.s32 0, %v3404
        %v3406 = vrot.slane %v3370, %v3405
        %v3407 = vmul.f32 %v3373, %v3406
        %v3408 = vmul.f32 %v3377, %v3406
        %v3409 = vmul.f32 %v3381, %v3406
        %v3410 = vmul.f32 %v3385, %v3406
        %v3411 = vmul.f32 %v3389, %v3406
        %v3412 = vmul.f32 %v3393, %v3406
        %v3413 = vmul.f32 %v3397, %v3406
        %v3414 = vmul.f32 %v3401, %v3406
        %v3415 = vadd.f32 %v3362, %v3407
        %v3416 = vadd.f32 %v3363, %v3408
        %v3417 = vadd.f32 %v3364, %v3409
        %v3418 = vadd.f32 %v3365, %v3410
        %v3419 = vadd.f32 %v3366, %v3411
        %v3420 = vadd.f32 %v3367, %v3412
        %v3421 = vadd.f32 %v3368, %v3413
        %v3422 = vadd.f32 %v3369, %v3414
        %v3423 = vld [vmem:[%s9 + $0xf] sm:$0x1]
        %3424 = vset.pattern.permute.xlu0 15
        %3425 = vperm.xlu0 %3424, %v2612
        %v3426 = vpop.permute.xlu0 %3425
        %3428 = vset.pattern.permute.xlu0 15
        %3429 = vperm.xlu0 %3428, %v2613
        %v3430 = vpop.permute.xlu0 %3429
        %3432 = vset.pattern.permute.xlu0 15
        %3433 = vperm.xlu0 %3432, %v2614
        %v3434 = vpop.permute.xlu0 %3433
        %3436 = vset.pattern.permute.xlu0 15
        %3437 = vperm.xlu0 %3436, %v2615
        %v3438 = vpop.permute.xlu0 %3437
        %3440 = vset.pattern.permute.xlu0 15
        %3441 = vperm.xlu0 %3440, %v2616
        %v3442 = vpop.permute.xlu0 %3441
        %3444 = vset.pattern.permute.xlu0 15
        %3445 = vperm.xlu0 %3444, %v2617
        %v3446 = vpop.permute.xlu0 %3445
        %3448 = vset.pattern.permute.xlu0 15
        %3449 = vperm.xlu0 %3448, %v2618
        %v3450 = vpop.permute.xlu0 %3449
        %3452 = vset.pattern.permute.xlu0 15
        %3453 = vperm.xlu0 %3452, %v2619
        %v3454 = vpop.permute.xlu0 %3453
        %v3456 = vlaneseq
        %v3457 = vshrl.u32 %v3456, 7
        %v3458 = vsub.s32 0, %v3457
        %v3459 = vrot.slane %v3423, %v3458
        %v3460 = vmul.f32 %v3426, %v3459
        %v3461 = vmul.f32 %v3430, %v3459
        %v3462 = vmul.f32 %v3434, %v3459
        %v3463 = vmul.f32 %v3438, %v3459
        %v3464 = vmul.f32 %v3442, %v3459
        %v3465 = vmul.f32 %v3446, %v3459
        %v3466 = vmul.f32 %v3450, %v3459
        %v3467 = vmul.f32 %v3454, %v3459
        %v3468 = vadd.f32 %v3415, %v3460
        %v3469 = vadd.f32 %v3416, %v3461
        %v3470 = vadd.f32 %v3417, %v3462
        %v3471 = vadd.f32 %v3418, %v3463
        %v3472 = vadd.f32 %v3419, %v3464
        %v3473 = vadd.f32 %v3420, %v3465
        %v3474 = vadd.f32 %v3421, %v3466
        %v3475 = vadd.f32 %v3422, %v3467
        %v3476 = vld [vmem:[%s9 + $0x10] sm:$0x1]
        %3477 = vset.pattern.permute.xlu0 16
        %3478 = vperm.xlu0 %3477, %v2612
        %v3479 = vpop.permute.xlu0 %3478
        %3481 = vset.pattern.permute.xlu0 16
        %3482 = vperm.xlu0 %3481, %v2613
        %v3483 = vpop.permute.xlu0 %3482
        %3485 = vset.pattern.permute.xlu0 16
        %3486 = vperm.xlu0 %3485, %v2614
        %v3487 = vpop.permute.xlu0 %3486
        %3489 = vset.pattern.permute.xlu0 16
        %3490 = vperm.xlu0 %3489, %v2615
        %v3491 = vpop.permute.xlu0 %3490
        %3493 = vset.pattern.permute.xlu0 16
        %3494 = vperm.xlu0 %3493, %v2616
        %v3495 = vpop.permute.xlu0 %3494
        %3497 = vset.pattern.permute.xlu0 16
        %3498 = vperm.xlu0 %3497, %v2617
        %v3499 = vpop.permute.xlu0 %3498
        %3501 = vset.pattern.permute.xlu0 16
        %3502 = vperm.xlu0 %3501, %v2618
        %v3503 = vpop.permute.xlu0 %3502
        %3505 = vset.pattern.permute.xlu0 16
        %3506 = vperm.xlu0 %3505, %v2619
        %v3507 = vpop.permute.xlu0 %3506
        %v3509 = vlaneseq
        %v3510 = vshrl.u32 %v3509, 7
        %v3511 = vsub.s32 0, %v3510
        %v3512 = vrot.slane %v3476, %v3511
        %v3513 = vmul.f32 %v3479, %v3512
        %v3514 = vmul.f32 %v3483, %v3512
        %v3515 = vmul.f32 %v3487, %v3512
        %v3516 = vmul.f32 %v3491, %v3512
        %v3517 = vmul.f32 %v3495, %v3512
        %v3518 = vmul.f32 %v3499, %v3512
        %v3519 = vmul.f32 %v3503, %v3512
        %v3520 = vmul.f32 %v3507, %v3512
        %v3521 = vadd.f32 %v3468, %v3513
        %v3522 = vadd.f32 %v3469, %v3514
        %v3523 = vadd.f32 %v3470, %v3515
        %v3524 = vadd.f32 %v3471, %v3516
        %v3525 = vadd.f32 %v3472, %v3517
        %v3526 = vadd.f32 %v3473, %v3518
        %v3527 = vadd.f32 %v3474, %v3519
        %v3528 = vadd.f32 %v3475, %v3520
        %v3529 = vld [vmem:[%s9 + $0x11] sm:$0x1]
        %3530 = vset.pattern.permute.xlu0 17
        %3531 = vperm.xlu0 %3530, %v2612
        %v3532 = vpop.permute.xlu0 %3531
        %3534 = vset.pattern.permute.xlu0 17
        %3535 = vperm.xlu0 %3534, %v2613
        %v3536 = vpop.permute.xlu0 %3535
        %3538 = vset.pattern.permute.xlu0 17
        %3539 = vperm.xlu0 %3538, %v2614
        %v3540 = vpop.permute.xlu0 %3539
        %3542 = vset.pattern.permute.xlu0 17
        %3543 = vperm.xlu0 %3542, %v2615
        %v3544 = vpop.permute.xlu0 %3543
        %3546 = vset.pattern.permute.xlu0 17
        %3547 = vperm.xlu0 %3546, %v2616
        %v3548 = vpop.permute.xlu0 %3547
        %3550 = vset.pattern.permute.xlu0 17
        %3551 = vperm.xlu0 %3550, %v2617
        %v3552 = vpop.permute.xlu0 %3551
        %3554 = vset.pattern.permute.xlu0 17
        %3555 = vperm.xlu0 %3554, %v2618
        %v3556 = vpop.permute.xlu0 %3555
        %3558 = vset.pattern.permute.xlu0 17
        %3559 = vperm.xlu0 %3558, %v2619
        %v3560 = vpop.permute.xlu0 %3559
        %v3562 = vlaneseq
        %v3563 = vshrl.u32 %v3562, 7
        %v3564 = vsub.s32 0, %v3563
        %v3565 = vrot.slane %v3529, %v3564
        %v3566 = vmul.f32 %v3532, %v3565
        %v3567 = vmul.f32 %v3536, %v3565
        %v3568 = vmul.f32 %v3540, %v3565
        %v3569 = vmul.f32 %v3544, %v3565
        %v3570 = vmul.f32 %v3548, %v3565
        %v3571 = vmul.f32 %v3552, %v3565
        %v3572 = vmul.f32 %v3556, %v3565
        %v3573 = vmul.f32 %v3560, %v3565
        %v3574 = vadd.f32 %v3521, %v3566
        %v3575 = vadd.f32 %v3522, %v3567
        %v3576 = vadd.f32 %v3523, %v3568
        %v3577 = vadd.f32 %v3524, %v3569
        %v3578 = vadd.f32 %v3525, %v3570
        %v3579 = vadd.f32 %v3526, %v3571
        %v3580 = vadd.f32 %v3527, %v3572
        %v3581 = vadd.f32 %v3528, %v3573
        %v3582 = vld [vmem:[%s9 + $0x12] sm:$0x1]
        %3583 = vset.pattern.permute.xlu0 18
        %3584 = vperm.xlu0 %3583, %v2612
        %v3585 = vpop.permute.xlu0 %3584
        %3587 = vset.pattern.permute.xlu0 18
        %3588 = vperm.xlu0 %3587, %v2613
        %v3589 = vpop.permute.xlu0 %3588
        %3591 = vset.pattern.permute.xlu0 18
        %3592 = vperm.xlu0 %3591, %v2614
        %v3593 = vpop.permute.xlu0 %3592
        %3595 = vset.pattern.permute.xlu0 18
        %3596 = vperm.xlu0 %3595, %v2615
        %v3597 = vpop.permute.xlu0 %3596
        %3599 = vset.pattern.permute.xlu0 18
        %3600 = vperm.xlu0 %3599, %v2616
        %v3601 = vpop.permute.xlu0 %3600
        %3603 = vset.pattern.permute.xlu0 18
        %3604 = vperm.xlu0 %3603, %v2617
        %v3605 = vpop.permute.xlu0 %3604
        %3607 = vset.pattern.permute.xlu0 18
        %3608 = vperm.xlu0 %3607, %v2618
        %v3609 = vpop.permute.xlu0 %3608
        %3611 = vset.pattern.permute.xlu0 18
        %3612 = vperm.xlu0 %3611, %v2619
        %v3613 = vpop.permute.xlu0 %3612
        %v3615 = vlaneseq
        %v3616 = vshrl.u32 %v3615, 7
        %v3617 = vsub.s32 0, %v3616
        %v3618 = vrot.slane %v3582, %v3617
        %v3619 = vmul.f32 %v3585, %v3618
        %v3620 = vmul.f32 %v3589, %v3618
        %v3621 = vmul.f32 %v3593, %v3618
        %v3622 = vmul.f32 %v3597, %v3618
        %v3623 = vmul.f32 %v3601, %v3618
        %v3624 = vmul.f32 %v3605, %v3618
        %v3625 = vmul.f32 %v3609, %v3618
        %v3626 = vmul.f32 %v3613, %v3618
        %v3627 = vadd.f32 %v3574, %v3619
        %v3628 = vadd.f32 %v3575, %v3620
        %v3629 = vadd.f32 %v3576, %v3621
        %v3630 = vadd.f32 %v3577, %v3622
        %v3631 = vadd.f32 %v3578, %v3623
        %v3632 = vadd.f32 %v3579, %v3624
        %v3633 = vadd.f32 %v3580, %v3625
        %v3634 = vadd.f32 %v3581, %v3626
        %v3635 = vld [vmem:[%s9 + $0x13] sm:$0x1]
        %3636 = vset.pattern.permute.xlu0 19
        %3637 = vperm.xlu0 %3636, %v2612
        %v3638 = vpop.permute.xlu0 %3637
        %3640 = vset.pattern.permute.xlu0 19
        %3641 = vperm.xlu0 %3640, %v2613
        %v3642 = vpop.permute.xlu0 %3641
        %3644 = vset.pattern.permute.xlu0 19
        %3645 = vperm.xlu0 %3644, %v2614
        %v3646 = vpop.permute.xlu0 %3645
        %3648 = vset.pattern.permute.xlu0 19
        %3649 = vperm.xlu0 %3648, %v2615
        %v3650 = vpop.permute.xlu0 %3649
        %3652 = vset.pattern.permute.xlu0 19
        %3653 = vperm.xlu0 %3652, %v2616
        %v3654 = vpop.permute.xlu0 %3653
        %3656 = vset.pattern.permute.xlu0 19
        %3657 = vperm.xlu0 %3656, %v2617
        %v3658 = vpop.permute.xlu0 %3657
        %3660 = vset.pattern.permute.xlu0 19
        %3661 = vperm.xlu0 %3660, %v2618
        %v3662 = vpop.permute.xlu0 %3661
        %3664 = vset.pattern.permute.xlu0 19
        %3665 = vperm.xlu0 %3664, %v2619
        %v3666 = vpop.permute.xlu0 %3665
        %v3668 = vlaneseq
        %v3669 = vshrl.u32 %v3668, 7
        %v3670 = vsub.s32 0, %v3669
        %v3671 = vrot.slane %v3635, %v3670
        %v3672 = vmul.f32 %v3638, %v3671
        %v3673 = vmul.f32 %v3642, %v3671
        %v3674 = vmul.f32 %v3646, %v3671
        %v3675 = vmul.f32 %v3650, %v3671
        %v3676 = vmul.f32 %v3654, %v3671
        %v3677 = vmul.f32 %v3658, %v3671
        %v3678 = vmul.f32 %v3662, %v3671
        %v3679 = vmul.f32 %v3666, %v3671
        %v3680 = vadd.f32 %v3627, %v3672
        %v3681 = vadd.f32 %v3628, %v3673
        %v3682 = vadd.f32 %v3629, %v3674
        %v3683 = vadd.f32 %v3630, %v3675
        %v3684 = vadd.f32 %v3631, %v3676
        %v3685 = vadd.f32 %v3632, %v3677
        %v3686 = vadd.f32 %v3633, %v3678
        %v3687 = vadd.f32 %v3634, %v3679
        %v3688 = vld [vmem:[%s9 + $0x14] sm:$0x1]
        %3689 = vset.pattern.permute.xlu0 20
        %3690 = vperm.xlu0 %3689, %v2612
        %v3691 = vpop.permute.xlu0 %3690
        %3693 = vset.pattern.permute.xlu0 20
        %3694 = vperm.xlu0 %3693, %v2613
        %v3695 = vpop.permute.xlu0 %3694
        %3697 = vset.pattern.permute.xlu0 20
        %3698 = vperm.xlu0 %3697, %v2614
        %v3699 = vpop.permute.xlu0 %3698
        %3701 = vset.pattern.permute.xlu0 20
        %3702 = vperm.xlu0 %3701, %v2615
        %v3703 = vpop.permute.xlu0 %3702
        %3705 = vset.pattern.permute.xlu0 20
        %3706 = vperm.xlu0 %3705, %v2616
        %v3707 = vpop.permute.xlu0 %3706
        %3709 = vset.pattern.permute.xlu0 20
        %3710 = vperm.xlu0 %3709, %v2617
        %v3711 = vpop.permute.xlu0 %3710
        %3713 = vset.pattern.permute.xlu0 20
        %3714 = vperm.xlu0 %3713, %v2618
        %v3715 = vpop.permute.xlu0 %3714
        %3717 = vset.pattern.permute.xlu0 20
        %3718 = vperm.xlu0 %3717, %v2619
        %v3719 = vpop.permute.xlu0 %3718
        %v3721 = vlaneseq
        %v3722 = vshrl.u32 %v3721, 7
        %v3723 = vsub.s32 0, %v3722
        %v3724 = vrot.slane %v3688, %v3723
        %v3725 = vmul.f32 %v3691, %v3724
        %v3726 = vmul.f32 %v3695, %v3724
        %v3727 = vmul.f32 %v3699, %v3724
        %v3728 = vmul.f32 %v3703, %v3724
        %v3729 = vmul.f32 %v3707, %v3724
        %v3730 = vmul.f32 %v3711, %v3724
        %v3731 = vmul.f32 %v3715, %v3724
        %v3732 = vmul.f32 %v3719, %v3724
        %v3733 = vadd.f32 %v3680, %v3725
        %v3734 = vadd.f32 %v3681, %v3726
        %v3735 = vadd.f32 %v3682, %v3727
        %v3736 = vadd.f32 %v3683, %v3728
        %v3737 = vadd.f32 %v3684, %v3729
        %v3738 = vadd.f32 %v3685, %v3730
        %v3739 = vadd.f32 %v3686, %v3731
        %v3740 = vadd.f32 %v3687, %v3732
        %v3741 = vld [vmem:[%s9 + $0x15] sm:$0x1]
        %3742 = vset.pattern.permute.xlu0 21
        %3743 = vperm.xlu0 %3742, %v2612
        %v3744 = vpop.permute.xlu0 %3743
        %3746 = vset.pattern.permute.xlu0 21
        %3747 = vperm.xlu0 %3746, %v2613
        %v3748 = vpop.permute.xlu0 %3747
        %3750 = vset.pattern.permute.xlu0 21
        %3751 = vperm.xlu0 %3750, %v2614
        %v3752 = vpop.permute.xlu0 %3751
        %3754 = vset.pattern.permute.xlu0 21
        %3755 = vperm.xlu0 %3754, %v2615
        %v3756 = vpop.permute.xlu0 %3755
        %3758 = vset.pattern.permute.xlu0 21
        %3759 = vperm.xlu0 %3758, %v2616
        %v3760 = vpop.permute.xlu0 %3759
        %3762 = vset.pattern.permute.xlu0 21
        %3763 = vperm.xlu0 %3762, %v2617
        %v3764 = vpop.permute.xlu0 %3763
        %3766 = vset.pattern.permute.xlu0 21
        %3767 = vperm.xlu0 %3766, %v2618
        %v3768 = vpop.permute.xlu0 %3767
        %3770 = vset.pattern.permute.xlu0 21
        %3771 = vperm.xlu0 %3770, %v2619
        %v3772 = vpop.permute.xlu0 %3771
        %v3774 = vlaneseq
        %v3775 = vshrl.u32 %v3774, 7
        %v3776 = vsub.s32 0, %v3775
        %v3777 = vrot.slane %v3741, %v3776
        %v3778 = vmul.f32 %v3744, %v3777
        %v3779 = vmul.f32 %v3748, %v3777
        %v3780 = vmul.f32 %v3752, %v3777
        %v3781 = vmul.f32 %v3756, %v3777
        %v3782 = vmul.f32 %v3760, %v3777
        %v3783 = vmul.f32 %v3764, %v3777
        %v3784 = vmul.f32 %v3768, %v3777
        %v3785 = vmul.f32 %v3772, %v3777
        %v3786 = vadd.f32 %v3733, %v3778
        %v3787 = vadd.f32 %v3734, %v3779
        %v3788 = vadd.f32 %v3735, %v3780
        %v3789 = vadd.f32 %v3736, %v3781
        %v3790 = vadd.f32 %v3737, %v3782
        %v3791 = vadd.f32 %v3738, %v3783
        %v3792 = vadd.f32 %v3739, %v3784
        %v3793 = vadd.f32 %v3740, %v3785
        %v3794 = vld [vmem:[%s9 + $0x16] sm:$0x1]
        %3795 = vset.pattern.permute.xlu0 22
        %3796 = vperm.xlu0 %3795, %v2612
        %v3797 = vpop.permute.xlu0 %3796
        %3799 = vset.pattern.permute.xlu0 22
        %3800 = vperm.xlu0 %3799, %v2613
        %v3801 = vpop.permute.xlu0 %3800
        %3803 = vset.pattern.permute.xlu0 22
        %3804 = vperm.xlu0 %3803, %v2614
        %v3805 = vpop.permute.xlu0 %3804
        %3807 = vset.pattern.permute.xlu0 22
        %3808 = vperm.xlu0 %3807, %v2615
        %v3809 = vpop.permute.xlu0 %3808
        %3811 = vset.pattern.permute.xlu0 22
        %3812 = vperm.xlu0 %3811, %v2616
        %v3813 = vpop.permute.xlu0 %3812
        %3815 = vset.pattern.permute.xlu0 22
        %3816 = vperm.xlu0 %3815, %v2617
        %v3817 = vpop.permute.xlu0 %3816
        %3819 = vset.pattern.permute.xlu0 22
        %3820 = vperm.xlu0 %3819, %v2618
        %v3821 = vpop.permute.xlu0 %3820
        %3823 = vset.pattern.permute.xlu0 22
        %3824 = vperm.xlu0 %3823, %v2619
        %v3825 = vpop.permute.xlu0 %3824
        %v3827 = vlaneseq
        %v3828 = vshrl.u32 %v3827, 7
        %v3829 = vsub.s32 0, %v3828
        %v3830 = vrot.slane %v3794, %v3829
        %v3831 = vmul.f32 %v3797, %v3830
        %v3832 = vmul.f32 %v3801, %v3830
        %v3833 = vmul.f32 %v3805, %v3830
        %v3834 = vmul.f32 %v3809, %v3830
        %v3835 = vmul.f32 %v3813, %v3830
        %v3836 = vmul.f32 %v3817, %v3830
        %v3837 = vmul.f32 %v3821, %v3830
        %v3838 = vmul.f32 %v3825, %v3830
        %v3839 = vadd.f32 %v3786, %v3831
        %v3840 = vadd.f32 %v3787, %v3832
        %v3841 = vadd.f32 %v3788, %v3833
        %v3842 = vadd.f32 %v3789, %v3834
        %v3843 = vadd.f32 %v3790, %v3835
        %v3844 = vadd.f32 %v3791, %v3836
        %v3845 = vadd.f32 %v3792, %v3837
        %v3846 = vadd.f32 %v3793, %v3838
        %v3847 = vld [vmem:[%s9 + $0x17] sm:$0x1]
        %3848 = vset.pattern.permute.xlu0 23
        %3849 = vperm.xlu0 %3848, %v2612
        %v3850 = vpop.permute.xlu0 %3849
        %3852 = vset.pattern.permute.xlu0 23
        %3853 = vperm.xlu0 %3852, %v2613
        %v3854 = vpop.permute.xlu0 %3853
        %3856 = vset.pattern.permute.xlu0 23
        %3857 = vperm.xlu0 %3856, %v2614
        %v3858 = vpop.permute.xlu0 %3857
        %3860 = vset.pattern.permute.xlu0 23
        %3861 = vperm.xlu0 %3860, %v2615
        %v3862 = vpop.permute.xlu0 %3861
        %3864 = vset.pattern.permute.xlu0 23
        %3865 = vperm.xlu0 %3864, %v2616
        %v3866 = vpop.permute.xlu0 %3865
        %3868 = vset.pattern.permute.xlu0 23
        %3869 = vperm.xlu0 %3868, %v2617
        %v3870 = vpop.permute.xlu0 %3869
        %3872 = vset.pattern.permute.xlu0 23
        %3873 = vperm.xlu0 %3872, %v2618
        %v3874 = vpop.permute.xlu0 %3873
        %3876 = vset.pattern.permute.xlu0 23
        %3877 = vperm.xlu0 %3876, %v2619
        %v3878 = vpop.permute.xlu0 %3877
        %v3880 = vlaneseq
        %v3881 = vshrl.u32 %v3880, 7
        %v3882 = vsub.s32 0, %v3881
        %v3883 = vrot.slane %v3847, %v3882
        %v3884 = vmul.f32 %v3850, %v3883
        %v3885 = vmul.f32 %v3854, %v3883
        %v3886 = vmul.f32 %v3858, %v3883
        %v3887 = vmul.f32 %v3862, %v3883
        %v3888 = vmul.f32 %v3866, %v3883
        %v3889 = vmul.f32 %v3870, %v3883
        %v3890 = vmul.f32 %v3874, %v3883
        %v3891 = vmul.f32 %v3878, %v3883
        %v3892 = vadd.f32 %v3839, %v3884
        %v3893 = vadd.f32 %v3840, %v3885
        %v3894 = vadd.f32 %v3841, %v3886
        %v3895 = vadd.f32 %v3842, %v3887
        %v3896 = vadd.f32 %v3843, %v3888
        %v3897 = vadd.f32 %v3844, %v3889
        %v3898 = vadd.f32 %v3845, %v3890
        %v3899 = vadd.f32 %v3846, %v3891
        %v3900 = vld [vmem:[%s10] sm:$0x1]
        %v3902 = vlaneseq
        %v3903 = vshrl.u32 %v3902, 7
        %v3904 = vsub.s32 0, %v3903
        %v3905 = vrot.slane %v3900, %v3904
        %v3907 = vmul.f32 %v3892, %v3905
        %v3908 = vmul.f32 %v3893, %v3905
        %v3909 = vmul.f32 %v3894, %v3905
        %v3910 = vmul.f32 %v3895, %v3905
        %v3911 = vmul.f32 %v3896, %v3905
        %v3912 = vmul.f32 %v3897, %v3905
        %v3913 = vmul.f32 %v3898, %v3905
        %v3914 = vmul.f32 %v3899, %v3905
        %v3915 = vld [vmem:[%s11] sm:$0x1]
        %v3917 = vlaneseq
        %v3918 = vshrl.u32 %v3917, 7
        %v3919 = vsub.s32 0, %v3918
        %v3920 = vrot.slane %v3915, %v3919
        %v3922 = vadd.f32 %v3907, %v3920
        %v3923 = vadd.f32 %v3908, %v3920
        %v3924 = vadd.f32 %v3909, %v3920
        %v3925 = vadd.f32 %v3910, %v3920
        %v3926 = vadd.f32 %v3911, %v3920
        %v3927 = vadd.f32 %v3912, %v3920
        %v3928 = vadd.f32 %v3913, %v3920
        %v3929 = vadd.f32 %v3914, %v3920
        %s3930 = smul.u32 %s1774, 64
        %s3931 = scalar_lea.vmem %s535, %s3930
        %v3932 = vld [vmem:[%s3931] sm:$0xff]
        %v3933 = vld [vmem:[%s3931 + $0x8] sm:$0xff]
        %v3934 = vld [vmem:[%s3931 + $0x10] sm:$0xff]
        %v3935 = vld [vmem:[%s3931 + $0x18] sm:$0xff]
        %v3936 = vld [vmem:[%s3931 + $0x20] sm:$0xff]
        %v3937 = vld [vmem:[%s3931 + $0x28] sm:$0xff]
        %v3938 = vld [vmem:[%s3931 + $0x30] sm:$0xff]
        %v3939 = vld [vmem:[%s3931 + $0x38] sm:$0xff]
        %v3940 = vadd.f32 %v3922, %v3932
        %v3941 = vadd.f32 %v3923, %v3933
        %v3942 = vadd.f32 %v3924, %v3934
        %v3943 = vadd.f32 %v3925, %v3935
        %v3944 = vadd.f32 %v3926, %v3936
        %v3945 = vadd.f32 %v3927, %v3937
        %v3946 = vadd.f32 %v3928, %v3938
        %v3947 = vadd.f32 %v3929, %v3939
        %s3948 = scalar_lea.vmem %s580, %s3930
        %vm3949 = vcmask 31744
        %3950 = vst.msk [vmem:[%s3948] sm:$0xff] %vm3949, %v3940
        %3951 = vst.msk [vmem:[%s3948 + $0x8] sm:$0xff] %vm3949, %v3941
        %3952 = vst.msk [vmem:[%s3948 + $0x10] sm:$0xff] %vm3949, %v3942
        %3953 = vst.msk [vmem:[%s3948 + $0x18] sm:$0xff] %vm3949, %v3943
        %3954 = vst.msk [vmem:[%s3948 + $0x20] sm:$0xff] %vm3949, %v3944
        %3955 = vst.msk [vmem:[%s3948 + $0x28] sm:$0xff] %vm3949, %v3945
        %3956 = vst.msk [vmem:[%s3948 + $0x30] sm:$0xff] %vm3949, %v3946
        %3957 = vst.msk [vmem:[%s3948 + $0x38] sm:$0xff] %vm3949, %v3947
      $region81: #{irf3d_block_forward.1} parent=67 // loop_footer
        %s1778 = sadd.s32 1, %s1774
      $region82: #{irf3d_block_forward.1} parent=67 // loop_footer_branch
        %1773 = sbr.rel target = $region78
      $region83: #{irf3d_block_forward.1} parent=67 // loop_exit
        _
      %s3958 = smul.u32 2, %s28
      %p3959 = scmp.lt.s32.totalorder %s27, 1
      %s3960 = scalar_select %p3959, %s27, 1
      %p3961 = scmp.lt.s32.totalorder %s3958, 5
      %s3962 = scalar_select %p3961, %s3958, 5
      %s3963 = smul.addr %s3962, 8
      %s3964 = smul.addr %s3960, 48
      %s3965 = sadd.s32 %s3963, %s3964
      %s3966 = smul.addr %s3965, 8
      %s3967 = scalar_lea.vmem %s12, %s3966
      // Predicated region
      $region84: #{irf3d_block_forward.1} parent=67 // pred_check
        %p3968 = pneg %p344
      $region85: #{irf3d_block_forward.1} parent=67 // pred_check_branch
        %3970 = sbr.rel (%p3968) target = $region87
      $region86: #{irf3d_block_forward.1} parent=67 // pred_region
        %s3971 = smul.u32 2, %s28
      $region87: #{irf3d_block_forward.1} parent=67 // pred_fallthru
        _
    $region68: #{irf3d_block_forward.1} parent=5 // pred_fallthru
      _
    %p3972 = scmp.le.s32.totalorder 2, %s18
    // Predicated region
    $region88: #{irf3d_block_forward.1} parent=5 // pred_check
      %p3973 = pneg %p3972
    $region89: #{irf3d_block_forward.1} parent=5 // pred_check_branch
      %3975 = sbr.rel (%p3973) target = $region91
    $region90: #{irf3d_block_forward.1} parent=5 // pred_region
      %s3976 = ssub.s32 %s18, 2
      // Predicated region
      $region92: #{irf3d_block_forward.1} parent=90 // pred_check
        %p3977 = pneg %p350
      $region93: #{irf3d_block_forward.1} parent=90 // pred_check_branch
        %3979 = sbr.rel (%p3977) target = $region95
      $region94: #{irf3d_block_forward.1} parent=90 // pred_region
        %s3980 = smul.u32 2, %s30
        %p3981 = scmp.lt.s32.totalorder %s29, 1
        %s3982 = scalar_select %p3981, %s29, 1
        %p3983 = scmp.lt.s32.totalorder %s3980, 5
        %s3984 = scalar_select %p3983, %s3980, 5
        %s3985 = smul.addr %s3984, 8
        %s3986 = smul.addr %s3982, 48
        %s3987 = sadd.s32 %s3985, %s3986
        %s3988 = smul.addr %s3987, 8
        %s3989 = scalar_lea.vmem %s12, %s3988
      $region95: #{irf3d_block_forward.1} parent=90 // pred_fallthru
        _
    $region91: #{irf3d_block_forward.1} parent=5 // pred_fallthru
      _
  $region6: #{irf3d_block_forward.1} parent=0 // loop_footer
    %s22 = sadd.s32 1, %s18
  $region7: #{irf3d_block_forward.1} parent=0 // loop_footer_branch
    %17 = sbr.rel target = $region3
  $region8: #{irf3d_block_forward.1} parent=0 // loop_exit
    _

</llo_original>
